<compile_context>
chip_gen: v7x
topology: tpu7x:2x2x1
jax: 0.10.0
libtpu: 0.0.40
codegen_flags: <defaults>
</compile_context>

<pallas_src>
import jax
import jax.numpy as jnp
from jax.experimental import pallas as pl
from jax.experimental.pallas import tpu as pltpu

IMAGE_SIZE = 120 * 100          # 12000, fixed by the module's first Linear
H1, H2, H3, OUT = 400, 100, 25, 2

N_PAD = 8                        # batch padded to sublane multiple
K_PAD = 12288                    # 12000 padded to a multiple of 128 (96 * 128)
TK = 3072                        # K-tile for the first (large) matmul -> 4 grid steps

V_TH = 1.0                       # ParametricLIFNode default v_threshold
DECAY = 0.5                      # sigmoid(w), w = -log(init_tau - 1) = 0 for init_tau = 2.0


def _spike(h):
    # PLIF with v0 = 0, v_reset = 0, decay_input=True:
    #   v = v0 + (h - v0) * sigmoid(w) = DECAY * h ;  spike = heaviside(v - v_th)
    return (DECAY * h >= V_TH).astype(jnp.float32)


def snn_kernel(x_ref, w1_ref, w2_ref, w3_ref, w4_ref, out_ref, h1_acc):
    k = pl.program_id(0)

    @pl.when(k == 0)
    def _init():
        h1_acc[...] = jnp.zeros_like(h1_acc)

    # accumulate first Linear over K tiles (hot path: 12288 x 400 bf16 matmul, f32 acc)
    h1_acc[...] += jnp.dot(x_ref[...], w1_ref[...],
                           preferred_element_type=jnp.float32)

    @pl.when(k == pl.num_programs(0) - 1)
    def _finalize():
        s1 = _spike(h1_acc[...])                                      # (N, 400) f32
        h2 = jnp.dot(s1, w2_ref[...], preferred_element_type=jnp.float32)
        s2 = _spike(h2)                                               # (N, 100)
        h3 = jnp.dot(s2, w3_ref[...], preferred_element_type=jnp.float32)
        s3 = _spike(h3)                                               # (N, 25)
        h4 = jnp.dot(s3, w4_ref[...], preferred_element_type=jnp.float32)
        out_ref[...] = _spike(h4)                                     # (N, 2)


def prepare_w1(w1t):
    """Pad W1^T [12000,400] -> [12288,400] and cast to bf16. Call ONCE at model init."""
    return (jnp.zeros((K_PAD, H1), jnp.bfloat16)
            .at[:IMAGE_SIZE, :].set(w1t.astype(jnp.bfloat16)))


@jax.jit
def snn_forward(x, w1p, w2t, w3t, w4t):
    """x: [N, 120, 100] f32; w1p: pre-padded bf16 [K_PAD, H1] -> spikes [N, 2] f32."""
    n = x.shape[0]
    x_flat = x.reshape(n, -1).astype(jnp.bfloat16)                    # Flatten (dim 1)
    # pad batch to 8 sublanes and K to a multiple of 128 (zeros are inert in matmul)
    x_p = jnp.zeros((N_PAD, K_PAD), jnp.bfloat16).at[:n, :IMAGE_SIZE].set(x_flat)

    flops = 2 * N_PAD * (K_PAD * H1 + H1 * H2 + H2 * H3 + H3 * OUT)
    bytes_accessed = (x_p.size * 2 + w1p.size * 2
                      + (w2t.size + w3t.size + w4t.size) * 4
                      + N_PAD * OUT * 4)

    grid = (K_PAD // TK,)
    out = pl.pallas_call(
        snn_kernel,
        out_shape=jax.ShapeDtypeStruct((N_PAD, OUT), jnp.float32),
        grid_spec=pltpu.PrefetchScalarGridSpec(
            num_scalar_prefetch=0,
            grid=grid,
            in_specs=[
                pl.BlockSpec((N_PAD, TK), lambda k: (0, k)),     # x tile (bf16)
                pl.BlockSpec((TK, H1),   lambda k: (k, 0)),      # W1^T tile (bf16)
                pl.BlockSpec((H1, H2),   lambda k: (0, 0)),      # W2^T (resident, f32)
                pl.BlockSpec((H2, H3),   lambda k: (0, 0)),      # W3^T (resident, f32)
                pl.BlockSpec((H3, OUT),  lambda k: (0, 0)),      # W4^T (resident, f32)
            ],
            out_specs=pl.BlockSpec((N_PAD, OUT), lambda k: (0, 0)),
            scratch_shapes=[pltpu.VMEM((N_PAD, H1), jnp.float32)],
        ),
        compiler_params=pltpu.CompilerParams(
            dimension_semantics=("arbitrary",),                  # K is a reduction axis
        ),
        cost_estimate=pl.CostEstimate(
            flops=flops, transcendentals=0, bytes_accessed=bytes_accessed),
    )(x_p, w1p, w2t, w3t, w4t)
    return out[:n]


def _linear_init(key, fan_in, fan_out):
    # nn.Linear default: U(-1/sqrt(fan_in), 1/sqrt(fan_in)); stored transposed [in, out]
    bound = 1.0 / jnp.sqrt(jnp.float32(fan_in))
    return jax.random.uniform(key, (fan_in, fan_out), jnp.float32, -bound, bound)


def _reference(x, w1t, w2t, w3t, w4t):
    # Reference mirrors the kernel's compute path: bf16 inputs to the big matmul,
    # f32 accumulation, f32 threshold compare; tail layers in f32.
    h = x.reshape(x.shape[0], -1).astype(jnp.bfloat16)
    h1 = jnp.dot(h, w1t.astype(jnp.bfloat16), preferred_element_type=jnp.float32)
    s = _spike(h1)
    s = _spike(jnp.dot(s, w2t, preferred_element_type=jnp.float32))
    s = _spike(jnp.dot(s, w3t, preferred_element_type=jnp.float32))
    s = _spike(jnp.dot(s, w4t, preferred_element_type=jnp.float32))
    return s


if __name__ == "__main__":
    key = jax.random.PRNGKey(0)
    kx, k1, k2, k3, k4 = jax.random.split(key, 5)

    batch = 2
    # input consistent with the module: flattens to 120*100 = 12000 features
    x = jax.random.uniform(kx, (batch, 120, 100), jnp.float32)

    w1t = _linear_init(k1, IMAGE_SIZE, H1)
    w2t = _linear_init(k2, H1, H2)
    w3t = _linear_init(k3, H2, H3)
    w4t = _linear_init(k4, H3, OUT)

    # hoist the W1 pad/cast out of the per-call path (done once at "model init")
    w1p = jax.block_until_ready(prepare_w1(w1t))

    out = snn_forward(x, w1p, w2t, w3t, w4t)
    out = jax.block_until_ready(out)

    ref = _reference(x, w1t, w2t, w3t, w4t)
    assert out.shape == (batch, OUT), out.shape
    # binary spikes: count mismatches (tolerance-aware compare; identical compute path
    # with f32 accumulation/compare makes flips only possible exactly at the threshold)
    n_mismatch = int(jnp.sum(jnp.abs(out - ref) > 0.5))
    assert n_mismatch == 0, f"{n_mismatch} spike mismatches: {out} vs {ref}"

    print("KERNEL_OK")
</pallas_src>

<mosaic_0001>
module attributes {stable_mosaic.version = 11 : i64} {
  func.func @snn_kernel(%arg0: i32, %arg1: memref<8x3072xbf16, #tpu.memory_space<vmem>>, %arg2: memref<3072x400xbf16, #tpu.memory_space<vmem>>, %arg3: memref<400x100xf32, #tpu.memory_space<vmem>>, %arg4: memref<100x25xf32, #tpu.memory_space<vmem>>, %arg5: memref<25x2xf32, #tpu.memory_space<vmem>>, %arg6: memref<8x2xf32, #tpu.memory_space<vmem>>, %arg7: memref<8x400xf32, #tpu.memory_space<vmem>>) attributes {dimension_semantics = [#tpu.dimension_semantics<arbitrary>], iteration_bounds = array<i64: 4>, scalar_prefetch = 0 : i64, scratch_operands = 1 : i64, tpu.core_type = #tpu.core_type<tc>, window_params = [{transform_indices = @transform_0, window_bounds = array<i64: 8, 3072>}, {transform_indices = @transform_1, window_bounds = array<i64: 3072, 400>}, {pipeline_mode = #tpu.pipeline_mode<synchronous>, transform_indices = @transform_2, window_bounds = array<i64: 400, 100>}, {pipeline_mode = #tpu.pipeline_mode<synchronous>, transform_indices = @transform_3, window_bounds = array<i64: 100, 25>}, {pipeline_mode = #tpu.pipeline_mode<synchronous>, transform_indices = @transform_4, window_bounds = array<i64: 25, 2>}, {pipeline_mode = #tpu.pipeline_mode<synchronous>, transform_indices = @transform_5, window_bounds = array<i64: 8, 2>}]} {
    %c0_i32 = arith.constant 0 : i32
    %0 = arith.cmpi eq, %arg0, %c0_i32 : i32
    %1 = arith.extui %0 : i1 to i32
    %c0_i32_0 = arith.constant 0 : i32
    %2 = arith.cmpi ne, %1, %c0_i32_0 : i32
    scf.if %2 {
      %cst_9 = arith.constant 0.000000e+00 : f32
      %12 = vector.broadcast %cst_9 : f32 to vector<8x400xf32>
      %c0_10 = arith.constant 0 : index
      %c0_11 = arith.constant 0 : index
      %13 = vector.load %arg7[%c0_10, %c0_11] : memref<8x400xf32, #tpu.memory_space<vmem>>, vector<8x400xf32>
      tpu.vector_store %arg7[%c0_10, %c0_11], %12 {strides = array<i32>} : memref<8x400xf32, #tpu.memory_space<vmem>>, vector<8x400xf32>,
    } else {
    }
    %c0 = arith.constant 0 : index
    %c0_1 = arith.constant 0 : index
    %3 = vector.load %arg7[%c0, %c0_1] : memref<8x400xf32, #tpu.memory_space<vmem>>, vector<8x400xf32>
    %c0_2 = arith.constant 0 : index
    %c0_3 = arith.constant 0 : index
    %4 = vector.load %arg1[%c0_2, %c0_3] : memref<8x3072xbf16, #tpu.memory_space<vmem>>, vector<8x3072xbf16>
    %c0_4 = arith.constant 0 : index
    %c0_5 = arith.constant 0 : index
    %5 = vector.load %arg2[%c0_4, %c0_5] : memref<3072x400xbf16, #tpu.memory_space<vmem>>, vector<3072x400xbf16>
    %cst = arith.constant dense<0.000000e+00> : vector<8x400xf32>
    %6 = tpu.matmul %4, %5, %cst {dimension_numbers = #tpu.dot_dimension_numbers<[1], [0], [0], [1], [0, 0, 1, 1], [], []>} : vector<8x3072xbf16>, vector<3072x400xbf16>, vector<8x400xf32> -> vector<8x400xf32>
    %7 = arith.addf %3, %6 : vector<8x400xf32>
    %c0_6 = arith.constant 0 : index
    %c0_7 = arith.constant 0 : index
    %8 = vector.load %arg7[%c0_6, %c0_7] : memref<8x400xf32, #tpu.memory_space<vmem>>, vector<8x400xf32>
    tpu.vector_store %arg7[%c0_6, %c0_7], %7 {strides = array<i32>} : memref<8x400xf32, #tpu.memory_space<vmem>>, vector<8x400xf32>,
    %c3_i32 = arith.constant 3 : i32
    %9 = arith.cmpi eq, %arg0, %c3_i32 : i32
    %10 = arith.extui %9 : i1 to i32
    %c0_i32_8 = arith.constant 0 : i32
    %11 = arith.cmpi ne, %10, %c0_i32_8 : i32
    scf.if %11 {
      %c0_9 = arith.constant 0 : index
      %c0_10 = arith.constant 0 : index
      %12 = vector.load %arg7[%c0_9, %c0_10] : memref<8x400xf32, #tpu.memory_space<vmem>>, vector<8x400xf32>
      %cst_11 = arith.constant 5.000000e-01 : f32
      %13 = vector.broadcast %cst_11 : f32 to vector<8x400xf32>
      %14 = arith.mulf %13, %12 : vector<8x400xf32>
      %cst_12 = arith.constant 1.000000e+00 : f32
      %15 = vector.broadcast %cst_12 : f32 to vector<8x400xf32>
      %16 = arith.cmpf oge, %14, %15 : vector<8x400xf32>
      %17 = arith.extui %16 : vector<8x400xi1> to vector<8x400xi32>
      %18 = arith.sitofp %17 : vector<8x400xi32> to vector<8x400xf32>
      %c0_13 = arith.constant 0 : index
      %c0_14 = arith.constant 0 : index
      %19 = vector.load %arg3[%c0_13, %c0_14] : memref<400x100xf32, #tpu.memory_space<vmem>>, vector<400x100xf32>
      %cst_15 = arith.constant dense<0.000000e+00> : vector<8x100xf32>
      %20 = tpu.matmul %18, %19, %cst_15 {dimension_numbers = #tpu.dot_dimension_numbers<[1], [0], [0], [1], [0, 0, 1, 1], [], []>} : vector<8x400xf32>, vector<400x100xf32>, vector<8x100xf32> -> vector<8x100xf32>
      %cst_16 = arith.constant 5.000000e-01 : f32
      %21 = vector.broadcast %cst_16 : f32 to vector<8x100xf32>
      %22 = arith.mulf %21, %20 : vector<8x100xf32>
      %cst_17 = arith.constant 1.000000e+00 : f32
      %23 = vector.broadcast %cst_17 : f32 to vector<8x100xf32>
      %24 = arith.cmpf oge, %22, %23 : vector<8x100xf32>
      %25 = arith.extui %24 : vector<8x100xi1> to vector<8x100xi32>
      %26 = arith.sitofp %25 : vector<8x100xi32> to vector<8x100xf32>
      %c0_18 = arith.constant 0 : index
      %c0_19 = arith.constant 0 : index
      %27 = vector.load %arg4[%c0_18, %c0_19] : memref<100x25xf32, #tpu.memory_space<vmem>>, vector<100x25xf32>
      %cst_20 = arith.constant dense<0.000000e+00> : vector<8x25xf32>
      %28 = tpu.matmul %26, %27, %cst_20 {dimension_numbers = #tpu.dot_dimension_numbers<[1], [0], [0], [1], [0, 0, 1, 1], [], []>} : vector<8x100xf32>, vector<100x25xf32>, vector<8x25xf32> -> vector<8x25xf32>
      %cst_21 = arith.constant 5.000000e-01 : f32
      %29 = vector.broadcast %cst_21 : f32 to vector<8x25xf32>
      %30 = arith.mulf %29, %28 : vector<8x25xf32>
      %cst_22 = arith.constant 1.000000e+00 : f32
      %31 = vector.broadcast %cst_22 : f32 to vector<8x25xf32>
      %32 = arith.cmpf oge, %30, %31 : vector<8x25xf32>
      %33 = arith.extui %32 : vector<8x25xi1> to vector<8x25xi32>
      %34 = arith.sitofp %33 : vector<8x25xi32> to vector<8x25xf32>
      %c0_23 = arith.constant 0 : index
      %c0_24 = arith.constant 0 : index
      %35 = vector.load %arg5[%c0_23, %c0_24] : memref<25x2xf32, #tpu.memory_space<vmem>>, vector<25x2xf32>
      %cst_25 = arith.constant dense<0.000000e+00> : vector<8x2xf32>
      %36 = tpu.matmul %34, %35, %cst_25 {dimension_numbers = #tpu.dot_dimension_numbers<[1], [0], [0], [1], [0, 0, 1, 1], [], []>} : vector<8x25xf32>, vector<25x2xf32>, vector<8x2xf32> -> vector<8x2xf32>
      %cst_26 = arith.constant 5.000000e-01 : f32
      %37 = vector.broadcast %cst_26 : f32 to vector<8x2xf32>
      %38 = arith.mulf %37, %36 : vector<8x2xf32>
      %cst_27 = arith.constant 1.000000e+00 : f32
      %39 = vector.broadcast %cst_27 : f32 to vector<8x2xf32>
      %40 = arith.cmpf oge, %38, %39 : vector<8x2xf32>
      %41 = arith.extui %40 : vector<8x2xi1> to vector<8x2xi32>
      %42 = arith.sitofp %41 : vector<8x2xi32> to vector<8x2xf32>
      %c0_28 = arith.constant 0 : index
      %c0_29 = arith.constant 0 : index
      %43 = vector.load %arg6[%c0_28, %c0_29] : memref<8x2xf32, #tpu.memory_space<vmem>>, vector<8x2xf32>
      tpu.vector_store %arg6[%c0_28, %c0_29], %42 {strides = array<i32>} : memref<8x2xf32, #tpu.memory_space<vmem>>, vector<8x2xf32>,
    } else {
    }
    return
  }
  func.func @transform_0(%arg0: i32) -> (i32, i32) {
    %c0_i32 = arith.constant 0 : i32
    %c0_i32_0 = arith.constant 0 : i32
    return %c0_i32, %arg0 : i32, i32
  }
  func.func @transform_1(%arg0: i32) -> (i32, i32) {
    %c0_i32 = arith.constant 0 : i32
    %c0_i32_0 = arith.constant 0 : i32
    return %arg0, %c0_i32 : i32, i32
  }
  func.func @transform_2(%arg0: i32) -> (i32, i32) {
    %c0_i32 = arith.constant 0 : i32
    %c0_i32_0 = arith.constant 0 : i32
    %c0_i32_1 = arith.constant 0 : i32
    return %c0_i32, %c0_i32_0 : i32, i32
  }
  func.func @transform_3(%arg0: i32) -> (i32, i32) {
    %c0_i32 = arith.constant 0 : i32
    %c0_i32_0 = arith.constant 0 : i32
    %c0_i32_1 = arith.constant 0 : i32
    return %c0_i32, %c0_i32_0 : i32, i32
  }
  func.func @transform_4(%arg0: i32) -> (i32, i32) {
    %c0_i32 = arith.constant 0 : i32
    %c0_i32_0 = arith.constant 0 : i32
    %c0_i32_1 = arith.constant 0 : i32
    return %c0_i32, %c0_i32_0 : i32, i32
  }
  func.func @transform_5(%arg0: i32) -> (i32, i32) {
    %c0_i32 = arith.constant 0 : i32
    %c0_i32_0 = arith.constant 0 : i32
    %c0_i32_1 = arith.constant 0 : i32
    return %c0_i32, %c0_i32_0 : i32, i32
  }
}

</mosaic_0001>

<llo_original>
// kernel: snn_forward.1
$region0: #{snn_forward.1}
  #allocation0 [shape = 'u32[]', space=smem, size = 0x4, offset = 0x4, fixed_abs, tag = 'smem constant byte address 0x4 - core index']
  #allocation1 [shape = 'u32[144,128]{1,0:T(1,128)}', space=vmem, size = 0x12000, scoped, tag = 'internal scratch']
  #allocation2 [shape = 'f32[8,400]{1,0:T(8,128)}', space=vmem, size = 0x4000, scoped, tag = 'scratch operand']
  %s0 = inlined_call_operand.vmem [shape: bf16[8,12288], index: 0, kind: input, shape index: {}]
  %s1 = inlined_call_operand.vmem [shape: bf16[12288,400], index: 1, kind: input, shape index: {}]
  %s2 = inlined_call_operand.vmem [shape: f32[400,100], index: 2, kind: input, shape index: {}]
  %s3 = inlined_call_operand.vmem [shape: f32[100,25], index: 3, kind: input, shape index: {}]
  %s4 = inlined_call_operand.vmem [shape: f32[25,2], index: 4, kind: input, shape index: {}]
  %s5 = inlined_call_operand.vmem [shape: f32[8,2], index: 5, kind: output, shape index: {}]
  %s6 = sld [smem:[#allocation0]]
  $region61: #{snn_forward.1} parent=0
    _
  %s8 = ssub.s32 1, %s6
  %s9 = scalar_select 0, %s8, %s6
  loop: start=0, step=1, limit=6
  $region2: #{snn_forward.1} parent=0 // loop_pre_header
    _
  $region3: #{snn_forward.1} parent=0 // loop_header
    %s11 = sphi 0, %s15
    %p12 = scmp.ge.s32.totalorder %s11, 6
    %s21 = sphi 0, %s23
    %s24 = sphi 0, %s21
    %s25 = sphi 0, %s24
    %s41 = sphi 0, %s25
    %s47 = sphi 0, %s49
    %s50 = sphi 0, %s47
    %s51 = sphi 0, %s50
    %s67 = sphi 0, %s51
    %s71 = sphi 0, %s71
    %s73 = sphi 0, %s71
    %s74 = sphi 0, %s73
    %s88 = sphi 0, %s74
    %s92 = sphi 0, %s92
    %s94 = sphi 0, %s92
    %s95 = sphi 0, %s94
    %s109 = sphi 0, %s95
    %s113 = sphi 0, %s113
    %s115 = sphi 0, %s113
    %s116 = sphi 0, %s115
    %s130 = sphi 0, %s116
    %s134 = sphi 0, %s134
    %s136 = sphi 0, %s134
    %s137 = sphi 0, %s136
    %s151 = sphi 0, %s137
  $region4: #{snn_forward.1} parent=0 // loop_header_branch
    %14 = sbr.rel (%p12) target = $region8
  $region5: #{snn_forward.1} parent=0 // loop_body
    %s16 = ssub.s32 %s11, 1
    %s17 = ssub.s32 %s11, 2
    %s18 = sadd.s32 %s11, 1
    %s19 = ssub.s32 %s11, %s18
    %p20 = scmp.eq.s32.totalorder %s19, 0
    %s22 = sadd.s32 %s21, 1
    %s23 = scalar_select %p20, %s21, %s22
    %p26 = pneg %p20
    %p27 = scmp.eq.s32.totalorder %s11, 3
    %p28 = por %p26, %p27
    %p29 = scmp.ne.s32.totalorder %s21, %s24
    %p30 = scmp.eq.s32.totalorder %s11, 0
    %p31 = por %p29, %p30
    %p32 = scmp.ne.s32.totalorder %s21, %s24
    %p33 = scmp.eq.s32.totalorder %s16, 3
    %p34 = por %p32, %p33
    %p35 = scmp.ne.s32.totalorder %s24, %s25
    %p36 = scmp.eq.s32.totalorder %s16, 0
    %p37 = por %p35, %p36
    %p38 = scmp.ne.s32.totalorder %s24, %s25
    %p39 = scmp.eq.s32.totalorder %s17, 3
    %p40 = por %p38, %p39
    %p42 = scmp.ne.s32.totalorder %s25, %s41
    %p43 = scmp.eq.s32.totalorder %s17, 0
    %p44 = por %p42, %p43
    %s45 = ssub.s32 %s11, %s18
    %p46 = scmp.eq.s32.totalorder %s45, 0
    %s48 = sadd.s32 %s47, 1
    %s49 = scalar_select %p46, %s47, %s48
    %p52 = pneg %p46
    %p53 = scmp.eq.s32.totalorder %s11, 3
    %p54 = por %p52, %p53
    %p55 = scmp.ne.s32.totalorder %s47, %s50
    %p56 = scmp.eq.s32.totalorder %s11, 0
    %p57 = por %p55, %p56
    %p58 = scmp.ne.s32.totalorder %s47, %s50
    %p59 = scmp.eq.s32.totalorder %s16, 3
    %p60 = por %p58, %p59
    %p61 = scmp.ne.s32.totalorder %s50, %s51
    %p62 = scmp.eq.s32.totalorder %s16, 0
    %p63 = por %p61, %p62
    %p64 = scmp.ne.s32.totalorder %s50, %s51
    %p65 = scmp.eq.s32.totalorder %s17, 3
    %p66 = por %p64, %p65
    %p68 = scmp.ne.s32.totalorder %s51, %s67
    %p69 = scmp.eq.s32.totalorder %s17, 0
    %p70 = por %p68, %p69
    %s72 = sadd.s32 %s71, 1
    %p75 = scmp.eq.s32.totalorder %s11, 3
    %p76 = scmp.ne.s32.totalorder %s71, %s73
    %p77 = scmp.eq.s32.totalorder %s11, 0
    %p78 = por %p76, %p77
    %p79 = scmp.ne.s32.totalorder %s71, %s73
    %p80 = scmp.eq.s32.totalorder %s16, 3
    %p81 = por %p79, %p80
    %p82 = scmp.ne.s32.totalorder %s73, %s74
    %p83 = scmp.eq.s32.totalorder %s16, 0
    %p84 = por %p82, %p83
    %p85 = scmp.ne.s32.totalorder %s73, %s74
    %p86 = scmp.eq.s32.totalorder %s17, 3
    %p87 = por %p85, %p86
    %p89 = scmp.ne.s32.totalorder %s74, %s88
    %p90 = scmp.eq.s32.totalorder %s17, 0
    %p91 = por %p89, %p90
    %s93 = sadd.s32 %s92, 1
    %p96 = scmp.eq.s32.totalorder %s11, 3
    %p97 = scmp.ne.s32.totalorder %s92, %s94
    %p98 = scmp.eq.s32.totalorder %s11, 0
    %p99 = por %p97, %p98
    %p100 = scmp.ne.s32.totalorder %s92, %s94
    %p101 = scmp.eq.s32.totalorder %s16, 3
    %p102 = por %p100, %p101
    %p103 = scmp.ne.s32.totalorder %s94, %s95
    %p104 = scmp.eq.s32.totalorder %s16, 0
    %p105 = por %p103, %p104
    %p106 = scmp.ne.s32.totalorder %s94, %s95
    %p107 = scmp.eq.s32.totalorder %s17, 3
    %p108 = por %p106, %p107
    %p110 = scmp.ne.s32.totalorder %s95, %s109
    %p111 = scmp.eq.s32.totalorder %s17, 0
    %p112 = por %p110, %p111
    %s114 = sadd.s32 %s113, 1
    %p117 = scmp.eq.s32.totalorder %s11, 3
    %p118 = scmp.ne.s32.totalorder %s113, %s115
    %p119 = scmp.eq.s32.totalorder %s11, 0
    %p120 = por %p118, %p119
    %p121 = scmp.ne.s32.totalorder %s113, %s115
    %p122 = scmp.eq.s32.totalorder %s16, 3
    %p123 = por %p121, %p122
    %p124 = scmp.ne.s32.totalorder %s115, %s116
    %p125 = scmp.eq.s32.totalorder %s16, 0
    %p126 = por %p124, %p125
    %p127 = scmp.ne.s32.totalorder %s115, %s116
    %p128 = scmp.eq.s32.totalorder %s17, 3
    %p129 = por %p127, %p128
    %p131 = scmp.ne.s32.totalorder %s116, %s130
    %p132 = scmp.eq.s32.totalorder %s17, 0
    %p133 = por %p131, %p132
    %s135 = sadd.s32 %s134, 1
    %p138 = scmp.eq.s32.totalorder %s11, 3
    %p139 = scmp.ne.s32.totalorder %s134, %s136
    %p140 = scmp.eq.s32.totalorder %s11, 0
    %p141 = por %p139, %p140
    %p142 = scmp.ne.s32.totalorder %s134, %s136
    %p143 = scmp.eq.s32.totalorder %s16, 3
    %p144 = por %p142, %p143
    %p145 = scmp.ne.s32.totalorder %s136, %s137
    %p146 = scmp.eq.s32.totalorder %s16, 0
    %p147 = por %p145, %p146
    %p148 = scmp.ne.s32.totalorder %s136, %s137
    %p149 = scmp.eq.s32.totalorder %s17, 3
    %p150 = por %p148, %p149
    %p152 = scmp.ne.s32.totalorder %s137, %s151
    %p153 = scmp.eq.s32.totalorder %s17, 0
    %p154 = por %p152, %p153
    %p155 = scmp.le.s32.totalorder 1, %s11
    %p156 = scmp.lt.s32.totalorder %s11, 5
    %p157 = pnand %p155, %p156
    %p158 = pneg %p157
    // Predicated region
    $region9: #{snn_forward.1} parent=5 // pred_check
      _
    $region10: #{snn_forward.1} parent=5 // pred_check_branch
      %160 = sbr.rel (%p157) target = $region12
    $region11: #{snn_forward.1} parent=5 // pred_region
      %s161 = ssub.s32 %s11, 1
      // Predicated region
      $region13: #{snn_forward.1} parent=11 // pred_check
        %p162 = pneg %p84
      $region14: #{snn_forward.1} parent=11 // pred_check_branch
        %164 = sbr.rel (%p162) target = $region16
      $region15: #{snn_forward.1} parent=11 // pred_region
        _
      $region16: #{snn_forward.1} parent=11 // pred_fallthru
        _
      // Predicated region
      $region17: #{snn_forward.1} parent=11 // pred_check
        %p165 = pneg %p105
      $region18: #{snn_forward.1} parent=11 // pred_check_branch
        %167 = sbr.rel (%p165) target = $region20
      $region19: #{snn_forward.1} parent=11 // pred_region
        _
      $region20: #{snn_forward.1} parent=11 // pred_fallthru
        _
      // Predicated region
      $region21: #{snn_forward.1} parent=11 // pred_check
        %p168 = pneg %p126
      $region22: #{snn_forward.1} parent=11 // pred_check_branch
        %170 = sbr.rel (%p168) target = $region24
      $region23: #{snn_forward.1} parent=11 // pred_region
        _
      $region24: #{snn_forward.1} parent=11 // pred_fallthru
        _
    $region12: #{snn_forward.1} parent=5 // pred_fallthru
      _
    %p171 = scmp.lt.s32.totalorder %s11, 4
    // Predicated region
    $region25: #{snn_forward.1} parent=5 // pred_check
      %p172 = pneg %p171
    $region26: #{snn_forward.1} parent=5 // pred_check_branch
      %174 = sbr.rel (%p172) target = $region28
    $region27: #{snn_forward.1} parent=5 // pred_region
      // Predicated region
      $region29: #{snn_forward.1} parent=27 // pred_check
        %p175 = pneg %p31
      $region30: #{snn_forward.1} parent=27 // pred_check_branch
        %177 = sbr.rel (%p175) target = $region32
      $region31: #{snn_forward.1} parent=27 // pred_region
        %s178 = smul.u32 24, %s11
        %p179 = scmp.lt.s32.totalorder %s178, 95
        %s180 = scalar_select %p179, %s178, 95
        %s181 = smul.addr %s180, 4
        %s182 = scalar_lea.vmem %s0, %s181
        %s183 = smul.u32 24, %s11
      $region32: #{snn_forward.1} parent=27 // pred_fallthru
        _
      // Predicated region
      $region33: #{snn_forward.1} parent=27 // pred_check
        %p184 = pneg %p57
      $region34: #{snn_forward.1} parent=27 // pred_check_branch
        %186 = sbr.rel (%p184) target = $region36
      $region35: #{snn_forward.1} parent=27 // pred_region
        %s187 = smul.u32 384, %s11
        %p188 = scmp.lt.s32.totalorder %s187, 1535
        %s189 = scalar_select %p188, %s187, 1535
        %s190 = smul.addr %s189, 4
        %s191 = smul.addr %s190, 4
        %s192 = scalar_lea.vmem %s1, %s191
        %s193 = smul.u32 384, %s11
      $region36: #{snn_forward.1} parent=27 // pred_fallthru
        _
    $region28: #{snn_forward.1} parent=5 // pred_fallthru
      _
    %p194 = scmp.le.s32.totalorder 1, %s11
    %p195 = scmp.lt.s32.totalorder %s11, 5
    %p196 = pnand %p194, %p195
    %p197 = pneg %p196
    // Predicated region
    $region37: #{snn_forward.1} parent=5 // pred_check
      _
    $region38: #{snn_forward.1} parent=5 // pred_check_branch
      %199 = sbr.rel (%p196) target = $region40
    $region39: #{snn_forward.1} parent=5 // pred_region
      %s200 = ssub.s32 %s11, 1
      %s201 = smul.u32 24, %s16
      %p202 = scmp.lt.s32.totalorder %s201, 95
      %s203 = scalar_select %p202, %s201, 95
      %s204 = smul.addr %s203, 4
      %s205 = scalar_lea.vmem %s0, %s204
      %p206 = pneg %p37
      %p207 = pneg %p34
      %s208 = smul.u32 384, %s16
      %p209 = scmp.lt.s32.totalorder %s208, 1535
      %s210 = scalar_select %p209, %s208, 1535
      %s211 = smul.addr %s210, 4
      %s212 = smul.addr %s211, 4
      %s213 = scalar_lea.vmem %s1, %s212
      %p214 = pneg %p63
      %p215 = pneg %p60
      %p216 = pneg %p84
      %p217 = pneg %p81
      %p218 = pneg %p105
      %p219 = pneg %p102
      %p220 = pneg %p126
      %p221 = pneg %p123
      %p222 = pneg %p147
      %p223 = pneg %p144
      %s224 = smul.u32 24, %s16
      %p225 = scmp.lt.s32.totalorder %s224, 95
      %s226 = scalar_select %p225, %s224, 95
      %s227 = smul.addr %s226, 4
      %s228 = scalar_lea.vmem %s0, %s227
      %s229 = smul.u32 24, %s16
      %s230 = smul.u32 384, %s16
      %p231 = scmp.lt.s32.totalorder %s230, 1535
      %s232 = scalar_select %p231, %s230, 1535
      %s233 = smul.addr %s232, 4
      %s234 = smul.addr %s233, 4
      %s235 = scalar_lea.vmem %s1, %s234
      %s236 = smul.u32 384, %s16
      %p237 = scmp.eq.s32.totalorder %s16, 0
      // Predicated region
      $region41: #{snn_forward.1} parent=39 // pred_check
        %p238 = pneg %p237
      $region42: #{snn_forward.1} parent=39 // pred_check_branch
        %240 = sbr.rel (%p238) target = $region44
      $region43: #{snn_forward.1} parent=39 // pred_region
        %241 = vst [vmem:[#allocation2] sm:$0xff] 0.0
        %242 = vst [vmem:[#allocation2 + $0x8] sm:$0xff] 0.0
        %243 = vst [vmem:[#allocation2 + $0x10] sm:$0xff] 0.0
        %vm244 = vcmask 130048
        %245 = vst.msk [vmem:[#allocation2 + $0x18] sm:$0xff] %vm244, 0.0
      $region44: #{snn_forward.1} parent=39 // pred_fallthru
        _
      %v246 = vld [vmem:[#allocation2] sm:$0xff]
      %v247 = vld [vmem:[#allocation2 + $0x8] sm:$0xff]
      %v248 = vld [vmem:[#allocation2 + $0x10] sm:$0xff]
      %v249 = vld [vmem:[#allocation2 + $0x18] sm:$0xff]
      %v250 = vld [vmem:[%s228] sm:$0xff]
      %v251 = vld [vmem:[%s228 + $0x8] sm:$0xff]
      %v252 = vld [vmem:[%s228 + $0x10] sm:$0xff]
      %v253 = vld [vmem:[%s228 + $0x18] sm:$0xff]
      %v254 = vld [vmem:[%s228 + $0x20] sm:$0xff]
      %v255 = vld [vmem:[%s228 + $0x28] sm:$0xff]
      %v256 = vld [vmem:[%s228 + $0x30] sm:$0xff]
      %v257 = vld [vmem:[%s228 + $0x38] sm:$0xff]
      %v258 = vld [vmem:[%s228 + $0x40] sm:$0xff]
      %v259 = vld [vmem:[%s228 + $0x48] sm:$0xff]
      %v260 = vld [vmem:[%s228 + $0x50] sm:$0xff]
      %v261 = vld [vmem:[%s228 + $0x58] sm:$0xff]
      %v262 = vld [vmem:[%s235] sm:$0xff]
      %v263 = vld [vmem:[%s235 + $0x8] sm:$0xff]
      %v264 = vld [vmem:[%s235 + $0x10] sm:$0xff]
      %v265 = vld [vmem:[%s235 + $0x18] sm:$0xff]
      %v266 = vld [vmem:[%s235 + $0x20] sm:$0xff]
      %v267 = vld [vmem:[%s235 + $0x28] sm:$0xff]
      %v268 = vld [vmem:[%s235 + $0x30] sm:$0xff]
      %v269 = vld [vmem:[%s235 + $0x38] sm:$0xff]
      %v270 = vld [vmem:[%s235 + $0x40] sm:$0xff]
      %v271 = vld [vmem:[%s235 + $0x48] sm:$0xff]
      %v272 = vld [vmem:[%s235 + $0x50] sm:$0xff]
      %v273 = vld [vmem:[%s235 + $0x58] sm:$0xff]
      %v274 = vld [vmem:[%s235 + $0x60] sm:$0xff]
      %v275 = vld [vmem:[%s235 + $0x68] sm:$0xff]
      %v276 = vld [vmem:[%s235 + $0x70] sm:$0xff]
      %v277 = vld [vmem:[%s235 + $0x78] sm:$0xff]
      %v278 = vld [vmem:[%s235 + $0x80] sm:$0xff]
      %v279 = vld [vmem:[%s235 + $0x88] sm:$0xff]
      %v280 = vld [vmem:[%s235 + $0x90] sm:$0xff]
      %v281 = vld [vmem:[%s235 + $0x98] sm:$0xff]
      %v282 = vld [vmem:[%s235 + $0xa0] sm:$0xff]
      %v283 = vld [vmem:[%s235 + $0xa8] sm:$0xff]
      %v284 = vld [vmem:[%s235 + $0xb0] sm:$0xff]
      %v285 = vld [vmem:[%s235 + $0xb8] sm:$0xff]
      %v286 = vld [vmem:[%s235 + $0xc0] sm:$0xff]
      %v287 = vld [vmem:[%s235 + $0xc8] sm:$0xff]
      %v288 = vld [vmem:[%s235 + $0xd0] sm:$0xff]
      %v289 = vld [vmem:[%s235 + $0xd8] sm:$0xff]
      %v290 = vld [vmem:[%s235 + $0xe0] sm:$0xff]
      %v291 = vld [vmem:[%s235 + $0xe8] sm:$0xff]
      %v292 = vld [vmem:[%s235 + $0xf0] sm:$0xff]
      %v293 = vld [vmem:[%s235 + $0xf8] sm:$0xff]
      %v294 = vld [vmem:[%s235 + $0x100] sm:$0xff]
      %v295 = vld [vmem:[%s235 + $0x108] sm:$0xff]
      %v296 = vld [vmem:[%s235 + $0x110] sm:$0xff]
      %v297 = vld [vmem:[%s235 + $0x118] sm:$0xff]
      %v298 = vld [vmem:[%s235 + $0x120] sm:$0xff]
      %v299 = vld [vmem:[%s235 + $0x128] sm:$0xff]
      %v300 = vld [vmem:[%s235 + $0x130] sm:$0xff]
      %v301 = vld [vmem:[%s235 + $0x138] sm:$0xff]
      %v302 = vld [vmem:[%s235 + $0x140] sm:$0xff]
      %v303 = vld [vmem:[%s235 + $0x148] sm:$0xff]
      %v304 = vld [vmem:[%s235 + $0x150] sm:$0xff]
      %v305 = vld [vmem:[%s235 + $0x158] sm:$0xff]
      %v306 = vld [vmem:[%s235 + $0x160] sm:$0xff]
      %v307 = vld [vmem:[%s235 + $0x168] sm:$0xff]
      %v308 = vld [vmem:[%s235 + $0x170] sm:$0xff]
      %v309 = vld [vmem:[%s235 + $0x178] sm:$0xff]
      %v310 = vld [vmem:[%s235 + $0x180] sm:$0xff]
      %v311 = vld [vmem:[%s235 + $0x188] sm:$0xff]
      %v312 = vld [vmem:[%s235 + $0x190] sm:$0xff]
      %v313 = vld [vmem:[%s235 + $0x198] sm:$0xff]
      %v314 = vld [vmem:[%s235 + $0x1a0] sm:$0xff]
      %v315 = vld [vmem:[%s235 + $0x1a8] sm:$0xff]
      %v316 = vld [vmem:[%s235 + $0x1b0] sm:$0xff]
      %v317 = vld [vmem:[%s235 + $0x1b8] sm:$0xff]
      %v318 = vld [vmem:[%s235 + $0x1c0] sm:$0xff]
      %v319 = vld [vmem:[%s235 + $0x1c8] sm:$0xff]
      %v320 = vld [vmem:[%s235 + $0x1d0] sm:$0xff]
      %v321 = vld [vmem:[%s235 + $0x1d8] sm:$0xff]
      %v322 = vld [vmem:[%s235 + $0x1e0] sm:$0xff]
      %v323 = vld [vmem:[%s235 + $0x1e8] sm:$0xff]
      %v324 = vld [vmem:[%s235 + $0x1f0] sm:$0xff]
      %v325 = vld [vmem:[%s235 + $0x1f8] sm:$0xff]
      %v326 = vld [vmem:[%s235 + $0x200] sm:$0xff]
      %v327 = vld [vmem:[%s235 + $0x208] sm:$0xff]
      %v328 = vld [vmem:[%s235 + $0x210] sm:$0xff]
      %v329 = vld [vmem:[%s235 + $0x218] sm:$0xff]
      %v330 = vld [vmem:[%s235 + $0x220] sm:$0xff]
      %v331 = vld [vmem:[%s235 + $0x228] sm:$0xff]
      %v332 = vld [vmem:[%s235 + $0x230] sm:$0xff]
      %v333 = vld [vmem:[%s235 + $0x238] sm:$0xff]
      %v334 = vld [vmem:[%s235 + $0x240] sm:$0xff]
      %v335 = vld [vmem:[%s235 + $0x248] sm:$0xff]
      %v336 = vld [vmem:[%s235 + $0x250] sm:$0xff]
      %v337 = vld [vmem:[%s235 + $0x258] sm:$0xff]
      %v338 = vld [vmem:[%s235 + $0x260] sm:$0xff]
      %v339 = vld [vmem:[%s235 + $0x268] sm:$0xff]
      %v340 = vld [vmem:[%s235 + $0x270] sm:$0xff]
      %v341 = vld [vmem:[%s235 + $0x278] sm:$0xff]
      %v342 = vld [vmem:[%s235 + $0x280] sm:$0xff]
      %v343 = vld [vmem:[%s235 + $0x288] sm:$0xff]
      %v344 = vld [vmem:[%s235 + $0x290] sm:$0xff]
      %v345 = vld [vmem:[%s235 + $0x298] sm:$0xff]
      %v346 = vld [vmem:[%s235 + $0x2a0] sm:$0xff]
      %v347 = vld [vmem:[%s235 + $0x2a8] sm:$0xff]
      %v348 = vld [vmem:[%s235 + $0x2b0] sm:$0xff]
      %v349 = vld [vmem:[%s235 + $0x2b8] sm:$0xff]
      %v350 = vld [vmem:[%s235 + $0x2c0] sm:$0xff]
      %v351 = vld [vmem:[%s235 + $0x2c8] sm:$0xff]
      %v352 = vld [vmem:[%s235 + $0x2d0] sm:$0xff]
      %v353 = vld [vmem:[%s235 + $0x2d8] sm:$0xff]
      %v354 = vld [vmem:[%s235 + $0x2e0] sm:$0xff]
      %v355 = vld [vmem:[%s235 + $0x2e8] sm:$0xff]
      %v356 = vld [vmem:[%s235 + $0x2f0] sm:$0xff]
      %v357 = vld [vmem:[%s235 + $0x2f8] sm:$0xff]
      %v358 = vld [vmem:[%s235 + $0x300] sm:$0xff]
      %v359 = vld [vmem:[%s235 + $0x308] sm:$0xff]
      %v360 = vld [vmem:[%s235 + $0x310] sm:$0xff]
      %v361 = vld [vmem:[%s235 + $0x318] sm:$0xff]
      %v362 = vld [vmem:[%s235 + $0x320] sm:$0xff]
      %v363 = vld [vmem:[%s235 + $0x328] sm:$0xff]
      %v364 = vld [vmem:[%s235 + $0x330] sm:$0xff]
      %v365 = vld [vmem:[%s235 + $0x338] sm:$0xff]
      %v366 = vld [vmem:[%s235 + $0x340] sm:$0xff]
      %v367 = vld [vmem:[%s235 + $0x348] sm:$0xff]
      %v368 = vld [vmem:[%s235 + $0x350] sm:$0xff]
      %v369 = vld [vmem:[%s235 + $0x358] sm:$0xff]
      %v370 = vld [vmem:[%s235 + $0x360] sm:$0xff]
      %v371 = vld [vmem:[%s235 + $0x368] sm:$0xff]
      %v372 = vld [vmem:[%s235 + $0x370] sm:$0xff]
      %v373 = vld [vmem:[%s235 + $0x378] sm:$0xff]
      %v374 = vld [vmem:[%s235 + $0x380] sm:$0xff]
      %v375 = vld [vmem:[%s235 + $0x388] sm:$0xff]
      %v376 = vld [vmem:[%s235 + $0x390] sm:$0xff]
      %v377 = vld [vmem:[%s235 + $0x398] sm:$0xff]
      %v378 = vld [vmem:[%s235 + $0x3a0] sm:$0xff]
      %v379 = vld [vmem:[%s235 + $0x3a8] sm:$0xff]
      %v380 = vld [vmem:[%s235 + $0x3b0] sm:$0xff]
      %v381 = vld [vmem:[%s235 + $0x3b8] sm:$0xff]
      %v382 = vld [vmem:[%s235 + $0x3c0] sm:$0xff]
      %v383 = vld [vmem:[%s235 + $0x3c8] sm:$0xff]
      %v384 = vld [vmem:[%s235 + $0x3d0] sm:$0xff]
      %v385 = vld [vmem:[%s235 + $0x3d8] sm:$0xff]
      %v386 = vld [vmem:[%s235 + $0x3e0] sm:$0xff]
      %v387 = vld [vmem:[%s235 + $0x3e8] sm:$0xff]
      %v388 = vld [vmem:[%s235 + $0x3f0] sm:$0xff]
      %v389 = vld [vmem:[%s235 + $0x3f8] sm:$0xff]
      %v390 = vld [vmem:[%s235 + $0x400] sm:$0xff]
      %v391 = vld [vmem:[%s235 + $0x408] sm:$0xff]
      %v392 = vld [vmem:[%s235 + $0x410] sm:$0xff]
      %v393 = vld [vmem:[%s235 + $0x418] sm:$0xff]
      %v394 = vld [vmem:[%s235 + $0x420] sm:$0xff]
      %v395 = vld [vmem:[%s235 + $0x428] sm:$0xff]
      %v396 = vld [vmem:[%s235 + $0x430] sm:$0xff]
      %v397 = vld [vmem:[%s235 + $0x438] sm:$0xff]
      %v398 = vld [vmem:[%s235 + $0x440] sm:$0xff]
      %v399 = vld [vmem:[%s235 + $0x448] sm:$0xff]
      %v400 = vld [vmem:[%s235 + $0x450] sm:$0xff]
      %v401 = vld [vmem:[%s235 + $0x458] sm:$0xff]
      %v402 = vld [vmem:[%s235 + $0x460] sm:$0xff]
      %v403 = vld [vmem:[%s235 + $0x468] sm:$0xff]
      %v404 = vld [vmem:[%s235 + $0x470] sm:$0xff]
      %v405 = vld [vmem:[%s235 + $0x478] sm:$0xff]
      %v406 = vld [vmem:[%s235 + $0x480] sm:$0xff]
      %v407 = vld [vmem:[%s235 + $0x488] sm:$0xff]
      %v408 = vld [vmem:[%s235 + $0x490] sm:$0xff]
      %v409 = vld [vmem:[%s235 + $0x498] sm:$0xff]
      %v410 = vld [vmem:[%s235 + $0x4a0] sm:$0xff]
      %v411 = vld [vmem:[%s235 + $0x4a8] sm:$0xff]
      %v412 = vld [vmem:[%s235 + $0x4b0] sm:$0xff]
      %v413 = vld [vmem:[%s235 + $0x4b8] sm:$0xff]
      %v414 = vld [vmem:[%s235 + $0x4c0] sm:$0xff]
      %v415 = vld [vmem:[%s235 + $0x4c8] sm:$0xff]
      %v416 = vld [vmem:[%s235 + $0x4d0] sm:$0xff]
      %v417 = vld [vmem:[%s235 + $0x4d8] sm:$0xff]
      %v418 = vld [vmem:[%s235 + $0x4e0] sm:$0xff]
      %v419 = vld [vmem:[%s235 + $0x4e8] sm:$0xff]
      %v420 = vld [vmem:[%s235 + $0x4f0] sm:$0xff]
      %v421 = vld [vmem:[%s235 + $0x4f8] sm:$0xff]
      %v422 = vld [vmem:[%s235 + $0x500] sm:$0xff]
      %v423 = vld [vmem:[%s235 + $0x508] sm:$0xff]
      %v424 = vld [vmem:[%s235 + $0x510] sm:$0xff]
      %v425 = vld [vmem:[%s235 + $0x518] sm:$0xff]
      %v426 = vld [vmem:[%s235 + $0x520] sm:$0xff]
      %v427 = vld [vmem:[%s235 + $0x528] sm:$0xff]
      %v428 = vld [vmem:[%s235 + $0x530] sm:$0xff]
      %v429 = vld [vmem:[%s235 + $0x538] sm:$0xff]
      %v430 = vld [vmem:[%s235 + $0x540] sm:$0xff]
      %v431 = vld [vmem:[%s235 + $0x548] sm:$0xff]
      %v432 = vld [vmem:[%s235 + $0x550] sm:$0xff]
      %v433 = vld [vmem:[%s235 + $0x558] sm:$0xff]
      %v434 = vld [vmem:[%s235 + $0x560] sm:$0xff]
      %v435 = vld [vmem:[%s235 + $0x568] sm:$0xff]
      %v436 = vld [vmem:[%s235 + $0x570] sm:$0xff]
      %v437 = vld [vmem:[%s235 + $0x578] sm:$0xff]
      %v438 = vld [vmem:[%s235 + $0x580] sm:$0xff]
      %v439 = vld [vmem:[%s235 + $0x588] sm:$0xff]
      %v440 = vld [vmem:[%s235 + $0x590] sm:$0xff]
      %v441 = vld [vmem:[%s235 + $0x598] sm:$0xff]
      %v442 = vld [vmem:[%s235 + $0x5a0] sm:$0xff]
      %v443 = vld [vmem:[%s235 + $0x5a8] sm:$0xff]
      %v444 = vld [vmem:[%s235 + $0x5b0] sm:$0xff]
      %v445 = vld [vmem:[%s235 + $0x5b8] sm:$0xff]
      %v446 = vld [vmem:[%s235 + $0x5c0] sm:$0xff]
      %v447 = vld [vmem:[%s235 + $0x5c8] sm:$0xff]
      %v448 = vld [vmem:[%s235 + $0x5d0] sm:$0xff]
      %v449 = vld [vmem:[%s235 + $0x5d8] sm:$0xff]
      %v450 = vld [vmem:[%s235 + $0x5e0] sm:$0xff]
      %v451 = vld [vmem:[%s235 + $0x5e8] sm:$0xff]
      %v452 = vld [vmem:[%s235 + $0x5f0] sm:$0xff]
      %v453 = vld [vmem:[%s235 + $0x5f8] sm:$0xff]
      %v454 = vld [vmem:[%s235 + $0x600] sm:$0xff]
      %v455 = vld [vmem:[%s235 + $0x608] sm:$0xff]
      %v456 = vld [vmem:[%s235 + $0x610] sm:$0xff]
      %v457 = vld [vmem:[%s235 + $0x618] sm:$0xff]
      %v458 = vld [vmem:[%s235 + $0x620] sm:$0xff]
      %v459 = vld [vmem:[%s235 + $0x628] sm:$0xff]
      %v460 = vld [vmem:[%s235 + $0x630] sm:$0xff]
      %v461 = vld [vmem:[%s235 + $0x638] sm:$0xff]
      %v462 = vld [vmem:[%s235 + $0x640] sm:$0xff]
      %v463 = vld [vmem:[%s235 + $0x648] sm:$0xff]
      %v464 = vld [vmem:[%s235 + $0x650] sm:$0xff]
      %v465 = vld [vmem:[%s235 + $0x658] sm:$0xff]
      %v466 = vld [vmem:[%s235 + $0x660] sm:$0xff]
      %v467 = vld [vmem:[%s235 + $0x668] sm:$0xff]
      %v468 = vld [vmem:[%s235 + $0x670] sm:$0xff]
      %v469 = vld [vmem:[%s235 + $0x678] sm:$0xff]
      %v470 = vld [vmem:[%s235 + $0x680] sm:$0xff]
      %v471 = vld [vmem:[%s235 + $0x688] sm:$0xff]
      %v472 = vld [vmem:[%s235 + $0x690] sm:$0xff]
      %v473 = vld [vmem:[%s235 + $0x698] sm:$0xff]
      %v474 = vld [vmem:[%s235 + $0x6a0] sm:$0xff]
      %v475 = vld [vmem:[%s235 + $0x6a8] sm:$0xff]
      %v476 = vld [vmem:[%s235 + $0x6b0] sm:$0xff]
      %v477 = vld [vmem:[%s235 + $0x6b8] sm:$0xff]
      %v478 = vld [vmem:[%s235 + $0x6c0] sm:$0xff]
      %v479 = vld [vmem:[%s235 + $0x6c8] sm:$0xff]
      %v480 = vld [vmem:[%s235 + $0x6d0] sm:$0xff]
      %v481 = vld [vmem:[%s235 + $0x6d8] sm:$0xff]
      %v482 = vld [vmem:[%s235 + $0x6e0] sm:$0xff]
      %v483 = vld [vmem:[%s235 + $0x6e8] sm:$0xff]
      %v484 = vld [vmem:[%s235 + $0x6f0] sm:$0xff]
      %v485 = vld [vmem:[%s235 + $0x6f8] sm:$0xff]
      %v486 = vld [vmem:[%s235 + $0x700] sm:$0xff]
      %v487 = vld [vmem:[%s235 + $0x708] sm:$0xff]
      %v488 = vld [vmem:[%s235 + $0x710] sm:$0xff]
      %v489 = vld [vmem:[%s235 + $0x718] sm:$0xff]
      %v490 = vld [vmem:[%s235 + $0x720] sm:$0xff]
      %v491 = vld [vmem:[%s235 + $0x728] sm:$0xff]
      %v492 = vld [vmem:[%s235 + $0x730] sm:$0xff]
      %v493 = vld [vmem:[%s235 + $0x738] sm:$0xff]
      %v494 = vld [vmem:[%s235 + $0x740] sm:$0xff]
      %v495 = vld [vmem:[%s235 + $0x748] sm:$0xff]
      %v496 = vld [vmem:[%s235 + $0x750] sm:$0xff]
      %v497 = vld [vmem:[%s235 + $0x758] sm:$0xff]
      %v498 = vld [vmem:[%s235 + $0x760] sm:$0xff]
      %v499 = vld [vmem:[%s235 + $0x768] sm:$0xff]
      %v500 = vld [vmem:[%s235 + $0x770] sm:$0xff]
      %v501 = vld [vmem:[%s235 + $0x778] sm:$0xff]
      %v502 = vld [vmem:[%s235 + $0x780] sm:$0xff]
      %v503 = vld [vmem:[%s235 + $0x788] sm:$0xff]
      %v504 = vld [vmem:[%s235 + $0x790] sm:$0xff]
      %v505 = vld [vmem:[%s235 + $0x798] sm:$0xff]
      %v506 = vld [vmem:[%s235 + $0x7a0] sm:$0xff]
      %v507 = vld [vmem:[%s235 + $0x7a8] sm:$0xff]
      %v508 = vld [vmem:[%s235 + $0x7b0] sm:$0xff]
      %v509 = vld [vmem:[%s235 + $0x7b8] sm:$0xff]
      %v510 = vld [vmem:[%s235 + $0x7c0] sm:$0xff]
      %v511 = vld [vmem:[%s235 + $0x7c8] sm:$0xff]
      %v512 = vld [vmem:[%s235 + $0x7d0] sm:$0xff]
      %v513 = vld [vmem:[%s235 + $0x7d8] sm:$0xff]
      %v514 = vld [vmem:[%s235 + $0x7e0] sm:$0xff]
      %v515 = vld [vmem:[%s235 + $0x7e8] sm:$0xff]
      %v516 = vld [vmem:[%s235 + $0x7f0] sm:$0xff]
      %v517 = vld [vmem:[%s235 + $0x7f8] sm:$0xff]
      %v518 = vld [vmem:[%s235 + $0x800] sm:$0xff]
      %v519 = vld [vmem:[%s235 + $0x808] sm:$0xff]
      %v520 = vld [vmem:[%s235 + $0x810] sm:$0xff]
      %v521 = vld [vmem:[%s235 + $0x818] sm:$0xff]
      %v522 = vld [vmem:[%s235 + $0x820] sm:$0xff]
      %v523 = vld [vmem:[%s235 + $0x828] sm:$0xff]
      %v524 = vld [vmem:[%s235 + $0x830] sm:$0xff]
      %v525 = vld [vmem:[%s235 + $0x838] sm:$0xff]
      %v526 = vld [vmem:[%s235 + $0x840] sm:$0xff]
      %v527 = vld [vmem:[%s235 + $0x848] sm:$0xff]
      %v528 = vld [vmem:[%s235 + $0x850] sm:$0xff]
      %v529 = vld [vmem:[%s235 + $0x858] sm:$0xff]
      %v530 = vld [vmem:[%s235 + $0x860] sm:$0xff]
      %v531 = vld [vmem:[%s235 + $0x868] sm:$0xff]
      %v532 = vld [vmem:[%s235 + $0x870] sm:$0xff]
      %v533 = vld [vmem:[%s235 + $0x878] sm:$0xff]
      %v534 = vld [vmem:[%s235 + $0x880] sm:$0xff]
      %v535 = vld [vmem:[%s235 + $0x888] sm:$0xff]
      %v536 = vld [vmem:[%s235 + $0x890] sm:$0xff]
      %v537 = vld [vmem:[%s235 + $0x898] sm:$0xff]
      %v538 = vld [vmem:[%s235 + $0x8a0] sm:$0xff]
      %v539 = vld [vmem:[%s235 + $0x8a8] sm:$0xff]
      %v540 = vld [vmem:[%s235 + $0x8b0] sm:$0xff]
      %v541 = vld [vmem:[%s235 + $0x8b8] sm:$0xff]
      %v542 = vld [vmem:[%s235 + $0x8c0] sm:$0xff]
      %v543 = vld [vmem:[%s235 + $0x8c8] sm:$0xff]
      %v544 = vld [vmem:[%s235 + $0x8d0] sm:$0xff]
      %v545 = vld [vmem:[%s235 + $0x8d8] sm:$0xff]
      %v546 = vld [vmem:[%s235 + $0x8e0] sm:$0xff]
      %v547 = vld [vmem:[%s235 + $0x8e8] sm:$0xff]
      %v548 = vld [vmem:[%s235 + $0x8f0] sm:$0xff]
      %v549 = vld [vmem:[%s235 + $0x8f8] sm:$0xff]
      %v550 = vld [vmem:[%s235 + $0x900] sm:$0xff]
      %v551 = vld [vmem:[%s235 + $0x908] sm:$0xff]
      %v552 = vld [vmem:[%s235 + $0x910] sm:$0xff]
      %v553 = vld [vmem:[%s235 + $0x918] sm:$0xff]
      %v554 = vld [vmem:[%s235 + $0x920] sm:$0xff]
      %v555 = vld [vmem:[%s235 + $0x928] sm:$0xff]
      %v556 = vld [vmem:[%s235 + $0x930] sm:$0xff]
      %v557 = vld [vmem:[%s235 + $0x938] sm:$0xff]
      %v558 = vld [vmem:[%s235 + $0x940] sm:$0xff]
      %v559 = vld [vmem:[%s235 + $0x948] sm:$0xff]
      %v560 = vld [vmem:[%s235 + $0x950] sm:$0xff]
      %v561 = vld [vmem:[%s235 + $0x958] sm:$0xff]
      %v562 = vld [vmem:[%s235 + $0x960] sm:$0xff]
      %v563 = vld [vmem:[%s235 + $0x968] sm:$0xff]
      %v564 = vld [vmem:[%s235 + $0x970] sm:$0xff]
      %v565 = vld [vmem:[%s235 + $0x978] sm:$0xff]
      %v566 = vld [vmem:[%s235 + $0x980] sm:$0xff]
      %v567 = vld [vmem:[%s235 + $0x988] sm:$0xff]
      %v568 = vld [vmem:[%s235 + $0x990] sm:$0xff]
      %v569 = vld [vmem:[%s235 + $0x998] sm:$0xff]
      %v570 = vld [vmem:[%s235 + $0x9a0] sm:$0xff]
      %v571 = vld [vmem:[%s235 + $0x9a8] sm:$0xff]
      %v572 = vld [vmem:[%s235 + $0x9b0] sm:$0xff]
      %v573 = vld [vmem:[%s235 + $0x9b8] sm:$0xff]
      %v574 = vld [vmem:[%s235 + $0x9c0] sm:$0xff]
      %v575 = vld [vmem:[%s235 + $0x9c8] sm:$0xff]
      %v576 = vld [vmem:[%s235 + $0x9d0] sm:$0xff]
      %v577 = vld [vmem:[%s235 + $0x9d8] sm:$0xff]
      %v578 = vld [vmem:[%s235 + $0x9e0] sm:$0xff]
      %v579 = vld [vmem:[%s235 + $0x9e8] sm:$0xff]
      %v580 = vld [vmem:[%s235 + $0x9f0] sm:$0xff]
      %v581 = vld [vmem:[%s235 + $0x9f8] sm:$0xff]
      %v582 = vld [vmem:[%s235 + $0xa00] sm:$0xff]
      %v583 = vld [vmem:[%s235 + $0xa08] sm:$0xff]
      %v584 = vld [vmem:[%s235 + $0xa10] sm:$0xff]
      %v585 = vld [vmem:[%s235 + $0xa18] sm:$0xff]
      %v586 = vld [vmem:[%s235 + $0xa20] sm:$0xff]
      %v587 = vld [vmem:[%s235 + $0xa28] sm:$0xff]
      %v588 = vld [vmem:[%s235 + $0xa30] sm:$0xff]
      %v589 = vld [vmem:[%s235 + $0xa38] sm:$0xff]
      %v590 = vld [vmem:[%s235 + $0xa40] sm:$0xff]
      %v591 = vld [vmem:[%s235 + $0xa48] sm:$0xff]
      %v592 = vld [vmem:[%s235 + $0xa50] sm:$0xff]
      %v593 = vld [vmem:[%s235 + $0xa58] sm:$0xff]
      %v594 = vld [vmem:[%s235 + $0xa60] sm:$0xff]
      %v595 = vld [vmem:[%s235 + $0xa68] sm:$0xff]
      %v596 = vld [vmem:[%s235 + $0xa70] sm:$0xff]
      %v597 = vld [vmem:[%s235 + $0xa78] sm:$0xff]
      %v598 = vld [vmem:[%s235 + $0xa80] sm:$0xff]
      %v599 = vld [vmem:[%s235 + $0xa88] sm:$0xff]
      %v600 = vld [vmem:[%s235 + $0xa90] sm:$0xff]
      %v601 = vld [vmem:[%s235 + $0xa98] sm:$0xff]
      %v602 = vld [vmem:[%s235 + $0xaa0] sm:$0xff]
      %v603 = vld [vmem:[%s235 + $0xaa8] sm:$0xff]
      %v604 = vld [vmem:[%s235 + $0xab0] sm:$0xff]
      %v605 = vld [vmem:[%s235 + $0xab8] sm:$0xff]
      %v606 = vld [vmem:[%s235 + $0xac0] sm:$0xff]
      %v607 = vld [vmem:[%s235 + $0xac8] sm:$0xff]
      %v608 = vld [vmem:[%s235 + $0xad0] sm:$0xff]
      %v609 = vld [vmem:[%s235 + $0xad8] sm:$0xff]
      %v610 = vld [vmem:[%s235 + $0xae0] sm:$0xff]
      %v611 = vld [vmem:[%s235 + $0xae8] sm:$0xff]
      %v612 = vld [vmem:[%s235 + $0xaf0] sm:$0xff]
      %v613 = vld [vmem:[%s235 + $0xaf8] sm:$0xff]
      %v614 = vld [vmem:[%s235 + $0xb00] sm:$0xff]
      %v615 = vld [vmem:[%s235 + $0xb08] sm:$0xff]
      %v616 = vld [vmem:[%s235 + $0xb10] sm:$0xff]
      %v617 = vld [vmem:[%s235 + $0xb18] sm:$0xff]
      %v618 = vld [vmem:[%s235 + $0xb20] sm:$0xff]
      %v619 = vld [vmem:[%s235 + $0xb28] sm:$0xff]
      %v620 = vld [vmem:[%s235 + $0xb30] sm:$0xff]
      %v621 = vld [vmem:[%s235 + $0xb38] sm:$0xff]
      %v622 = vld [vmem:[%s235 + $0xb40] sm:$0xff]
      %v623 = vld [vmem:[%s235 + $0xb48] sm:$0xff]
      %v624 = vld [vmem:[%s235 + $0xb50] sm:$0xff]
      %v625 = vld [vmem:[%s235 + $0xb58] sm:$0xff]
      %v626 = vld [vmem:[%s235 + $0xb60] sm:$0xff]
      %v627 = vld [vmem:[%s235 + $0xb68] sm:$0xff]
      %v628 = vld [vmem:[%s235 + $0xb70] sm:$0xff]
      %v629 = vld [vmem:[%s235 + $0xb78] sm:$0xff]
      %v630 = vld [vmem:[%s235 + $0xb80] sm:$0xff]
      %v631 = vld [vmem:[%s235 + $0xb88] sm:$0xff]
      %v632 = vld [vmem:[%s235 + $0xb90] sm:$0xff]
      %v633 = vld [vmem:[%s235 + $0xb98] sm:$0xff]
      %v634 = vld [vmem:[%s235 + $0xba0] sm:$0xff]
      %v635 = vld [vmem:[%s235 + $0xba8] sm:$0xff]
      %v636 = vld [vmem:[%s235 + $0xbb0] sm:$0xff]
      %v637 = vld [vmem:[%s235 + $0xbb8] sm:$0xff]
      %v638 = vld [vmem:[%s235 + $0xbc0] sm:$0xff]
      %v639 = vld [vmem:[%s235 + $0xbc8] sm:$0xff]
      %v640 = vld [vmem:[%s235 + $0xbd0] sm:$0xff]
      %v641 = vld [vmem:[%s235 + $0xbd8] sm:$0xff]
      %v642 = vld [vmem:[%s235 + $0xbe0] sm:$0xff]
      %v643 = vld [vmem:[%s235 + $0xbe8] sm:$0xff]
      %v644 = vld [vmem:[%s235 + $0xbf0] sm:$0xff]
      %v645 = vld [vmem:[%s235 + $0xbf8] sm:$0xff]
      %v646 = vld [vmem:[%s235 + $0xc00] sm:$0xff]
      %v647 = vld [vmem:[%s235 + $0xc08] sm:$0xff]
      %v648 = vld [vmem:[%s235 + $0xc10] sm:$0xff]
      %v649 = vld [vmem:[%s235 + $0xc18] sm:$0xff]
      %v650 = vld [vmem:[%s235 + $0xc20] sm:$0xff]
      %v651 = vld [vmem:[%s235 + $0xc28] sm:$0xff]
      %v652 = vld [vmem:[%s235 + $0xc30] sm:$0xff]
      %v653 = vld [vmem:[%s235 + $0xc38] sm:$0xff]
      %v654 = vld [vmem:[%s235 + $0xc40] sm:$0xff]
      %v655 = vld [vmem:[%s235 + $0xc48] sm:$0xff]
      %v656 = vld [vmem:[%s235 + $0xc50] sm:$0xff]
      %v657 = vld [vmem:[%s235 + $0xc58] sm:$0xff]
      %v658 = vld [vmem:[%s235 + $0xc60] sm:$0xff]
      %v659 = vld [vmem:[%s235 + $0xc68] sm:$0xff]
      %v660 = vld [vmem:[%s235 + $0xc70] sm:$0xff]
      %v661 = vld [vmem:[%s235 + $0xc78] sm:$0xff]
      %v662 = vld [vmem:[%s235 + $0xc80] sm:$0xff]
      %v663 = vld [vmem:[%s235 + $0xc88] sm:$0xff]
      %v664 = vld [vmem:[%s235 + $0xc90] sm:$0xff]
      %v665 = vld [vmem:[%s235 + $0xc98] sm:$0xff]
      %v666 = vld [vmem:[%s235 + $0xca0] sm:$0xff]
      %v667 = vld [vmem:[%s235 + $0xca8] sm:$0xff]
      %v668 = vld [vmem:[%s235 + $0xcb0] sm:$0xff]
      %v669 = vld [vmem:[%s235 + $0xcb8] sm:$0xff]
      %v670 = vld [vmem:[%s235 + $0xcc0] sm:$0xff]
      %v671 = vld [vmem:[%s235 + $0xcc8] sm:$0xff]
      %v672 = vld [vmem:[%s235 + $0xcd0] sm:$0xff]
      %v673 = vld [vmem:[%s235 + $0xcd8] sm:$0xff]
      %v674 = vld [vmem:[%s235 + $0xce0] sm:$0xff]
      %v675 = vld [vmem:[%s235 + $0xce8] sm:$0xff]
      %v676 = vld [vmem:[%s235 + $0xcf0] sm:$0xff]
      %v677 = vld [vmem:[%s235 + $0xcf8] sm:$0xff]
      %v678 = vld [vmem:[%s235 + $0xd00] sm:$0xff]
      %v679 = vld [vmem:[%s235 + $0xd08] sm:$0xff]
      %v680 = vld [vmem:[%s235 + $0xd10] sm:$0xff]
      %v681 = vld [vmem:[%s235 + $0xd18] sm:$0xff]
      %v682 = vld [vmem:[%s235 + $0xd20] sm:$0xff]
      %v683 = vld [vmem:[%s235 + $0xd28] sm:$0xff]
      %v684 = vld [vmem:[%s235 + $0xd30] sm:$0xff]
      %v685 = vld [vmem:[%s235 + $0xd38] sm:$0xff]
      %v686 = vld [vmem:[%s235 + $0xd40] sm:$0xff]
      %v687 = vld [vmem:[%s235 + $0xd48] sm:$0xff]
      %v688 = vld [vmem:[%s235 + $0xd50] sm:$0xff]
      %v689 = vld [vmem:[%s235 + $0xd58] sm:$0xff]
      %v690 = vld [vmem:[%s235 + $0xd60] sm:$0xff]
      %v691 = vld [vmem:[%s235 + $0xd68] sm:$0xff]
      %v692 = vld [vmem:[%s235 + $0xd70] sm:$0xff]
      %v693 = vld [vmem:[%s235 + $0xd78] sm:$0xff]
      %v694 = vld [vmem:[%s235 + $0xd80] sm:$0xff]
      %v695 = vld [vmem:[%s235 + $0xd88] sm:$0xff]
      %v696 = vld [vmem:[%s235 + $0xd90] sm:$0xff]
      %v697 = vld [vmem:[%s235 + $0xd98] sm:$0xff]
      %v698 = vld [vmem:[%s235 + $0xda0] sm:$0xff]
      %v699 = vld [vmem:[%s235 + $0xda8] sm:$0xff]
      %v700 = vld [vmem:[%s235 + $0xdb0] sm:$0xff]
      %v701 = vld [vmem:[%s235 + $0xdb8] sm:$0xff]
      %v702 = vld [vmem:[%s235 + $0xdc0] sm:$0xff]
      %v703 = vld [vmem:[%s235 + $0xdc8] sm:$0xff]
      %v704 = vld [vmem:[%s235 + $0xdd0] sm:$0xff]
      %v705 = vld [vmem:[%s235 + $0xdd8] sm:$0xff]
      %v706 = vld [vmem:[%s235 + $0xde0] sm:$0xff]
      %v707 = vld [vmem:[%s235 + $0xde8] sm:$0xff]
      %v708 = vld [vmem:[%s235 + $0xdf0] sm:$0xff]
      %v709 = vld [vmem:[%s235 + $0xdf8] sm:$0xff]
      %v710 = vld [vmem:[%s235 + $0xe00] sm:$0xff]
      %v711 = vld [vmem:[%s235 + $0xe08] sm:$0xff]
      %v712 = vld [vmem:[%s235 + $0xe10] sm:$0xff]
      %v713 = vld [vmem:[%s235 + $0xe18] sm:$0xff]
      %v714 = vld [vmem:[%s235 + $0xe20] sm:$0xff]
      %v715 = vld [vmem:[%s235 + $0xe28] sm:$0xff]
      %v716 = vld [vmem:[%s235 + $0xe30] sm:$0xff]
      %v717 = vld [vmem:[%s235 + $0xe38] sm:$0xff]
      %v718 = vld [vmem:[%s235 + $0xe40] sm:$0xff]
      %v719 = vld [vmem:[%s235 + $0xe48] sm:$0xff]
      %v720 = vld [vmem:[%s235 + $0xe50] sm:$0xff]
      %v721 = vld [vmem:[%s235 + $0xe58] sm:$0xff]
      %v722 = vld [vmem:[%s235 + $0xe60] sm:$0xff]
      %v723 = vld [vmem:[%s235 + $0xe68] sm:$0xff]
      %v724 = vld [vmem:[%s235 + $0xe70] sm:$0xff]
      %v725 = vld [vmem:[%s235 + $0xe78] sm:$0xff]
      %v726 = vld [vmem:[%s235 + $0xe80] sm:$0xff]
      %v727 = vld [vmem:[%s235 + $0xe88] sm:$0xff]
      %v728 = vld [vmem:[%s235 + $0xe90] sm:$0xff]
      %v729 = vld [vmem:[%s235 + $0xe98] sm:$0xff]
      %v730 = vld [vmem:[%s235 + $0xea0] sm:$0xff]
      %v731 = vld [vmem:[%s235 + $0xea8] sm:$0xff]
      %v732 = vld [vmem:[%s235 + $0xeb0] sm:$0xff]
      %v733 = vld [vmem:[%s235 + $0xeb8] sm:$0xff]
      %v734 = vld [vmem:[%s235 + $0xec0] sm:$0xff]
      %v735 = vld [vmem:[%s235 + $0xec8] sm:$0xff]
      %v736 = vld [vmem:[%s235 + $0xed0] sm:$0xff]
      %v737 = vld [vmem:[%s235 + $0xed8] sm:$0xff]
      %v738 = vld [vmem:[%s235 + $0xee0] sm:$0xff]
      %v739 = vld [vmem:[%s235 + $0xee8] sm:$0xff]
      %v740 = vld [vmem:[%s235 + $0xef0] sm:$0xff]
      %v741 = vld [vmem:[%s235 + $0xef8] sm:$0xff]
      %v742 = vld [vmem:[%s235 + $0xf00] sm:$0xff]
      %v743 = vld [vmem:[%s235 + $0xf08] sm:$0xff]
      %v744 = vld [vmem:[%s235 + $0xf10] sm:$0xff]
      %v745 = vld [vmem:[%s235 + $0xf18] sm:$0xff]
      %v746 = vld [vmem:[%s235 + $0xf20] sm:$0xff]
      %v747 = vld [vmem:[%s235 + $0xf28] sm:$0xff]
      %v748 = vld [vmem:[%s235 + $0xf30] sm:$0xff]
      %v749 = vld [vmem:[%s235 + $0xf38] sm:$0xff]
      %v750 = vld [vmem:[%s235 + $0xf40] sm:$0xff]
      %v751 = vld [vmem:[%s235 + $0xf48] sm:$0xff]
      %v752 = vld [vmem:[%s235 + $0xf50] sm:$0xff]
      %v753 = vld [vmem:[%s235 + $0xf58] sm:$0xff]
      %v754 = vld [vmem:[%s235 + $0xf60] sm:$0xff]
      %v755 = vld [vmem:[%s235 + $0xf68] sm:$0xff]
      %v756 = vld [vmem:[%s235 + $0xf70] sm:$0xff]
      %v757 = vld [vmem:[%s235 + $0xf78] sm:$0xff]
      %v758 = vld [vmem:[%s235 + $0xf80] sm:$0xff]
      %v759 = vld [vmem:[%s235 + $0xf88] sm:$0xff]
      %v760 = vld [vmem:[%s235 + $0xf90] sm:$0xff]
      %v761 = vld [vmem:[%s235 + $0xf98] sm:$0xff]
      %v762 = vld [vmem:[%s235 + $0xfa0] sm:$0xff]
      %v763 = vld [vmem:[%s235 + $0xfa8] sm:$0xff]
      %v764 = vld [vmem:[%s235 + $0xfb0] sm:$0xff]
      %v765 = vld [vmem:[%s235 + $0xfb8] sm:$0xff]
      %v766 = vld [vmem:[%s235 + $0xfc0] sm:$0xff]
      %v767 = vld [vmem:[%s235 + $0xfc8] sm:$0xff]
      %v768 = vld [vmem:[%s235 + $0xfd0] sm:$0xff]
      %v769 = vld [vmem:[%s235 + $0xfd8] sm:$0xff]
      %v770 = vld [vmem:[%s235 + $0xfe0] sm:$0xff]
      %v771 = vld [vmem:[%s235 + $0xfe8] sm:$0xff]
      %v772 = vld [vmem:[%s235 + $0xff0] sm:$0xff]
      %v773 = vld [vmem:[%s235 + $0xff8] sm:$0xff]
      %v774 = vld [vmem:[%s235 + $0x1000] sm:$0xff]
      %v775 = vld [vmem:[%s235 + $0x1008] sm:$0xff]
      %v776 = vld [vmem:[%s235 + $0x1010] sm:$0xff]
      %v777 = vld [vmem:[%s235 + $0x1018] sm:$0xff]
      %v778 = vld [vmem:[%s235 + $0x1020] sm:$0xff]
      %v779 = vld [vmem:[%s235 + $0x1028] sm:$0xff]
      %v780 = vld [vmem:[%s235 + $0x1030] sm:$0xff]
      %v781 = vld [vmem:[%s235 + $0x1038] sm:$0xff]
      %v782 = vld [vmem:[%s235 + $0x1040] sm:$0xff]
      %v783 = vld [vmem:[%s235 + $0x1048] sm:$0xff]
      %v784 = vld [vmem:[%s235 + $0x1050] sm:$0xff]
      %v785 = vld [vmem:[%s235 + $0x1058] sm:$0xff]
      %v786 = vld [vmem:[%s235 + $0x1060] sm:$0xff]
      %v787 = vld [vmem:[%s235 + $0x1068] sm:$0xff]
      %v788 = vld [vmem:[%s235 + $0x1070] sm:$0xff]
      %v789 = vld [vmem:[%s235 + $0x1078] sm:$0xff]
      %v790 = vld [vmem:[%s235 + $0x1080] sm:$0xff]
      %v791 = vld [vmem:[%s235 + $0x1088] sm:$0xff]
      %v792 = vld [vmem:[%s235 + $0x1090] sm:$0xff]
      %v793 = vld [vmem:[%s235 + $0x1098] sm:$0xff]
      %v794 = vld [vmem:[%s235 + $0x10a0] sm:$0xff]
      %v795 = vld [vmem:[%s235 + $0x10a8] sm:$0xff]
      %v796 = vld [vmem:[%s235 + $0x10b0] sm:$0xff]
      %v797 = vld [vmem:[%s235 + $0x10b8] sm:$0xff]
      %v798 = vld [vmem:[%s235 + $0x10c0] sm:$0xff]
      %v799 = vld [vmem:[%s235 + $0x10c8] sm:$0xff]
      %v800 = vld [vmem:[%s235 + $0x10d0] sm:$0xff]
      %v801 = vld [vmem:[%s235 + $0x10d8] sm:$0xff]
      %v802 = vld [vmem:[%s235 + $0x10e0] sm:$0xff]
      %v803 = vld [vmem:[%s235 + $0x10e8] sm:$0xff]
      %v804 = vld [vmem:[%s235 + $0x10f0] sm:$0xff]
      %v805 = vld [vmem:[%s235 + $0x10f8] sm:$0xff]
      %v806 = vld [vmem:[%s235 + $0x1100] sm:$0xff]
      %v807 = vld [vmem:[%s235 + $0x1108] sm:$0xff]
      %v808 = vld [vmem:[%s235 + $0x1110] sm:$0xff]
      %v809 = vld [vmem:[%s235 + $0x1118] sm:$0xff]
      %v810 = vld [vmem:[%s235 + $0x1120] sm:$0xff]
      %v811 = vld [vmem:[%s235 + $0x1128] sm:$0xff]
      %v812 = vld [vmem:[%s235 + $0x1130] sm:$0xff]
      %v813 = vld [vmem:[%s235 + $0x1138] sm:$0xff]
      %v814 = vld [vmem:[%s235 + $0x1140] sm:$0xff]
      %v815 = vld [vmem:[%s235 + $0x1148] sm:$0xff]
      %v816 = vld [vmem:[%s235 + $0x1150] sm:$0xff]
      %v817 = vld [vmem:[%s235 + $0x1158] sm:$0xff]
      %v818 = vld [vmem:[%s235 + $0x1160] sm:$0xff]
      %v819 = vld [vmem:[%s235 + $0x1168] sm:$0xff]
      %v820 = vld [vmem:[%s235 + $0x1170] sm:$0xff]
      %v821 = vld [vmem:[%s235 + $0x1178] sm:$0xff]
      %v822 = vld [vmem:[%s235 + $0x1180] sm:$0xff]
      %v823 = vld [vmem:[%s235 + $0x1188] sm:$0xff]
      %v824 = vld [vmem:[%s235 + $0x1190] sm:$0xff]
      %v825 = vld [vmem:[%s235 + $0x1198] sm:$0xff]
      %v826 = vld [vmem:[%s235 + $0x11a0] sm:$0xff]
      %v827 = vld [vmem:[%s235 + $0x11a8] sm:$0xff]
      %v828 = vld [vmem:[%s235 + $0x11b0] sm:$0xff]
      %v829 = vld [vmem:[%s235 + $0x11b8] sm:$0xff]
      %v830 = vld [vmem:[%s235 + $0x11c0] sm:$0xff]
      %v831 = vld [vmem:[%s235 + $0x11c8] sm:$0xff]
      %v832 = vld [vmem:[%s235 + $0x11d0] sm:$0xff]
      %v833 = vld [vmem:[%s235 + $0x11d8] sm:$0xff]
      %v834 = vld [vmem:[%s235 + $0x11e0] sm:$0xff]
      %v835 = vld [vmem:[%s235 + $0x11e8] sm:$0xff]
      %v836 = vld [vmem:[%s235 + $0x11f0] sm:$0xff]
      %v837 = vld [vmem:[%s235 + $0x11f8] sm:$0xff]
      %v838 = vld [vmem:[%s235 + $0x1200] sm:$0xff]
      %v839 = vld [vmem:[%s235 + $0x1208] sm:$0xff]
      %v840 = vld [vmem:[%s235 + $0x1210] sm:$0xff]
      %v841 = vld [vmem:[%s235 + $0x1218] sm:$0xff]
      %v842 = vld [vmem:[%s235 + $0x1220] sm:$0xff]
      %v843 = vld [vmem:[%s235 + $0x1228] sm:$0xff]
      %v844 = vld [vmem:[%s235 + $0x1230] sm:$0xff]
      %v845 = vld [vmem:[%s235 + $0x1238] sm:$0xff]
      %v846 = vld [vmem:[%s235 + $0x1240] sm:$0xff]
      %v847 = vld [vmem:[%s235 + $0x1248] sm:$0xff]
      %v848 = vld [vmem:[%s235 + $0x1250] sm:$0xff]
      %v849 = vld [vmem:[%s235 + $0x1258] sm:$0xff]
      %v850 = vld [vmem:[%s235 + $0x1260] sm:$0xff]
      %v851 = vld [vmem:[%s235 + $0x1268] sm:$0xff]
      %v852 = vld [vmem:[%s235 + $0x1270] sm:$0xff]
      %v853 = vld [vmem:[%s235 + $0x1278] sm:$0xff]
      %v854 = vld [vmem:[%s235 + $0x1280] sm:$0xff]
      %v855 = vld [vmem:[%s235 + $0x1288] sm:$0xff]
      %v856 = vld [vmem:[%s235 + $0x1290] sm:$0xff]
      %v857 = vld [vmem:[%s235 + $0x1298] sm:$0xff]
      %v858 = vld [vmem:[%s235 + $0x12a0] sm:$0xff]
      %v859 = vld [vmem:[%s235 + $0x12a8] sm:$0xff]
      %v860 = vld [vmem:[%s235 + $0x12b0] sm:$0xff]
      %v861 = vld [vmem:[%s235 + $0x12b8] sm:$0xff]
      %v862 = vld [vmem:[%s235 + $0x12c0] sm:$0xff]
      %v863 = vld [vmem:[%s235 + $0x12c8] sm:$0xff]
      %v864 = vld [vmem:[%s235 + $0x12d0] sm:$0xff]
      %v865 = vld [vmem:[%s235 + $0x12d8] sm:$0xff]
      %v866 = vld [vmem:[%s235 + $0x12e0] sm:$0xff]
      %v867 = vld [vmem:[%s235 + $0x12e8] sm:$0xff]
      %v868 = vld [vmem:[%s235 + $0x12f0] sm:$0xff]
      %v869 = vld [vmem:[%s235 + $0x12f8] sm:$0xff]
      %v870 = vld [vmem:[%s235 + $0x1300] sm:$0xff]
      %v871 = vld [vmem:[%s235 + $0x1308] sm:$0xff]
      %v872 = vld [vmem:[%s235 + $0x1310] sm:$0xff]
      %v873 = vld [vmem:[%s235 + $0x1318] sm:$0xff]
      %v874 = vld [vmem:[%s235 + $0x1320] sm:$0xff]
      %v875 = vld [vmem:[%s235 + $0x1328] sm:$0xff]
      %v876 = vld [vmem:[%s235 + $0x1330] sm:$0xff]
      %v877 = vld [vmem:[%s235 + $0x1338] sm:$0xff]
      %v878 = vld [vmem:[%s235 + $0x1340] sm:$0xff]
      %v879 = vld [vmem:[%s235 + $0x1348] sm:$0xff]
      %v880 = vld [vmem:[%s235 + $0x1350] sm:$0xff]
      %v881 = vld [vmem:[%s235 + $0x1358] sm:$0xff]
      %v882 = vld [vmem:[%s235 + $0x1360] sm:$0xff]
      %v883 = vld [vmem:[%s235 + $0x1368] sm:$0xff]
      %v884 = vld [vmem:[%s235 + $0x1370] sm:$0xff]
      %v885 = vld [vmem:[%s235 + $0x1378] sm:$0xff]
      %v886 = vld [vmem:[%s235 + $0x1380] sm:$0xff]
      %v887 = vld [vmem:[%s235 + $0x1388] sm:$0xff]
      %v888 = vld [vmem:[%s235 + $0x1390] sm:$0xff]
      %v889 = vld [vmem:[%s235 + $0x1398] sm:$0xff]
      %v890 = vld [vmem:[%s235 + $0x13a0] sm:$0xff]
      %v891 = vld [vmem:[%s235 + $0x13a8] sm:$0xff]
      %v892 = vld [vmem:[%s235 + $0x13b0] sm:$0xff]
      %v893 = vld [vmem:[%s235 + $0x13b8] sm:$0xff]
      %v894 = vld [vmem:[%s235 + $0x13c0] sm:$0xff]
      %v895 = vld [vmem:[%s235 + $0x13c8] sm:$0xff]
      %v896 = vld [vmem:[%s235 + $0x13d0] sm:$0xff]
      %v897 = vld [vmem:[%s235 + $0x13d8] sm:$0xff]
      %v898 = vld [vmem:[%s235 + $0x13e0] sm:$0xff]
      %v899 = vld [vmem:[%s235 + $0x13e8] sm:$0xff]
      %v900 = vld [vmem:[%s235 + $0x13f0] sm:$0xff]
      %v901 = vld [vmem:[%s235 + $0x13f8] sm:$0xff]
      %v902 = vld [vmem:[%s235 + $0x1400] sm:$0xff]
      %v903 = vld [vmem:[%s235 + $0x1408] sm:$0xff]
      %v904 = vld [vmem:[%s235 + $0x1410] sm:$0xff]
      %v905 = vld [vmem:[%s235 + $0x1418] sm:$0xff]
      %v906 = vld [vmem:[%s235 + $0x1420] sm:$0xff]
      %v907 = vld [vmem:[%s235 + $0x1428] sm:$0xff]
      %v908 = vld [vmem:[%s235 + $0x1430] sm:$0xff]
      %v909 = vld [vmem:[%s235 + $0x1438] sm:$0xff]
      %v910 = vld [vmem:[%s235 + $0x1440] sm:$0xff]
      %v911 = vld [vmem:[%s235 + $0x1448] sm:$0xff]
      %v912 = vld [vmem:[%s235 + $0x1450] sm:$0xff]
      %v913 = vld [vmem:[%s235 + $0x1458] sm:$0xff]
      %v914 = vld [vmem:[%s235 + $0x1460] sm:$0xff]
      %v915 = vld [vmem:[%s235 + $0x1468] sm:$0xff]
      %v916 = vld [vmem:[%s235 + $0x1470] sm:$0xff]
      %v917 = vld [vmem:[%s235 + $0x1478] sm:$0xff]
      %v918 = vld [vmem:[%s235 + $0x1480] sm:$0xff]
      %v919 = vld [vmem:[%s235 + $0x1488] sm:$0xff]
      %v920 = vld [vmem:[%s235 + $0x1490] sm:$0xff]
      %v921 = vld [vmem:[%s235 + $0x1498] sm:$0xff]
      %v922 = vld [vmem:[%s235 + $0x14a0] sm:$0xff]
      %v923 = vld [vmem:[%s235 + $0x14a8] sm:$0xff]
      %v924 = vld [vmem:[%s235 + $0x14b0] sm:$0xff]
      %v925 = vld [vmem:[%s235 + $0x14b8] sm:$0xff]
      %v926 = vld [vmem:[%s235 + $0x14c0] sm:$0xff]
      %v927 = vld [vmem:[%s235 + $0x14c8] sm:$0xff]
      %v928 = vld [vmem:[%s235 + $0x14d0] sm:$0xff]
      %v929 = vld [vmem:[%s235 + $0x14d8] sm:$0xff]
      %v930 = vld [vmem:[%s235 + $0x14e0] sm:$0xff]
      %v931 = vld [vmem:[%s235 + $0x14e8] sm:$0xff]
      %v932 = vld [vmem:[%s235 + $0x14f0] sm:$0xff]
      %v933 = vld [vmem:[%s235 + $0x14f8] sm:$0xff]
      %v934 = vld [vmem:[%s235 + $0x1500] sm:$0xff]
      %v935 = vld [vmem:[%s235 + $0x1508] sm:$0xff]
      %v936 = vld [vmem:[%s235 + $0x1510] sm:$0xff]
      %v937 = vld [vmem:[%s235 + $0x1518] sm:$0xff]
      %v938 = vld [vmem:[%s235 + $0x1520] sm:$0xff]
      %v939 = vld [vmem:[%s235 + $0x1528] sm:$0xff]
      %v940 = vld [vmem:[%s235 + $0x1530] sm:$0xff]
      %v941 = vld [vmem:[%s235 + $0x1538] sm:$0xff]
      %v942 = vld [vmem:[%s235 + $0x1540] sm:$0xff]
      %v943 = vld [vmem:[%s235 + $0x1548] sm:$0xff]
      %v944 = vld [vmem:[%s235 + $0x1550] sm:$0xff]
      %v945 = vld [vmem:[%s235 + $0x1558] sm:$0xff]
      %v946 = vld [vmem:[%s235 + $0x1560] sm:$0xff]
      %v947 = vld [vmem:[%s235 + $0x1568] sm:$0xff]
      %v948 = vld [vmem:[%s235 + $0x1570] sm:$0xff]
      %v949 = vld [vmem:[%s235 + $0x1578] sm:$0xff]
      %v950 = vld [vmem:[%s235 + $0x1580] sm:$0xff]
      %v951 = vld [vmem:[%s235 + $0x1588] sm:$0xff]
      %v952 = vld [vmem:[%s235 + $0x1590] sm:$0xff]
      %v953 = vld [vmem:[%s235 + $0x1598] sm:$0xff]
      %v954 = vld [vmem:[%s235 + $0x15a0] sm:$0xff]
      %v955 = vld [vmem:[%s235 + $0x15a8] sm:$0xff]
      %v956 = vld [vmem:[%s235 + $0x15b0] sm:$0xff]
      %v957 = vld [vmem:[%s235 + $0x15b8] sm:$0xff]
      %v958 = vld [vmem:[%s235 + $0x15c0] sm:$0xff]
      %v959 = vld [vmem:[%s235 + $0x15c8] sm:$0xff]
      %v960 = vld [vmem:[%s235 + $0x15d0] sm:$0xff]
      %v961 = vld [vmem:[%s235 + $0x15d8] sm:$0xff]
      %v962 = vld [vmem:[%s235 + $0x15e0] sm:$0xff]
      %v963 = vld [vmem:[%s235 + $0x15e8] sm:$0xff]
      %v964 = vld [vmem:[%s235 + $0x15f0] sm:$0xff]
      %v965 = vld [vmem:[%s235 + $0x15f8] sm:$0xff]
      %v966 = vld [vmem:[%s235 + $0x1600] sm:$0xff]
      %v967 = vld [vmem:[%s235 + $0x1608] sm:$0xff]
      %v968 = vld [vmem:[%s235 + $0x1610] sm:$0xff]
      %v969 = vld [vmem:[%s235 + $0x1618] sm:$0xff]
      %v970 = vld [vmem:[%s235 + $0x1620] sm:$0xff]
      %v971 = vld [vmem:[%s235 + $0x1628] sm:$0xff]
      %v972 = vld [vmem:[%s235 + $0x1630] sm:$0xff]
      %v973 = vld [vmem:[%s235 + $0x1638] sm:$0xff]
      %v974 = vld [vmem:[%s235 + $0x1640] sm:$0xff]
      %v975 = vld [vmem:[%s235 + $0x1648] sm:$0xff]
      %v976 = vld [vmem:[%s235 + $0x1650] sm:$0xff]
      %v977 = vld [vmem:[%s235 + $0x1658] sm:$0xff]
      %v978 = vld [vmem:[%s235 + $0x1660] sm:$0xff]
      %v979 = vld [vmem:[%s235 + $0x1668] sm:$0xff]
      %v980 = vld [vmem:[%s235 + $0x1670] sm:$0xff]
      %v981 = vld [vmem:[%s235 + $0x1678] sm:$0xff]
      %v982 = vld [vmem:[%s235 + $0x1680] sm:$0xff]
      %v983 = vld [vmem:[%s235 + $0x1688] sm:$0xff]
      %v984 = vld [vmem:[%s235 + $0x1690] sm:$0xff]
      %v985 = vld [vmem:[%s235 + $0x1698] sm:$0xff]
      %v986 = vld [vmem:[%s235 + $0x16a0] sm:$0xff]
      %v987 = vld [vmem:[%s235 + $0x16a8] sm:$0xff]
      %v988 = vld [vmem:[%s235 + $0x16b0] sm:$0xff]
      %v989 = vld [vmem:[%s235 + $0x16b8] sm:$0xff]
      %v990 = vld [vmem:[%s235 + $0x16c0] sm:$0xff]
      %v991 = vld [vmem:[%s235 + $0x16c8] sm:$0xff]
      %v992 = vld [vmem:[%s235 + $0x16d0] sm:$0xff]
      %v993 = vld [vmem:[%s235 + $0x16d8] sm:$0xff]
      %v994 = vld [vmem:[%s235 + $0x16e0] sm:$0xff]
      %v995 = vld [vmem:[%s235 + $0x16e8] sm:$0xff]
      %v996 = vld [vmem:[%s235 + $0x16f0] sm:$0xff]
      %v997 = vld [vmem:[%s235 + $0x16f8] sm:$0xff]
      %v998 = vld [vmem:[%s235 + $0x1700] sm:$0xff]
      %v999 = vld [vmem:[%s235 + $0x1708] sm:$0xff]
      %v1000 = vld [vmem:[%s235 + $0x1710] sm:$0xff]
      %v1001 = vld [vmem:[%s235 + $0x1718] sm:$0xff]
      %v1002 = vld [vmem:[%s235 + $0x1720] sm:$0xff]
      %v1003 = vld [vmem:[%s235 + $0x1728] sm:$0xff]
      %v1004 = vld [vmem:[%s235 + $0x1730] sm:$0xff]
      %v1005 = vld [vmem:[%s235 + $0x1738] sm:$0xff]
      %v1006 = vld [vmem:[%s235 + $0x1740] sm:$0xff]
      %v1007 = vld [vmem:[%s235 + $0x1748] sm:$0xff]
      %v1008 = vld [vmem:[%s235 + $0x1750] sm:$0xff]
      %v1009 = vld [vmem:[%s235 + $0x1758] sm:$0xff]
      %v1010 = vld [vmem:[%s235 + $0x1760] sm:$0xff]
      %v1011 = vld [vmem:[%s235 + $0x1768] sm:$0xff]
      %v1012 = vld [vmem:[%s235 + $0x1770] sm:$0xff]
      %v1013 = vld [vmem:[%s235 + $0x1778] sm:$0xff]
      %v1014 = vld [vmem:[%s235 + $0x1780] sm:$0xff]
      %v1015 = vld [vmem:[%s235 + $0x1788] sm:$0xff]
      %v1016 = vld [vmem:[%s235 + $0x1790] sm:$0xff]
      %v1017 = vld [vmem:[%s235 + $0x1798] sm:$0xff]
      %v1018 = vld [vmem:[%s235 + $0x17a0] sm:$0xff]
      %v1019 = vld [vmem:[%s235 + $0x17a8] sm:$0xff]
      %v1020 = vld [vmem:[%s235 + $0x17b0] sm:$0xff]
      %v1021 = vld [vmem:[%s235 + $0x17b8] sm:$0xff]
      %v1022 = vld [vmem:[%s235 + $0x17c0] sm:$0xff]
      %v1023 = vld [vmem:[%s235 + $0x17c8] sm:$0xff]
      %v1024 = vld [vmem:[%s235 + $0x17d0] sm:$0xff]
      %v1025 = vld [vmem:[%s235 + $0x17d8] sm:$0xff]
      %v1026 = vld [vmem:[%s235 + $0x17e0] sm:$0xff]
      %v1027 = vld [vmem:[%s235 + $0x17e8] sm:$0xff]
      %v1028 = vld [vmem:[%s235 + $0x17f0] sm:$0xff]
      %v1029 = vld [vmem:[%s235 + $0x17f8] sm:$0xff]
      %v1042 = vunpack.c.l.b16 %v250
      %v1043 = vunpack.c.h.b16 %v250
      %v1044 = vunpack.c.l.b16 %v251
      %v1045 = vunpack.c.h.b16 %v251
      %v1046 = vunpack.c.l.b16 %v252
      %v1047 = vunpack.c.h.b16 %v252
      %v1048 = vunpack.c.l.b16 %v253
      %v1049 = vunpack.c.h.b16 %v253
      %v1050 = vunpack.c.l.b16 %v254
      %v1051 = vunpack.c.h.b16 %v254
      %v1052 = vunpack.c.l.b16 %v255
      %v1053 = vunpack.c.h.b16 %v255
      %v1054 = vunpack.c.l.b16 %v256
      %v1055 = vunpack.c.h.b16 %v256
      %v1056 = vunpack.c.l.b16 %v257
      %v1057 = vunpack.c.h.b16 %v257
      %v1058 = vunpack.c.l.b16 %v258
      %v1059 = vunpack.c.h.b16 %v258
      %v1060 = vunpack.c.l.b16 %v259
      %v1061 = vunpack.c.h.b16 %v259
      %v1062 = vunpack.c.l.b16 %v260
      %v1063 = vunpack.c.h.b16 %v260
      %v1064 = vunpack.c.l.b16 %v261
      %v1065 = vunpack.c.h.b16 %v261
      %v1066 = vpack.c.b16 %v1042, %v1042
      %v1067 = vpack.c.b16 %v1043, %v1043
      %v1068 = vpack.c.b16 %v1044, %v1044
      %v1069 = vpack.c.b16 %v1045, %v1045
      %v1070 = vpack.c.b16 %v1046, %v1046
      %v1071 = vpack.c.b16 %v1047, %v1047
      %v1072 = vpack.c.b16 %v1048, %v1048
      %v1073 = vpack.c.b16 %v1049, %v1049
      %v1074 = vpack.c.b16 %v1050, %v1050
      %v1075 = vpack.c.b16 %v1051, %v1051
      %v1076 = vpack.c.b16 %v1052, %v1052
      %v1077 = vpack.c.b16 %v1053, %v1053
      %v1078 = vpack.c.b16 %v1054, %v1054
      %v1079 = vpack.c.b16 %v1055, %v1055
      %v1080 = vpack.c.b16 %v1056, %v1056
      %v1081 = vpack.c.b16 %v1057, %v1057
      %v1082 = vpack.c.b16 %v1058, %v1058
      %v1083 = vpack.c.b16 %v1059, %v1059
      %v1084 = vpack.c.b16 %v1060, %v1060
      %v1085 = vpack.c.b16 %v1061, %v1061
      %v1086 = vpack.c.b16 %v1062, %v1062
      %v1087 = vpack.c.b16 %v1063, %v1063
      %v1088 = vpack.c.b16 %v1064, %v1064
      %v1089 = vpack.c.b16 %v1065, %v1065
      %v1882 = vunpack.c.l.b16 %v262
      %v1883 = vunpack.c.h.b16 %v262
      %v1884 = vunpack.c.l.b16 %v263
      %v1885 = vunpack.c.h.b16 %v263
      %v1886 = vunpack.c.l.b16 %v264
      %v1887 = vunpack.c.h.b16 %v264
      %v1888 = vunpack.c.l.b16 %v265
      %v1889 = vunpack.c.h.b16 %v265
      %v1890 = vunpack.c.l.b16 %v266
      %v1891 = vunpack.c.h.b16 %v266
      %v1892 = vunpack.c.l.b16 %v267
      %v1893 = vunpack.c.h.b16 %v267
      %v1894 = vunpack.c.l.b16 %v268
      %v1895 = vunpack.c.h.b16 %v268
      %v1896 = vunpack.c.l.b16 %v269
      %v1897 = vunpack.c.h.b16 %v269
      %v1898 = vunpack.c.l.b16 %v270
      %v1899 = vunpack.c.h.b16 %v270
      %v1900 = vunpack.c.l.b16 %v271
      %v1901 = vunpack.c.h.b16 %v271
      %v1902 = vunpack.c.l.b16 %v272
      %v1903 = vunpack.c.h.b16 %v272
      %v1904 = vunpack.c.l.b16 %v273
      %v1905 = vunpack.c.h.b16 %v273
      %v1906 = vunpack.c.l.b16 %v274
      %v1907 = vunpack.c.h.b16 %v274
      %v1908 = vunpack.c.l.b16 %v275
      %v1909 = vunpack.c.h.b16 %v275
      %v1910 = vunpack.c.l.b16 %v276
      %v1911 = vunpack.c.h.b16 %v276
      %v1912 = vunpack.c.l.b16 %v277
      %v1913 = vunpack.c.h.b16 %v277
      %v1914 = vunpack.c.l.b16 %v278
      %v1915 = vunpack.c.h.b16 %v278
      %v1916 = vunpack.c.l.b16 %v279
      %v1917 = vunpack.c.h.b16 %v279
      %v1918 = vunpack.c.l.b16 %v280
      %v1919 = vunpack.c.h.b16 %v280
      %v1920 = vunpack.c.l.b16 %v281
      %v1921 = vunpack.c.h.b16 %v281
      %v1922 = vunpack.c.l.b16 %v282
      %v1923 = vunpack.c.h.b16 %v282
      %v1924 = vunpack.c.l.b16 %v283
      %v1925 = vunpack.c.h.b16 %v283
      %v1926 = vunpack.c.l.b16 %v284
      %v1927 = vunpack.c.h.b16 %v284
      %v1928 = vunpack.c.l.b16 %v285
      %v1929 = vunpack.c.h.b16 %v285
      %v1930 = vunpack.c.l.b16 %v286
      %v1931 = vunpack.c.h.b16 %v286
      %v1932 = vunpack.c.l.b16 %v287
      %v1933 = vunpack.c.h.b16 %v287
      %v1934 = vunpack.c.l.b16 %v288
      %v1935 = vunpack.c.h.b16 %v288
      %v1936 = vunpack.c.l.b16 %v289
      %v1937 = vunpack.c.h.b16 %v289
      %v1938 = vunpack.c.l.b16 %v290
      %v1939 = vunpack.c.h.b16 %v290
      %v1940 = vunpack.c.l.b16 %v291
      %v1941 = vunpack.c.h.b16 %v291
      %v1942 = vunpack.c.l.b16 %v292
      %v1943 = vunpack.c.h.b16 %v292
      %v1944 = vunpack.c.l.b16 %v293
      %v1945 = vunpack.c.h.b16 %v293
      %v1946 = vunpack.c.l.b16 %v294
      %v1947 = vunpack.c.h.b16 %v294
      %v1948 = vunpack.c.l.b16 %v295
      %v1949 = vunpack.c.h.b16 %v295
      %v1950 = vunpack.c.l.b16 %v296
      %v1951 = vunpack.c.h.b16 %v296
      %v1952 = vunpack.c.l.b16 %v297
      %v1953 = vunpack.c.h.b16 %v297
      %v1954 = vunpack.c.l.b16 %v298
      %v1955 = vunpack.c.h.b16 %v298
      %v1956 = vunpack.c.l.b16 %v299
      %v1957 = vunpack.c.h.b16 %v299
      %v1958 = vunpack.c.l.b16 %v300
      %v1959 = vunpack.c.h.b16 %v300
      %v1960 = vunpack.c.l.b16 %v301
      %v1961 = vunpack.c.h.b16 %v301
      %v1962 = vunpack.c.l.b16 %v302
      %v1963 = vunpack.c.h.b16 %v302
      %v1964 = vunpack.c.l.b16 %v303
      %v1965 = vunpack.c.h.b16 %v303
      %v1966 = vunpack.c.l.b16 %v304
      %v1967 = vunpack.c.h.b16 %v304
      %v1968 = vunpack.c.l.b16 %v305
      %v1969 = vunpack.c.h.b16 %v305
      %v1970 = vunpack.c.l.b16 %v306
      %v1971 = vunpack.c.h.b16 %v306
      %v1972 = vunpack.c.l.b16 %v307
      %v1973 = vunpack.c.h.b16 %v307
      %v1974 = vunpack.c.l.b16 %v308
      %v1975 = vunpack.c.h.b16 %v308
      %v1976 = vunpack.c.l.b16 %v309
      %v1977 = vunpack.c.h.b16 %v309
      %v1978 = vunpack.c.l.b16 %v310
      %v1979 = vunpack.c.h.b16 %v310
      %v1980 = vunpack.c.l.b16 %v311
      %v1981 = vunpack.c.h.b16 %v311
      %v1982 = vunpack.c.l.b16 %v312
      %v1983 = vunpack.c.h.b16 %v312
      %v1984 = vunpack.c.l.b16 %v313
      %v1985 = vunpack.c.h.b16 %v313
      %v1986 = vunpack.c.l.b16 %v314
      %v1987 = vunpack.c.h.b16 %v314
      %v1988 = vunpack.c.l.b16 %v315
      %v1989 = vunpack.c.h.b16 %v315
      %v1990 = vunpack.c.l.b16 %v316
      %v1991 = vunpack.c.h.b16 %v316
      %v1992 = vunpack.c.l.b16 %v317
      %v1993 = vunpack.c.h.b16 %v317
      %v1994 = vunpack.c.l.b16 %v318
      %v1995 = vunpack.c.h.b16 %v318
      %v1996 = vunpack.c.l.b16 %v319
      %v1997 = vunpack.c.h.b16 %v319
      %v1998 = vunpack.c.l.b16 %v320
      %v1999 = vunpack.c.h.b16 %v320
      %v2000 = vunpack.c.l.b16 %v321
      %v2001 = vunpack.c.h.b16 %v321
      %v2002 = vunpack.c.l.b16 %v322
      %v2003 = vunpack.c.h.b16 %v322
      %v2004 = vunpack.c.l.b16 %v323
      %v2005 = vunpack.c.h.b16 %v323
      %v2006 = vunpack.c.l.b16 %v324
      %v2007 = vunpack.c.h.b16 %v324
      %v2008 = vunpack.c.l.b16 %v325
      %v2009 = vunpack.c.h.b16 %v325
      %v2010 = vunpack.c.l.b16 %v326
      %v2011 = vunpack.c.h.b16 %v326
      %v2012 = vunpack.c.l.b16 %v327
      %v2013 = vunpack.c.h.b16 %v327
      %v2014 = vunpack.c.l.b16 %v328
      %v2015 = vunpack.c.h.b16 %v328
      %v2016 = vunpack.c.l.b16 %v329
      %v2017 = vunpack.c.h.b16 %v329
      %v2018 = vunpack.c.l.b16 %v330
      %v2019 = vunpack.c.h.b16 %v330
      %v2020 = vunpack.c.l.b16 %v331
      %v2021 = vunpack.c.h.b16 %v331
      %v2022 = vunpack.c.l.b16 %v332
      %v2023 = vunpack.c.h.b16 %v332
      %v2024 = vunpack.c.l.b16 %v333
      %v2025 = vunpack.c.h.b16 %v333
      %v2026 = vunpack.c.l.b16 %v334
      %v2027 = vunpack.c.h.b16 %v334
      %v2028 = vunpack.c.l.b16 %v335
      %v2029 = vunpack.c.h.b16 %v335
      %v2030 = vunpack.c.l.b16 %v336
      %v2031 = vunpack.c.h.b16 %v336
      %v2032 = vunpack.c.l.b16 %v337
      %v2033 = vunpack.c.h.b16 %v337
      %v2034 = vunpack.c.l.b16 %v338
      %v2035 = vunpack.c.h.b16 %v338
      %v2036 = vunpack.c.l.b16 %v339
      %v2037 = vunpack.c.h.b16 %v339
      %v2038 = vunpack.c.l.b16 %v340
      %v2039 = vunpack.c.h.b16 %v340
      %v2040 = vunpack.c.l.b16 %v341
      %v2041 = vunpack.c.h.b16 %v341
      %v2042 = vunpack.c.l.b16 %v342
      %v2043 = vunpack.c.h.b16 %v342
      %v2044 = vunpack.c.l.b16 %v343
      %v2045 = vunpack.c.h.b16 %v343
      %v2046 = vunpack.c.l.b16 %v344
      %v2047 = vunpack.c.h.b16 %v344
      %v2048 = vunpack.c.l.b16 %v345
      %v2049 = vunpack.c.h.b16 %v345
      %v2050 = vunpack.c.l.b16 %v346
      %v2051 = vunpack.c.h.b16 %v346
      %v2052 = vunpack.c.l.b16 %v347
      %v2053 = vunpack.c.h.b16 %v347
      %v2054 = vunpack.c.l.b16 %v348
      %v2055 = vunpack.c.h.b16 %v348
      %v2056 = vunpack.c.l.b16 %v349
      %v2057 = vunpack.c.h.b16 %v349
      %v2058 = vunpack.c.l.b16 %v350
      %v2059 = vunpack.c.h.b16 %v350
      %v2060 = vunpack.c.l.b16 %v351
      %v2061 = vunpack.c.h.b16 %v351
      %v2062 = vunpack.c.l.b16 %v352
      %v2063 = vunpack.c.h.b16 %v352
      %v2064 = vunpack.c.l.b16 %v353
      %v2065 = vunpack.c.h.b16 %v353
      %v2066 = vunpack.c.l.b16 %v354
      %v2067 = vunpack.c.h.b16 %v354
      %v2068 = vunpack.c.l.b16 %v355
      %v2069 = vunpack.c.h.b16 %v355
      %v2070 = vunpack.c.l.b16 %v356
      %v2071 = vunpack.c.h.b16 %v356
      %v2072 = vunpack.c.l.b16 %v357
      %v2073 = vunpack.c.h.b16 %v357
      %v2074 = vunpack.c.l.b16 %v358
      %v2075 = vunpack.c.h.b16 %v358
      %v2076 = vunpack.c.l.b16 %v359
      %v2077 = vunpack.c.h.b16 %v359
      %v2078 = vunpack.c.l.b16 %v360
      %v2079 = vunpack.c.h.b16 %v360
      %v2080 = vunpack.c.l.b16 %v361
      %v2081 = vunpack.c.h.b16 %v361
      %v2082 = vunpack.c.l.b16 %v362
      %v2083 = vunpack.c.h.b16 %v362
      %v2084 = vunpack.c.l.b16 %v363
      %v2085 = vunpack.c.h.b16 %v363
      %v2086 = vunpack.c.l.b16 %v364
      %v2087 = vunpack.c.h.b16 %v364
      %v2088 = vunpack.c.l.b16 %v365
      %v2089 = vunpack.c.h.b16 %v365
      %v2090 = vunpack.c.l.b16 %v366
      %v2091 = vunpack.c.h.b16 %v366
      %v2092 = vunpack.c.l.b16 %v367
      %v2093 = vunpack.c.h.b16 %v367
      %v2094 = vunpack.c.l.b16 %v368
      %v2095 = vunpack.c.h.b16 %v368
      %v2096 = vunpack.c.l.b16 %v369
      %v2097 = vunpack.c.h.b16 %v369
      %v2098 = vunpack.c.l.b16 %v370
      %v2099 = vunpack.c.h.b16 %v370
      %v2100 = vunpack.c.l.b16 %v371
      %v2101 = vunpack.c.h.b16 %v371
      %v2102 = vunpack.c.l.b16 %v372
      %v2103 = vunpack.c.h.b16 %v372
      %v2104 = vunpack.c.l.b16 %v373
      %v2105 = vunpack.c.h.b16 %v373
      %v2106 = vunpack.c.l.b16 %v374
      %v2107 = vunpack.c.h.b16 %v374
      %v2108 = vunpack.c.l.b16 %v375
      %v2109 = vunpack.c.h.b16 %v375
      %v2110 = vunpack.c.l.b16 %v376
      %v2111 = vunpack.c.h.b16 %v376
      %v2112 = vunpack.c.l.b16 %v377
      %v2113 = vunpack.c.h.b16 %v377
      %v2114 = vunpack.c.l.b16 %v378
      %v2115 = vunpack.c.h.b16 %v378
      %v2116 = vunpack.c.l.b16 %v379
      %v2117 = vunpack.c.h.b16 %v379
      %v2118 = vunpack.c.l.b16 %v380
      %v2119 = vunpack.c.h.b16 %v380
      %v2120 = vunpack.c.l.b16 %v381
      %v2121 = vunpack.c.h.b16 %v381
      %v2122 = vunpack.c.l.b16 %v382
      %v2123 = vunpack.c.h.b16 %v382
      %v2124 = vunpack.c.l.b16 %v383
      %v2125 = vunpack.c.h.b16 %v383
      %v2126 = vunpack.c.l.b16 %v384
      %v2127 = vunpack.c.h.b16 %v384
      %v2128 = vunpack.c.l.b16 %v385
      %v2129 = vunpack.c.h.b16 %v385
      %v2130 = vunpack.c.l.b16 %v386
      %v2131 = vunpack.c.h.b16 %v386
      %v2132 = vunpack.c.l.b16 %v387
      %v2133 = vunpack.c.h.b16 %v387
      %v2134 = vunpack.c.l.b16 %v388
      %v2135 = vunpack.c.h.b16 %v388
      %v2136 = vunpack.c.l.b16 %v389
      %v2137 = vunpack.c.h.b16 %v389
      %v2138 = vunpack.c.l.b16 %v390
      %v2139 = vunpack.c.h.b16 %v390
      %v2140 = vunpack.c.l.b16 %v391
      %v2141 = vunpack.c.h.b16 %v391
      %v2142 = vunpack.c.l.b16 %v392
      %v2143 = vunpack.c.h.b16 %v392
      %v2144 = vunpack.c.l.b16 %v393
      %v2145 = vunpack.c.h.b16 %v393
      %v2146 = vunpack.c.l.b16 %v394
      %v2147 = vunpack.c.h.b16 %v394
      %v2148 = vunpack.c.l.b16 %v395
      %v2149 = vunpack.c.h.b16 %v395
      %v2150 = vunpack.c.l.b16 %v396
      %v2151 = vunpack.c.h.b16 %v396
      %v2152 = vunpack.c.l.b16 %v397
      %v2153 = vunpack.c.h.b16 %v397
      %v2154 = vunpack.c.l.b16 %v398
      %v2155 = vunpack.c.h.b16 %v398
      %v2156 = vunpack.c.l.b16 %v399
      %v2157 = vunpack.c.h.b16 %v399
      %v2158 = vunpack.c.l.b16 %v400
      %v2159 = vunpack.c.h.b16 %v400
      %v2160 = vunpack.c.l.b16 %v401
      %v2161 = vunpack.c.h.b16 %v401
      %v2162 = vunpack.c.l.b16 %v402
      %v2163 = vunpack.c.h.b16 %v402
      %v2164 = vunpack.c.l.b16 %v403
      %v2165 = vunpack.c.h.b16 %v403
      %v2166 = vunpack.c.l.b16 %v404
      %v2167 = vunpack.c.h.b16 %v404
      %v2168 = vunpack.c.l.b16 %v405
      %v2169 = vunpack.c.h.b16 %v405
      %v2170 = vunpack.c.l.b16 %v406
      %v2171 = vunpack.c.h.b16 %v406
      %v2172 = vunpack.c.l.b16 %v407
      %v2173 = vunpack.c.h.b16 %v407
      %v2174 = vunpack.c.l.b16 %v408
      %v2175 = vunpack.c.h.b16 %v408
      %v2176 = vunpack.c.l.b16 %v409
      %v2177 = vunpack.c.h.b16 %v409
      %v2178 = vunpack.c.l.b16 %v410
      %v2179 = vunpack.c.h.b16 %v410
      %v2180 = vunpack.c.l.b16 %v411
      %v2181 = vunpack.c.h.b16 %v411
      %v2182 = vunpack.c.l.b16 %v412
      %v2183 = vunpack.c.h.b16 %v412
      %v2184 = vunpack.c.l.b16 %v413
      %v2185 = vunpack.c.h.b16 %v413
      %v2186 = vunpack.c.l.b16 %v414
      %v2187 = vunpack.c.h.b16 %v414
      %v2188 = vunpack.c.l.b16 %v415
      %v2189 = vunpack.c.h.b16 %v415
      %v2190 = vunpack.c.l.b16 %v416
      %v2191 = vunpack.c.h.b16 %v416
      %v2192 = vunpack.c.l.b16 %v417
      %v2193 = vunpack.c.h.b16 %v417
      %v2194 = vunpack.c.l.b16 %v418
      %v2195 = vunpack.c.h.b16 %v418
      %v2196 = vunpack.c.l.b16 %v419
      %v2197 = vunpack.c.h.b16 %v419
      %v2198 = vunpack.c.l.b16 %v420
      %v2199 = vunpack.c.h.b16 %v420
      %v2200 = vunpack.c.l.b16 %v421
      %v2201 = vunpack.c.h.b16 %v421
      %v2202 = vunpack.c.l.b16 %v422
      %v2203 = vunpack.c.h.b16 %v422
      %v2204 = vunpack.c.l.b16 %v423
      %v2205 = vunpack.c.h.b16 %v423
      %v2206 = vunpack.c.l.b16 %v424
      %v2207 = vunpack.c.h.b16 %v424
      %v2208 = vunpack.c.l.b16 %v425
      %v2209 = vunpack.c.h.b16 %v425
      %v2210 = vunpack.c.l.b16 %v426
      %v2211 = vunpack.c.h.b16 %v426
      %v2212 = vunpack.c.l.b16 %v427
      %v2213 = vunpack.c.h.b16 %v427
      %v2214 = vunpack.c.l.b16 %v428
      %v2215 = vunpack.c.h.b16 %v428
      %v2216 = vunpack.c.l.b16 %v429
      %v2217 = vunpack.c.h.b16 %v429
      %v2218 = vunpack.c.l.b16 %v430
      %v2219 = vunpack.c.h.b16 %v430
      %v2220 = vunpack.c.l.b16 %v431
      %v2221 = vunpack.c.h.b16 %v431
      %v2222 = vunpack.c.l.b16 %v432
      %v2223 = vunpack.c.h.b16 %v432
      %v2224 = vunpack.c.l.b16 %v433
      %v2225 = vunpack.c.h.b16 %v433
      %v2226 = vunpack.c.l.b16 %v434
      %v2227 = vunpack.c.h.b16 %v434
      %v2228 = vunpack.c.l.b16 %v435
      %v2229 = vunpack.c.h.b16 %v435
      %v2230 = vunpack.c.l.b16 %v436
      %v2231 = vunpack.c.h.b16 %v436
      %v2232 = vunpack.c.l.b16 %v437
      %v2233 = vunpack.c.h.b16 %v437
      %v2234 = vunpack.c.l.b16 %v438
      %v2235 = vunpack.c.h.b16 %v438
      %v2236 = vunpack.c.l.b16 %v439
      %v2237 = vunpack.c.h.b16 %v439
      %v2238 = vunpack.c.l.b16 %v440
      %v2239 = vunpack.c.h.b16 %v440
      %v2240 = vunpack.c.l.b16 %v441
      %v2241 = vunpack.c.h.b16 %v441
      %v2242 = vunpack.c.l.b16 %v442
      %v2243 = vunpack.c.h.b16 %v442
      %v2244 = vunpack.c.l.b16 %v443
      %v2245 = vunpack.c.h.b16 %v443
      %v2246 = vunpack.c.l.b16 %v444
      %v2247 = vunpack.c.h.b16 %v444
      %v2248 = vunpack.c.l.b16 %v445
      %v2249 = vunpack.c.h.b16 %v445
      %v2250 = vunpack.c.l.b16 %v446
      %v2251 = vunpack.c.h.b16 %v446
      %v2252 = vunpack.c.l.b16 %v447
      %v2253 = vunpack.c.h.b16 %v447
      %v2254 = vunpack.c.l.b16 %v448
      %v2255 = vunpack.c.h.b16 %v448
      %v2256 = vunpack.c.l.b16 %v449
      %v2257 = vunpack.c.h.b16 %v449
      %v2258 = vunpack.c.l.b16 %v450
      %v2259 = vunpack.c.h.b16 %v450
      %v2260 = vunpack.c.l.b16 %v451
      %v2261 = vunpack.c.h.b16 %v451
      %v2262 = vunpack.c.l.b16 %v452
      %v2263 = vunpack.c.h.b16 %v452
      %v2264 = vunpack.c.l.b16 %v453
      %v2265 = vunpack.c.h.b16 %v453
      %v2266 = vunpack.c.l.b16 %v454
      %v2267 = vunpack.c.h.b16 %v454
      %v2268 = vunpack.c.l.b16 %v455
      %v2269 = vunpack.c.h.b16 %v455
      %v2270 = vunpack.c.l.b16 %v456
      %v2271 = vunpack.c.h.b16 %v456
      %v2272 = vunpack.c.l.b16 %v457
      %v2273 = vunpack.c.h.b16 %v457
      %v2274 = vunpack.c.l.b16 %v458
      %v2275 = vunpack.c.h.b16 %v458
      %v2276 = vunpack.c.l.b16 %v459
      %v2277 = vunpack.c.h.b16 %v459
      %v2278 = vunpack.c.l.b16 %v460
      %v2279 = vunpack.c.h.b16 %v460
      %v2280 = vunpack.c.l.b16 %v461
      %v2281 = vunpack.c.h.b16 %v461
      %v2282 = vunpack.c.l.b16 %v462
      %v2283 = vunpack.c.h.b16 %v462
      %v2284 = vunpack.c.l.b16 %v463
      %v2285 = vunpack.c.h.b16 %v463
      %v2286 = vunpack.c.l.b16 %v464
      %v2287 = vunpack.c.h.b16 %v464
      %v2288 = vunpack.c.l.b16 %v465
      %v2289 = vunpack.c.h.b16 %v465
      %v2290 = vunpack.c.l.b16 %v466
      %v2291 = vunpack.c.h.b16 %v466
      %v2292 = vunpack.c.l.b16 %v467
      %v2293 = vunpack.c.h.b16 %v467
      %v2294 = vunpack.c.l.b16 %v468
      %v2295 = vunpack.c.h.b16 %v468
      %v2296 = vunpack.c.l.b16 %v469
      %v2297 = vunpack.c.h.b16 %v469
      %v2298 = vunpack.c.l.b16 %v470
      %v2299 = vunpack.c.h.b16 %v470
      %v2300 = vunpack.c.l.b16 %v471
      %v2301 = vunpack.c.h.b16 %v471
      %v2302 = vunpack.c.l.b16 %v472
      %v2303 = vunpack.c.h.b16 %v472
      %v2304 = vunpack.c.l.b16 %v473
      %v2305 = vunpack.c.h.b16 %v473
      %v2306 = vunpack.c.l.b16 %v474
      %v2307 = vunpack.c.h.b16 %v474
      %v2308 = vunpack.c.l.b16 %v475
      %v2309 = vunpack.c.h.b16 %v475
      %v2310 = vunpack.c.l.b16 %v476
      %v2311 = vunpack.c.h.b16 %v476
      %v2312 = vunpack.c.l.b16 %v477
      %v2313 = vunpack.c.h.b16 %v477
      %v2314 = vunpack.c.l.b16 %v478
      %v2315 = vunpack.c.h.b16 %v478
      %v2316 = vunpack.c.l.b16 %v479
      %v2317 = vunpack.c.h.b16 %v479
      %v2318 = vunpack.c.l.b16 %v480
      %v2319 = vunpack.c.h.b16 %v480
      %v2320 = vunpack.c.l.b16 %v481
      %v2321 = vunpack.c.h.b16 %v481
      %v2322 = vunpack.c.l.b16 %v482
      %v2323 = vunpack.c.h.b16 %v482
      %v2324 = vunpack.c.l.b16 %v483
      %v2325 = vunpack.c.h.b16 %v483
      %v2326 = vunpack.c.l.b16 %v484
      %v2327 = vunpack.c.h.b16 %v484
      %v2328 = vunpack.c.l.b16 %v485
      %v2329 = vunpack.c.h.b16 %v485
      %v2330 = vunpack.c.l.b16 %v486
      %v2331 = vunpack.c.h.b16 %v486
      %v2332 = vunpack.c.l.b16 %v487
      %v2333 = vunpack.c.h.b16 %v487
      %v2334 = vunpack.c.l.b16 %v488
      %v2335 = vunpack.c.h.b16 %v488
      %v2336 = vunpack.c.l.b16 %v489
      %v2337 = vunpack.c.h.b16 %v489
      %v2338 = vunpack.c.l.b16 %v490
      %v2339 = vunpack.c.h.b16 %v490
      %v2340 = vunpack.c.l.b16 %v491
      %v2341 = vunpack.c.h.b16 %v491
      %v2342 = vunpack.c.l.b16 %v492
      %v2343 = vunpack.c.h.b16 %v492
      %v2344 = vunpack.c.l.b16 %v493
      %v2345 = vunpack.c.h.b16 %v493
      %v2346 = vunpack.c.l.b16 %v494
      %v2347 = vunpack.c.h.b16 %v494
      %v2348 = vunpack.c.l.b16 %v495
      %v2349 = vunpack.c.h.b16 %v495
      %v2350 = vunpack.c.l.b16 %v496
      %v2351 = vunpack.c.h.b16 %v496
      %v2352 = vunpack.c.l.b16 %v497
      %v2353 = vunpack.c.h.b16 %v497
      %v2354 = vunpack.c.l.b16 %v498
      %v2355 = vunpack.c.h.b16 %v498
      %v2356 = vunpack.c.l.b16 %v499
      %v2357 = vunpack.c.h.b16 %v499
      %v2358 = vunpack.c.l.b16 %v500
      %v2359 = vunpack.c.h.b16 %v500
      %v2360 = vunpack.c.l.b16 %v501
      %v2361 = vunpack.c.h.b16 %v501
      %v2362 = vunpack.c.l.b16 %v502
      %v2363 = vunpack.c.h.b16 %v502
      %v2364 = vunpack.c.l.b16 %v503
      %v2365 = vunpack.c.h.b16 %v503
      %v2366 = vunpack.c.l.b16 %v504
      %v2367 = vunpack.c.h.b16 %v504
      %v2368 = vunpack.c.l.b16 %v505
      %v2369 = vunpack.c.h.b16 %v505
      %v2370 = vunpack.c.l.b16 %v506
      %v2371 = vunpack.c.h.b16 %v506
      %v2372 = vunpack.c.l.b16 %v507
      %v2373 = vunpack.c.h.b16 %v507
      %v2374 = vunpack.c.l.b16 %v508
      %v2375 = vunpack.c.h.b16 %v508
      %v2376 = vunpack.c.l.b16 %v509
      %v2377 = vunpack.c.h.b16 %v509
      %v2378 = vunpack.c.l.b16 %v510
      %v2379 = vunpack.c.h.b16 %v510
      %v2380 = vunpack.c.l.b16 %v511
      %v2381 = vunpack.c.h.b16 %v511
      %v2382 = vunpack.c.l.b16 %v512
      %v2383 = vunpack.c.h.b16 %v512
      %v2384 = vunpack.c.l.b16 %v513
      %v2385 = vunpack.c.h.b16 %v513
      %v2386 = vunpack.c.l.b16 %v514
      %v2387 = vunpack.c.h.b16 %v514
      %v2388 = vunpack.c.l.b16 %v515
      %v2389 = vunpack.c.h.b16 %v515
      %v2390 = vunpack.c.l.b16 %v516
      %v2391 = vunpack.c.h.b16 %v516
      %v2392 = vunpack.c.l.b16 %v517
      %v2393 = vunpack.c.h.b16 %v517
      %v2394 = vunpack.c.l.b16 %v518
      %v2395 = vunpack.c.h.b16 %v518
      %v2396 = vunpack.c.l.b16 %v519
      %v2397 = vunpack.c.h.b16 %v519
      %v2398 = vunpack.c.l.b16 %v520
      %v2399 = vunpack.c.h.b16 %v520
      %v2400 = vunpack.c.l.b16 %v521
      %v2401 = vunpack.c.h.b16 %v521
      %v2402 = vunpack.c.l.b16 %v522
      %v2403 = vunpack.c.h.b16 %v522
      %v2404 = vunpack.c.l.b16 %v523
      %v2405 = vunpack.c.h.b16 %v523
      %v2406 = vunpack.c.l.b16 %v524
      %v2407 = vunpack.c.h.b16 %v524
      %v2408 = vunpack.c.l.b16 %v525
      %v2409 = vunpack.c.h.b16 %v525
      %v2410 = vunpack.c.l.b16 %v526
      %v2411 = vunpack.c.h.b16 %v526
      %v2412 = vunpack.c.l.b16 %v527
      %v2413 = vunpack.c.h.b16 %v527
      %v2414 = vunpack.c.l.b16 %v528
      %v2415 = vunpack.c.h.b16 %v528
      %v2416 = vunpack.c.l.b16 %v529
      %v2417 = vunpack.c.h.b16 %v529
      %v2418 = vunpack.c.l.b16 %v530
      %v2419 = vunpack.c.h.b16 %v530
      %v2420 = vunpack.c.l.b16 %v531
      %v2421 = vunpack.c.h.b16 %v531
      %v2422 = vunpack.c.l.b16 %v532
      %v2423 = vunpack.c.h.b16 %v532
      %v2424 = vunpack.c.l.b16 %v533
      %v2425 = vunpack.c.h.b16 %v533
      %v2426 = vunpack.c.l.b16 %v534
      %v2427 = vunpack.c.h.b16 %v534
      %v2428 = vunpack.c.l.b16 %v535
      %v2429 = vunpack.c.h.b16 %v535
      %v2430 = vunpack.c.l.b16 %v536
      %v2431 = vunpack.c.h.b16 %v536
      %v2432 = vunpack.c.l.b16 %v537
      %v2433 = vunpack.c.h.b16 %v537
      %v2434 = vunpack.c.l.b16 %v538
      %v2435 = vunpack.c.h.b16 %v538
      %v2436 = vunpack.c.l.b16 %v539
      %v2437 = vunpack.c.h.b16 %v539
      %v2438 = vunpack.c.l.b16 %v540
      %v2439 = vunpack.c.h.b16 %v540
      %v2440 = vunpack.c.l.b16 %v541
      %v2441 = vunpack.c.h.b16 %v541
      %v2442 = vunpack.c.l.b16 %v542
      %v2443 = vunpack.c.h.b16 %v542
      %v2444 = vunpack.c.l.b16 %v543
      %v2445 = vunpack.c.h.b16 %v543
      %v2446 = vunpack.c.l.b16 %v544
      %v2447 = vunpack.c.h.b16 %v544
      %v2448 = vunpack.c.l.b16 %v545
      %v2449 = vunpack.c.h.b16 %v545
      %v2450 = vunpack.c.l.b16 %v546
      %v2451 = vunpack.c.h.b16 %v546
      %v2452 = vunpack.c.l.b16 %v547
      %v2453 = vunpack.c.h.b16 %v547
      %v2454 = vunpack.c.l.b16 %v548
      %v2455 = vunpack.c.h.b16 %v548
      %v2456 = vunpack.c.l.b16 %v549
      %v2457 = vunpack.c.h.b16 %v549
      %v2458 = vunpack.c.l.b16 %v550
      %v2459 = vunpack.c.h.b16 %v550
      %v2460 = vunpack.c.l.b16 %v551
      %v2461 = vunpack.c.h.b16 %v551
      %v2462 = vunpack.c.l.b16 %v552
      %v2463 = vunpack.c.h.b16 %v552
      %v2464 = vunpack.c.l.b16 %v553
      %v2465 = vunpack.c.h.b16 %v553
      %v2466 = vunpack.c.l.b16 %v554
      %v2467 = vunpack.c.h.b16 %v554
      %v2468 = vunpack.c.l.b16 %v555
      %v2469 = vunpack.c.h.b16 %v555
      %v2470 = vunpack.c.l.b16 %v556
      %v2471 = vunpack.c.h.b16 %v556
      %v2472 = vunpack.c.l.b16 %v557
      %v2473 = vunpack.c.h.b16 %v557
      %v2474 = vunpack.c.l.b16 %v558
      %v2475 = vunpack.c.h.b16 %v558
      %v2476 = vunpack.c.l.b16 %v559
      %v2477 = vunpack.c.h.b16 %v559
      %v2478 = vunpack.c.l.b16 %v560
      %v2479 = vunpack.c.h.b16 %v560
      %v2480 = vunpack.c.l.b16 %v561
      %v2481 = vunpack.c.h.b16 %v561
      %v2482 = vunpack.c.l.b16 %v562
      %v2483 = vunpack.c.h.b16 %v562
      %v2484 = vunpack.c.l.b16 %v563
      %v2485 = vunpack.c.h.b16 %v563
      %v2486 = vunpack.c.l.b16 %v564
      %v2487 = vunpack.c.h.b16 %v564
      %v2488 = vunpack.c.l.b16 %v565
      %v2489 = vunpack.c.h.b16 %v565
      %v2490 = vunpack.c.l.b16 %v566
      %v2491 = vunpack.c.h.b16 %v566
      %v2492 = vunpack.c.l.b16 %v567
      %v2493 = vunpack.c.h.b16 %v567
      %v2494 = vunpack.c.l.b16 %v568
      %v2495 = vunpack.c.h.b16 %v568
      %v2496 = vunpack.c.l.b16 %v569
      %v2497 = vunpack.c.h.b16 %v569
      %v2498 = vunpack.c.l.b16 %v570
      %v2499 = vunpack.c.h.b16 %v570
      %v2500 = vunpack.c.l.b16 %v571
      %v2501 = vunpack.c.h.b16 %v571
      %v2502 = vunpack.c.l.b16 %v572
      %v2503 = vunpack.c.h.b16 %v572
      %v2504 = vunpack.c.l.b16 %v573
      %v2505 = vunpack.c.h.b16 %v573
      %v2506 = vunpack.c.l.b16 %v574
      %v2507 = vunpack.c.h.b16 %v574
      %v2508 = vunpack.c.l.b16 %v575
      %v2509 = vunpack.c.h.b16 %v575
      %v2510 = vunpack.c.l.b16 %v576
      %v2511 = vunpack.c.h.b16 %v576
      %v2512 = vunpack.c.l.b16 %v577
      %v2513 = vunpack.c.h.b16 %v577
      %v2514 = vunpack.c.l.b16 %v578
      %v2515 = vunpack.c.h.b16 %v578
      %v2516 = vunpack.c.l.b16 %v579
      %v2517 = vunpack.c.h.b16 %v579
      %v2518 = vunpack.c.l.b16 %v580
      %v2519 = vunpack.c.h.b16 %v580
      %v2520 = vunpack.c.l.b16 %v581
      %v2521 = vunpack.c.h.b16 %v581
      %v2522 = vunpack.c.l.b16 %v582
      %v2523 = vunpack.c.h.b16 %v582
      %v2524 = vunpack.c.l.b16 %v583
      %v2525 = vunpack.c.h.b16 %v583
      %v2526 = vunpack.c.l.b16 %v584
      %v2527 = vunpack.c.h.b16 %v584
      %v2528 = vunpack.c.l.b16 %v585
      %v2529 = vunpack.c.h.b16 %v585
      %v2530 = vunpack.c.l.b16 %v586
      %v2531 = vunpack.c.h.b16 %v586
      %v2532 = vunpack.c.l.b16 %v587
      %v2533 = vunpack.c.h.b16 %v587
      %v2534 = vunpack.c.l.b16 %v588
      %v2535 = vunpack.c.h.b16 %v588
      %v2536 = vunpack.c.l.b16 %v589
      %v2537 = vunpack.c.h.b16 %v589
      %v2538 = vunpack.c.l.b16 %v590
      %v2539 = vunpack.c.h.b16 %v590
      %v2540 = vunpack.c.l.b16 %v591
      %v2541 = vunpack.c.h.b16 %v591
      %v2542 = vunpack.c.l.b16 %v592
      %v2543 = vunpack.c.h.b16 %v592
      %v2544 = vunpack.c.l.b16 %v593
      %v2545 = vunpack.c.h.b16 %v593
      %v2546 = vunpack.c.l.b16 %v594
      %v2547 = vunpack.c.h.b16 %v594
      %v2548 = vunpack.c.l.b16 %v595
      %v2549 = vunpack.c.h.b16 %v595
      %v2550 = vunpack.c.l.b16 %v596
      %v2551 = vunpack.c.h.b16 %v596
      %v2552 = vunpack.c.l.b16 %v597
      %v2553 = vunpack.c.h.b16 %v597
      %v2554 = vunpack.c.l.b16 %v598
      %v2555 = vunpack.c.h.b16 %v598
      %v2556 = vunpack.c.l.b16 %v599
      %v2557 = vunpack.c.h.b16 %v599
      %v2558 = vunpack.c.l.b16 %v600
      %v2559 = vunpack.c.h.b16 %v600
      %v2560 = vunpack.c.l.b16 %v601
      %v2561 = vunpack.c.h.b16 %v601
      %v2562 = vunpack.c.l.b16 %v602
      %v2563 = vunpack.c.h.b16 %v602
      %v2564 = vunpack.c.l.b16 %v603
      %v2565 = vunpack.c.h.b16 %v603
      %v2566 = vunpack.c.l.b16 %v604
      %v2567 = vunpack.c.h.b16 %v604
      %v2568 = vunpack.c.l.b16 %v605
      %v2569 = vunpack.c.h.b16 %v605
      %v2570 = vunpack.c.l.b16 %v606
      %v2571 = vunpack.c.h.b16 %v606
      %v2572 = vunpack.c.l.b16 %v607
      %v2573 = vunpack.c.h.b16 %v607
      %v2574 = vunpack.c.l.b16 %v608
      %v2575 = vunpack.c.h.b16 %v608
      %v2576 = vunpack.c.l.b16 %v609
      %v2577 = vunpack.c.h.b16 %v609
      %v2578 = vunpack.c.l.b16 %v610
      %v2579 = vunpack.c.h.b16 %v610
      %v2580 = vunpack.c.l.b16 %v611
      %v2581 = vunpack.c.h.b16 %v611
      %v2582 = vunpack.c.l.b16 %v612
      %v2583 = vunpack.c.h.b16 %v612
      %v2584 = vunpack.c.l.b16 %v613
      %v2585 = vunpack.c.h.b16 %v613
      %v2586 = vunpack.c.l.b16 %v614
      %v2587 = vunpack.c.h.b16 %v614
      %v2588 = vunpack.c.l.b16 %v615
      %v2589 = vunpack.c.h.b16 %v615
      %v2590 = vunpack.c.l.b16 %v616
      %v2591 = vunpack.c.h.b16 %v616
      %v2592 = vunpack.c.l.b16 %v617
      %v2593 = vunpack.c.h.b16 %v617
      %v2594 = vunpack.c.l.b16 %v618
      %v2595 = vunpack.c.h.b16 %v618
      %v2596 = vunpack.c.l.b16 %v619
      %v2597 = vunpack.c.h.b16 %v619
      %v2598 = vunpack.c.l.b16 %v620
      %v2599 = vunpack.c.h.b16 %v620
      %v2600 = vunpack.c.l.b16 %v621
      %v2601 = vunpack.c.h.b16 %v621
      %v2602 = vunpack.c.l.b16 %v622
      %v2603 = vunpack.c.h.b16 %v622
      %v2604 = vunpack.c.l.b16 %v623
      %v2605 = vunpack.c.h.b16 %v623
      %v2606 = vunpack.c.l.b16 %v624
      %v2607 = vunpack.c.h.b16 %v624
      %v2608 = vunpack.c.l.b16 %v625
      %v2609 = vunpack.c.h.b16 %v625
      %v2610 = vunpack.c.l.b16 %v626
      %v2611 = vunpack.c.h.b16 %v626
      %v2612 = vunpack.c.l.b16 %v627
      %v2613 = vunpack.c.h.b16 %v627
      %v2614 = vunpack.c.l.b16 %v628
      %v2615 = vunpack.c.h.b16 %v628
      %v2616 = vunpack.c.l.b16 %v629
      %v2617 = vunpack.c.h.b16 %v629
      %v2618 = vunpack.c.l.b16 %v630
      %v2619 = vunpack.c.h.b16 %v630
      %v2620 = vunpack.c.l.b16 %v631
      %v2621 = vunpack.c.h.b16 %v631
      %v2622 = vunpack.c.l.b16 %v632
      %v2623 = vunpack.c.h.b16 %v632
      %v2624 = vunpack.c.l.b16 %v633
      %v2625 = vunpack.c.h.b16 %v633
      %v2626 = vunpack.c.l.b16 %v634
      %v2627 = vunpack.c.h.b16 %v634
      %v2628 = vunpack.c.l.b16 %v635
      %v2629 = vunpack.c.h.b16 %v635
      %v2630 = vunpack.c.l.b16 %v636
      %v2631 = vunpack.c.h.b16 %v636
      %v2632 = vunpack.c.l.b16 %v637
      %v2633 = vunpack.c.h.b16 %v637
      %v2634 = vunpack.c.l.b16 %v638
      %v2635 = vunpack.c.h.b16 %v638
      %v2636 = vunpack.c.l.b16 %v639
      %v2637 = vunpack.c.h.b16 %v639
      %v2638 = vunpack.c.l.b16 %v640
      %v2639 = vunpack.c.h.b16 %v640
      %v2640 = vunpack.c.l.b16 %v641
      %v2641 = vunpack.c.h.b16 %v641
      %v2642 = vunpack.c.l.b16 %v642
      %v2643 = vunpack.c.h.b16 %v642
      %v2644 = vunpack.c.l.b16 %v643
      %v2645 = vunpack.c.h.b16 %v643
      %v2646 = vunpack.c.l.b16 %v644
      %v2647 = vunpack.c.h.b16 %v644
      %v2648 = vunpack.c.l.b16 %v645
      %v2649 = vunpack.c.h.b16 %v645
      %v2650 = vunpack.c.l.b16 %v646
      %v2651 = vunpack.c.h.b16 %v646
      %v2652 = vunpack.c.l.b16 %v647
      %v2653 = vunpack.c.h.b16 %v647
      %v2654 = vunpack.c.l.b16 %v648
      %v2655 = vunpack.c.h.b16 %v648
      %v2656 = vunpack.c.l.b16 %v649
      %v2657 = vunpack.c.h.b16 %v649
      %v2658 = vunpack.c.l.b16 %v650
      %v2659 = vunpack.c.h.b16 %v650
      %v2660 = vunpack.c.l.b16 %v651
      %v2661 = vunpack.c.h.b16 %v651
      %v2662 = vunpack.c.l.b16 %v652
      %v2663 = vunpack.c.h.b16 %v652
      %v2664 = vunpack.c.l.b16 %v653
      %v2665 = vunpack.c.h.b16 %v653
      %v2666 = vunpack.c.l.b16 %v654
      %v2667 = vunpack.c.h.b16 %v654
      %v2668 = vunpack.c.l.b16 %v655
      %v2669 = vunpack.c.h.b16 %v655
      %v2670 = vunpack.c.l.b16 %v656
      %v2671 = vunpack.c.h.b16 %v656
      %v2672 = vunpack.c.l.b16 %v657
      %v2673 = vunpack.c.h.b16 %v657
      %v2674 = vunpack.c.l.b16 %v658
      %v2675 = vunpack.c.h.b16 %v658
      %v2676 = vunpack.c.l.b16 %v659
      %v2677 = vunpack.c.h.b16 %v659
      %v2678 = vunpack.c.l.b16 %v660
      %v2679 = vunpack.c.h.b16 %v660
      %v2680 = vunpack.c.l.b16 %v661
      %v2681 = vunpack.c.h.b16 %v661
      %v2682 = vunpack.c.l.b16 %v662
      %v2683 = vunpack.c.h.b16 %v662
      %v2684 = vunpack.c.l.b16 %v663
      %v2685 = vunpack.c.h.b16 %v663
      %v2686 = vunpack.c.l.b16 %v664
      %v2687 = vunpack.c.h.b16 %v664
      %v2688 = vunpack.c.l.b16 %v665
      %v2689 = vunpack.c.h.b16 %v665
      %v2690 = vunpack.c.l.b16 %v666
      %v2691 = vunpack.c.h.b16 %v666
      %v2692 = vunpack.c.l.b16 %v667
      %v2693 = vunpack.c.h.b16 %v667
      %v2694 = vunpack.c.l.b16 %v668
      %v2695 = vunpack.c.h.b16 %v668
      %v2696 = vunpack.c.l.b16 %v669
      %v2697 = vunpack.c.h.b16 %v669
      %v2698 = vunpack.c.l.b16 %v670
      %v2699 = vunpack.c.h.b16 %v670
      %v2700 = vunpack.c.l.b16 %v671
      %v2701 = vunpack.c.h.b16 %v671
      %v2702 = vunpack.c.l.b16 %v672
      %v2703 = vunpack.c.h.b16 %v672
      %v2704 = vunpack.c.l.b16 %v673
      %v2705 = vunpack.c.h.b16 %v673
      %v2706 = vunpack.c.l.b16 %v674
      %v2707 = vunpack.c.h.b16 %v674
      %v2708 = vunpack.c.l.b16 %v675
      %v2709 = vunpack.c.h.b16 %v675
      %v2710 = vunpack.c.l.b16 %v676
      %v2711 = vunpack.c.h.b16 %v676
      %v2712 = vunpack.c.l.b16 %v677
      %v2713 = vunpack.c.h.b16 %v677
      %v2714 = vunpack.c.l.b16 %v678
      %v2715 = vunpack.c.h.b16 %v678
      %v2716 = vunpack.c.l.b16 %v679
      %v2717 = vunpack.c.h.b16 %v679
      %v2718 = vunpack.c.l.b16 %v680
      %v2719 = vunpack.c.h.b16 %v680
      %v2720 = vunpack.c.l.b16 %v681
      %v2721 = vunpack.c.h.b16 %v681
      %v2722 = vunpack.c.l.b16 %v682
      %v2723 = vunpack.c.h.b16 %v682
      %v2724 = vunpack.c.l.b16 %v683
      %v2725 = vunpack.c.h.b16 %v683
      %v2726 = vunpack.c.l.b16 %v684
      %v2727 = vunpack.c.h.b16 %v684
      %v2728 = vunpack.c.l.b16 %v685
      %v2729 = vunpack.c.h.b16 %v685
      %v2730 = vunpack.c.l.b16 %v686
      %v2731 = vunpack.c.h.b16 %v686
      %v2732 = vunpack.c.l.b16 %v687
      %v2733 = vunpack.c.h.b16 %v687
      %v2734 = vunpack.c.l.b16 %v688
      %v2735 = vunpack.c.h.b16 %v688
      %v2736 = vunpack.c.l.b16 %v689
      %v2737 = vunpack.c.h.b16 %v689
      %v2738 = vunpack.c.l.b16 %v690
      %v2739 = vunpack.c.h.b16 %v690
      %v2740 = vunpack.c.l.b16 %v691
      %v2741 = vunpack.c.h.b16 %v691
      %v2742 = vunpack.c.l.b16 %v692
      %v2743 = vunpack.c.h.b16 %v692
      %v2744 = vunpack.c.l.b16 %v693
      %v2745 = vunpack.c.h.b16 %v693
      %v2746 = vunpack.c.l.b16 %v694
      %v2747 = vunpack.c.h.b16 %v694
      %v2748 = vunpack.c.l.b16 %v695
      %v2749 = vunpack.c.h.b16 %v695
      %v2750 = vunpack.c.l.b16 %v696
      %v2751 = vunpack.c.h.b16 %v696
      %v2752 = vunpack.c.l.b16 %v697
      %v2753 = vunpack.c.h.b16 %v697
      %v2754 = vunpack.c.l.b16 %v698
      %v2755 = vunpack.c.h.b16 %v698
      %v2756 = vunpack.c.l.b16 %v699
      %v2757 = vunpack.c.h.b16 %v699
      %v2758 = vunpack.c.l.b16 %v700
      %v2759 = vunpack.c.h.b16 %v700
      %v2760 = vunpack.c.l.b16 %v701
      %v2761 = vunpack.c.h.b16 %v701
      %v2762 = vunpack.c.l.b16 %v702
      %v2763 = vunpack.c.h.b16 %v702
      %v2764 = vunpack.c.l.b16 %v703
      %v2765 = vunpack.c.h.b16 %v703
      %v2766 = vunpack.c.l.b16 %v704
      %v2767 = vunpack.c.h.b16 %v704
      %v2768 = vunpack.c.l.b16 %v705
      %v2769 = vunpack.c.h.b16 %v705
      %v2770 = vunpack.c.l.b16 %v706
      %v2771 = vunpack.c.h.b16 %v706
      %v2772 = vunpack.c.l.b16 %v707
      %v2773 = vunpack.c.h.b16 %v707
      %v2774 = vunpack.c.l.b16 %v708
      %v2775 = vunpack.c.h.b16 %v708
      %v2776 = vunpack.c.l.b16 %v709
      %v2777 = vunpack.c.h.b16 %v709
      %v2778 = vunpack.c.l.b16 %v710
      %v2779 = vunpack.c.h.b16 %v710
      %v2780 = vunpack.c.l.b16 %v711
      %v2781 = vunpack.c.h.b16 %v711
      %v2782 = vunpack.c.l.b16 %v712
      %v2783 = vunpack.c.h.b16 %v712
      %v2784 = vunpack.c.l.b16 %v713
      %v2785 = vunpack.c.h.b16 %v713
      %v2786 = vunpack.c.l.b16 %v714
      %v2787 = vunpack.c.h.b16 %v714
      %v2788 = vunpack.c.l.b16 %v715
      %v2789 = vunpack.c.h.b16 %v715
      %v2790 = vunpack.c.l.b16 %v716
      %v2791 = vunpack.c.h.b16 %v716
      %v2792 = vunpack.c.l.b16 %v717
      %v2793 = vunpack.c.h.b16 %v717
      %v2794 = vunpack.c.l.b16 %v718
      %v2795 = vunpack.c.h.b16 %v718
      %v2796 = vunpack.c.l.b16 %v719
      %v2797 = vunpack.c.h.b16 %v719
      %v2798 = vunpack.c.l.b16 %v720
      %v2799 = vunpack.c.h.b16 %v720
      %v2800 = vunpack.c.l.b16 %v721
      %v2801 = vunpack.c.h.b16 %v721
      %v2802 = vunpack.c.l.b16 %v722
      %v2803 = vunpack.c.h.b16 %v722
      %v2804 = vunpack.c.l.b16 %v723
      %v2805 = vunpack.c.h.b16 %v723
      %v2806 = vunpack.c.l.b16 %v724
      %v2807 = vunpack.c.h.b16 %v724
      %v2808 = vunpack.c.l.b16 %v725
      %v2809 = vunpack.c.h.b16 %v725
      %v2810 = vunpack.c.l.b16 %v726
      %v2811 = vunpack.c.h.b16 %v726
      %v2812 = vunpack.c.l.b16 %v727
      %v2813 = vunpack.c.h.b16 %v727
      %v2814 = vunpack.c.l.b16 %v728
      %v2815 = vunpack.c.h.b16 %v728
      %v2816 = vunpack.c.l.b16 %v729
      %v2817 = vunpack.c.h.b16 %v729
      %v2818 = vunpack.c.l.b16 %v730
      %v2819 = vunpack.c.h.b16 %v730
      %v2820 = vunpack.c.l.b16 %v731
      %v2821 = vunpack.c.h.b16 %v731
      %v2822 = vunpack.c.l.b16 %v732
      %v2823 = vunpack.c.h.b16 %v732
      %v2824 = vunpack.c.l.b16 %v733
      %v2825 = vunpack.c.h.b16 %v733
      %v2826 = vunpack.c.l.b16 %v734
      %v2827 = vunpack.c.h.b16 %v734
      %v2828 = vunpack.c.l.b16 %v735
      %v2829 = vunpack.c.h.b16 %v735
      %v2830 = vunpack.c.l.b16 %v736
      %v2831 = vunpack.c.h.b16 %v736
      %v2832 = vunpack.c.l.b16 %v737
      %v2833 = vunpack.c.h.b16 %v737
      %v2834 = vunpack.c.l.b16 %v738
      %v2835 = vunpack.c.h.b16 %v738
      %v2836 = vunpack.c.l.b16 %v739
      %v2837 = vunpack.c.h.b16 %v739
      %v2838 = vunpack.c.l.b16 %v740
      %v2839 = vunpack.c.h.b16 %v740
      %v2840 = vunpack.c.l.b16 %v741
      %v2841 = vunpack.c.h.b16 %v741
      %v2842 = vunpack.c.l.b16 %v742
      %v2843 = vunpack.c.h.b16 %v742
      %v2844 = vunpack.c.l.b16 %v743
      %v2845 = vunpack.c.h.b16 %v743
      %v2846 = vunpack.c.l.b16 %v744
      %v2847 = vunpack.c.h.b16 %v744
      %v2848 = vunpack.c.l.b16 %v745
      %v2849 = vunpack.c.h.b16 %v745
      %v2850 = vunpack.c.l.b16 %v746
      %v2851 = vunpack.c.h.b16 %v746
      %v2852 = vunpack.c.l.b16 %v747
      %v2853 = vunpack.c.h.b16 %v747
      %v2854 = vunpack.c.l.b16 %v748
      %v2855 = vunpack.c.h.b16 %v748
      %v2856 = vunpack.c.l.b16 %v749
      %v2857 = vunpack.c.h.b16 %v749
      %v2858 = vunpack.c.l.b16 %v750
      %v2859 = vunpack.c.h.b16 %v750
      %v2860 = vunpack.c.l.b16 %v751
      %v2861 = vunpack.c.h.b16 %v751
      %v2862 = vunpack.c.l.b16 %v752
      %v2863 = vunpack.c.h.b16 %v752
      %v2864 = vunpack.c.l.b16 %v753
      %v2865 = vunpack.c.h.b16 %v753
      %v2866 = vunpack.c.l.b16 %v754
      %v2867 = vunpack.c.h.b16 %v754
      %v2868 = vunpack.c.l.b16 %v755
      %v2869 = vunpack.c.h.b16 %v755
      %v2870 = vunpack.c.l.b16 %v756
      %v2871 = vunpack.c.h.b16 %v756
      %v2872 = vunpack.c.l.b16 %v757
      %v2873 = vunpack.c.h.b16 %v757
      %v2874 = vunpack.c.l.b16 %v758
      %v2875 = vunpack.c.h.b16 %v758
      %v2876 = vunpack.c.l.b16 %v759
      %v2877 = vunpack.c.h.b16 %v759
      %v2878 = vunpack.c.l.b16 %v760
      %v2879 = vunpack.c.h.b16 %v760
      %v2880 = vunpack.c.l.b16 %v761
      %v2881 = vunpack.c.h.b16 %v761
      %v2882 = vunpack.c.l.b16 %v762
      %v2883 = vunpack.c.h.b16 %v762
      %v2884 = vunpack.c.l.b16 %v763
      %v2885 = vunpack.c.h.b16 %v763
      %v2886 = vunpack.c.l.b16 %v764
      %v2887 = vunpack.c.h.b16 %v764
      %v2888 = vunpack.c.l.b16 %v765
      %v2889 = vunpack.c.h.b16 %v765
      %v2890 = vunpack.c.l.b16 %v766
      %v2891 = vunpack.c.h.b16 %v766
      %v2892 = vunpack.c.l.b16 %v767
      %v2893 = vunpack.c.h.b16 %v767
      %v2894 = vunpack.c.l.b16 %v768
      %v2895 = vunpack.c.h.b16 %v768
      %v2896 = vunpack.c.l.b16 %v769
      %v2897 = vunpack.c.h.b16 %v769
      %v2898 = vunpack.c.l.b16 %v770
      %v2899 = vunpack.c.h.b16 %v770
      %v2900 = vunpack.c.l.b16 %v771
      %v2901 = vunpack.c.h.b16 %v771
      %v2902 = vunpack.c.l.b16 %v772
      %v2903 = vunpack.c.h.b16 %v772
      %v2904 = vunpack.c.l.b16 %v773
      %v2905 = vunpack.c.h.b16 %v773
      %v2906 = vunpack.c.l.b16 %v774
      %v2907 = vunpack.c.h.b16 %v774
      %v2908 = vunpack.c.l.b16 %v775
      %v2909 = vunpack.c.h.b16 %v775
      %v2910 = vunpack.c.l.b16 %v776
      %v2911 = vunpack.c.h.b16 %v776
      %v2912 = vunpack.c.l.b16 %v777
      %v2913 = vunpack.c.h.b16 %v777
      %v2914 = vunpack.c.l.b16 %v778
      %v2915 = vunpack.c.h.b16 %v778
      %v2916 = vunpack.c.l.b16 %v779
      %v2917 = vunpack.c.h.b16 %v779
      %v2918 = vunpack.c.l.b16 %v780
      %v2919 = vunpack.c.h.b16 %v780
      %v2920 = vunpack.c.l.b16 %v781
      %v2921 = vunpack.c.h.b16 %v781
      %v2922 = vunpack.c.l.b16 %v782
      %v2923 = vunpack.c.h.b16 %v782
      %v2924 = vunpack.c.l.b16 %v783
      %v2925 = vunpack.c.h.b16 %v783
      %v2926 = vunpack.c.l.b16 %v784
      %v2927 = vunpack.c.h.b16 %v784
      %v2928 = vunpack.c.l.b16 %v785
      %v2929 = vunpack.c.h.b16 %v785
      %v2930 = vunpack.c.l.b16 %v786
      %v2931 = vunpack.c.h.b16 %v786
      %v2932 = vunpack.c.l.b16 %v787
      %v2933 = vunpack.c.h.b16 %v787
      %v2934 = vunpack.c.l.b16 %v788
      %v2935 = vunpack.c.h.b16 %v788
      %v2936 = vunpack.c.l.b16 %v789
      %v2937 = vunpack.c.h.b16 %v789
      %v2938 = vunpack.c.l.b16 %v790
      %v2939 = vunpack.c.h.b16 %v790
      %v2940 = vunpack.c.l.b16 %v791
      %v2941 = vunpack.c.h.b16 %v791
      %v2942 = vunpack.c.l.b16 %v792
      %v2943 = vunpack.c.h.b16 %v792
      %v2944 = vunpack.c.l.b16 %v793
      %v2945 = vunpack.c.h.b16 %v793
      %v2946 = vunpack.c.l.b16 %v794
      %v2947 = vunpack.c.h.b16 %v794
      %v2948 = vunpack.c.l.b16 %v795
      %v2949 = vunpack.c.h.b16 %v795
      %v2950 = vunpack.c.l.b16 %v796
      %v2951 = vunpack.c.h.b16 %v796
      %v2952 = vunpack.c.l.b16 %v797
      %v2953 = vunpack.c.h.b16 %v797
      %v2954 = vunpack.c.l.b16 %v798
      %v2955 = vunpack.c.h.b16 %v798
      %v2956 = vunpack.c.l.b16 %v799
      %v2957 = vunpack.c.h.b16 %v799
      %v2958 = vunpack.c.l.b16 %v800
      %v2959 = vunpack.c.h.b16 %v800
      %v2960 = vunpack.c.l.b16 %v801
      %v2961 = vunpack.c.h.b16 %v801
      %v2962 = vunpack.c.l.b16 %v802
      %v2963 = vunpack.c.h.b16 %v802
      %v2964 = vunpack.c.l.b16 %v803
      %v2965 = vunpack.c.h.b16 %v803
      %v2966 = vunpack.c.l.b16 %v804
      %v2967 = vunpack.c.h.b16 %v804
      %v2968 = vunpack.c.l.b16 %v805
      %v2969 = vunpack.c.h.b16 %v805
      %v2970 = vunpack.c.l.b16 %v806
      %v2971 = vunpack.c.h.b16 %v806
      %v2972 = vunpack.c.l.b16 %v807
      %v2973 = vunpack.c.h.b16 %v807
      %v2974 = vunpack.c.l.b16 %v808
      %v2975 = vunpack.c.h.b16 %v808
      %v2976 = vunpack.c.l.b16 %v809
      %v2977 = vunpack.c.h.b16 %v809
      %v2978 = vunpack.c.l.b16 %v810
      %v2979 = vunpack.c.h.b16 %v810
      %v2980 = vunpack.c.l.b16 %v811
      %v2981 = vunpack.c.h.b16 %v811
      %v2982 = vunpack.c.l.b16 %v812
      %v2983 = vunpack.c.h.b16 %v812
      %v2984 = vunpack.c.l.b16 %v813
      %v2985 = vunpack.c.h.b16 %v813
      %v2986 = vunpack.c.l.b16 %v814
      %v2987 = vunpack.c.h.b16 %v814
      %v2988 = vunpack.c.l.b16 %v815
      %v2989 = vunpack.c.h.b16 %v815
      %v2990 = vunpack.c.l.b16 %v816
      %v2991 = vunpack.c.h.b16 %v816
      %v2992 = vunpack.c.l.b16 %v817
      %v2993 = vunpack.c.h.b16 %v817
      %v2994 = vunpack.c.l.b16 %v818
      %v2995 = vunpack.c.h.b16 %v818
      %v2996 = vunpack.c.l.b16 %v819
      %v2997 = vunpack.c.h.b16 %v819
      %v2998 = vunpack.c.l.b16 %v820
      %v2999 = vunpack.c.h.b16 %v820
      %v3000 = vunpack.c.l.b16 %v821
      %v3001 = vunpack.c.h.b16 %v821
      %v3002 = vunpack.c.l.b16 %v822
      %v3003 = vunpack.c.h.b16 %v822
      %v3004 = vunpack.c.l.b16 %v823
      %v3005 = vunpack.c.h.b16 %v823
      %v3006 = vunpack.c.l.b16 %v824
      %v3007 = vunpack.c.h.b16 %v824
      %v3008 = vunpack.c.l.b16 %v825
      %v3009 = vunpack.c.h.b16 %v825
      %v3010 = vunpack.c.l.b16 %v826
      %v3011 = vunpack.c.h.b16 %v826
      %v3012 = vunpack.c.l.b16 %v827
      %v3013 = vunpack.c.h.b16 %v827
      %v3014 = vunpack.c.l.b16 %v828
      %v3015 = vunpack.c.h.b16 %v828
      %v3016 = vunpack.c.l.b16 %v829
      %v3017 = vunpack.c.h.b16 %v829
      %v3018 = vunpack.c.l.b16 %v830
      %v3019 = vunpack.c.h.b16 %v830
      %v3020 = vunpack.c.l.b16 %v831
      %v3021 = vunpack.c.h.b16 %v831
      %v3022 = vunpack.c.l.b16 %v832
      %v3023 = vunpack.c.h.b16 %v832
      %v3024 = vunpack.c.l.b16 %v833
      %v3025 = vunpack.c.h.b16 %v833
      %v3026 = vunpack.c.l.b16 %v834
      %v3027 = vunpack.c.h.b16 %v834
      %v3028 = vunpack.c.l.b16 %v835
      %v3029 = vunpack.c.h.b16 %v835
      %v3030 = vunpack.c.l.b16 %v836
      %v3031 = vunpack.c.h.b16 %v836
      %v3032 = vunpack.c.l.b16 %v837
      %v3033 = vunpack.c.h.b16 %v837
      %v3034 = vunpack.c.l.b16 %v838
      %v3035 = vunpack.c.h.b16 %v838
      %v3036 = vunpack.c.l.b16 %v839
      %v3037 = vunpack.c.h.b16 %v839
      %v3038 = vunpack.c.l.b16 %v840
      %v3039 = vunpack.c.h.b16 %v840
      %v3040 = vunpack.c.l.b16 %v841
      %v3041 = vunpack.c.h.b16 %v841
      %v3042 = vunpack.c.l.b16 %v842
      %v3043 = vunpack.c.h.b16 %v842
      %v3044 = vunpack.c.l.b16 %v843
      %v3045 = vunpack.c.h.b16 %v843
      %v3046 = vunpack.c.l.b16 %v844
      %v3047 = vunpack.c.h.b16 %v844
      %v3048 = vunpack.c.l.b16 %v845
      %v3049 = vunpack.c.h.b16 %v845
      %v3050 = vunpack.c.l.b16 %v846
      %v3051 = vunpack.c.h.b16 %v846
      %v3052 = vunpack.c.l.b16 %v847
      %v3053 = vunpack.c.h.b16 %v847
      %v3054 = vunpack.c.l.b16 %v848
      %v3055 = vunpack.c.h.b16 %v848
      %v3056 = vunpack.c.l.b16 %v849
      %v3057 = vunpack.c.h.b16 %v849
      %v3058 = vunpack.c.l.b16 %v850
      %v3059 = vunpack.c.h.b16 %v850
      %v3060 = vunpack.c.l.b16 %v851
      %v3061 = vunpack.c.h.b16 %v851
      %v3062 = vunpack.c.l.b16 %v852
      %v3063 = vunpack.c.h.b16 %v852
      %v3064 = vunpack.c.l.b16 %v853
      %v3065 = vunpack.c.h.b16 %v853
      %v3066 = vunpack.c.l.b16 %v854
      %v3067 = vunpack.c.h.b16 %v854
      %v3068 = vunpack.c.l.b16 %v855
      %v3069 = vunpack.c.h.b16 %v855
      %v3070 = vunpack.c.l.b16 %v856
      %v3071 = vunpack.c.h.b16 %v856
      %v3072 = vunpack.c.l.b16 %v857
      %v3073 = vunpack.c.h.b16 %v857
      %v3074 = vunpack.c.l.b16 %v858
      %v3075 = vunpack.c.h.b16 %v858
      %v3076 = vunpack.c.l.b16 %v859
      %v3077 = vunpack.c.h.b16 %v859
      %v3078 = vunpack.c.l.b16 %v860
      %v3079 = vunpack.c.h.b16 %v860
      %v3080 = vunpack.c.l.b16 %v861
      %v3081 = vunpack.c.h.b16 %v861
      %v3082 = vunpack.c.l.b16 %v862
      %v3083 = vunpack.c.h.b16 %v862
      %v3084 = vunpack.c.l.b16 %v863
      %v3085 = vunpack.c.h.b16 %v863
      %v3086 = vunpack.c.l.b16 %v864
      %v3087 = vunpack.c.h.b16 %v864
      %v3088 = vunpack.c.l.b16 %v865
      %v3089 = vunpack.c.h.b16 %v865
      %v3090 = vunpack.c.l.b16 %v866
      %v3091 = vunpack.c.h.b16 %v866
      %v3092 = vunpack.c.l.b16 %v867
      %v3093 = vunpack.c.h.b16 %v867
      %v3094 = vunpack.c.l.b16 %v868
      %v3095 = vunpack.c.h.b16 %v868
      %v3096 = vunpack.c.l.b16 %v869
      %v3097 = vunpack.c.h.b16 %v869
      %v3098 = vunpack.c.l.b16 %v870
      %v3099 = vunpack.c.h.b16 %v870
      %v3100 = vunpack.c.l.b16 %v871
      %v3101 = vunpack.c.h.b16 %v871
      %v3102 = vunpack.c.l.b16 %v872
      %v3103 = vunpack.c.h.b16 %v872
      %v3104 = vunpack.c.l.b16 %v873
      %v3105 = vunpack.c.h.b16 %v873
      %v3106 = vunpack.c.l.b16 %v874
      %v3107 = vunpack.c.h.b16 %v874
      %v3108 = vunpack.c.l.b16 %v875
      %v3109 = vunpack.c.h.b16 %v875
      %v3110 = vunpack.c.l.b16 %v876
      %v3111 = vunpack.c.h.b16 %v876
      %v3112 = vunpack.c.l.b16 %v877
      %v3113 = vunpack.c.h.b16 %v877
      %v3114 = vunpack.c.l.b16 %v878
      %v3115 = vunpack.c.h.b16 %v878
      %v3116 = vunpack.c.l.b16 %v879
      %v3117 = vunpack.c.h.b16 %v879
      %v3118 = vunpack.c.l.b16 %v880
      %v3119 = vunpack.c.h.b16 %v880
      %v3120 = vunpack.c.l.b16 %v881
      %v3121 = vunpack.c.h.b16 %v881
      %v3122 = vunpack.c.l.b16 %v882
      %v3123 = vunpack.c.h.b16 %v882
      %v3124 = vunpack.c.l.b16 %v883
      %v3125 = vunpack.c.h.b16 %v883
      %v3126 = vunpack.c.l.b16 %v884
      %v3127 = vunpack.c.h.b16 %v884
      %v3128 = vunpack.c.l.b16 %v885
      %v3129 = vunpack.c.h.b16 %v885
      %v3130 = vunpack.c.l.b16 %v886
      %v3131 = vunpack.c.h.b16 %v886
      %v3132 = vunpack.c.l.b16 %v887
      %v3133 = vunpack.c.h.b16 %v887
      %v3134 = vunpack.c.l.b16 %v888
      %v3135 = vunpack.c.h.b16 %v888
      %v3136 = vunpack.c.l.b16 %v889
      %v3137 = vunpack.c.h.b16 %v889
      %v3138 = vunpack.c.l.b16 %v890
      %v3139 = vunpack.c.h.b16 %v890
      %v3140 = vunpack.c.l.b16 %v891
      %v3141 = vunpack.c.h.b16 %v891
      %v3142 = vunpack.c.l.b16 %v892
      %v3143 = vunpack.c.h.b16 %v892
      %v3144 = vunpack.c.l.b16 %v893
      %v3145 = vunpack.c.h.b16 %v893
      %v3146 = vunpack.c.l.b16 %v894
      %v3147 = vunpack.c.h.b16 %v894
      %v3148 = vunpack.c.l.b16 %v895
      %v3149 = vunpack.c.h.b16 %v895
      %v3150 = vunpack.c.l.b16 %v896
      %v3151 = vunpack.c.h.b16 %v896
      %v3152 = vunpack.c.l.b16 %v897
      %v3153 = vunpack.c.h.b16 %v897
      %v3154 = vunpack.c.l.b16 %v898
      %v3155 = vunpack.c.h.b16 %v898
      %v3156 = vunpack.c.l.b16 %v899
      %v3157 = vunpack.c.h.b16 %v899
      %v3158 = vunpack.c.l.b16 %v900
      %v3159 = vunpack.c.h.b16 %v900
      %v3160 = vunpack.c.l.b16 %v901
      %v3161 = vunpack.c.h.b16 %v901
      %v3162 = vunpack.c.l.b16 %v902
      %v3163 = vunpack.c.h.b16 %v902
      %v3164 = vunpack.c.l.b16 %v903
      %v3165 = vunpack.c.h.b16 %v903
      %v3166 = vunpack.c.l.b16 %v904
      %v3167 = vunpack.c.h.b16 %v904
      %v3168 = vunpack.c.l.b16 %v905
      %v3169 = vunpack.c.h.b16 %v905
      %v3170 = vunpack.c.l.b16 %v906
      %v3171 = vunpack.c.h.b16 %v906
      %v3172 = vunpack.c.l.b16 %v907
      %v3173 = vunpack.c.h.b16 %v907
      %v3174 = vunpack.c.l.b16 %v908
      %v3175 = vunpack.c.h.b16 %v908
      %v3176 = vunpack.c.l.b16 %v909
      %v3177 = vunpack.c.h.b16 %v909
      %v3178 = vunpack.c.l.b16 %v910
      %v3179 = vunpack.c.h.b16 %v910
      %v3180 = vunpack.c.l.b16 %v911
      %v3181 = vunpack.c.h.b16 %v911
      %v3182 = vunpack.c.l.b16 %v912
      %v3183 = vunpack.c.h.b16 %v912
      %v3184 = vunpack.c.l.b16 %v913
      %v3185 = vunpack.c.h.b16 %v913
      %v3186 = vunpack.c.l.b16 %v914
      %v3187 = vunpack.c.h.b16 %v914
      %v3188 = vunpack.c.l.b16 %v915
      %v3189 = vunpack.c.h.b16 %v915
      %v3190 = vunpack.c.l.b16 %v916
      %v3191 = vunpack.c.h.b16 %v916
      %v3192 = vunpack.c.l.b16 %v917
      %v3193 = vunpack.c.h.b16 %v917
      %v3194 = vunpack.c.l.b16 %v918
      %v3195 = vunpack.c.h.b16 %v918
      %v3196 = vunpack.c.l.b16 %v919
      %v3197 = vunpack.c.h.b16 %v919
      %v3198 = vunpack.c.l.b16 %v920
      %v3199 = vunpack.c.h.b16 %v920
      %v3200 = vunpack.c.l.b16 %v921
      %v3201 = vunpack.c.h.b16 %v921
      %v3202 = vunpack.c.l.b16 %v922
      %v3203 = vunpack.c.h.b16 %v922
      %v3204 = vunpack.c.l.b16 %v923
      %v3205 = vunpack.c.h.b16 %v923
      %v3206 = vunpack.c.l.b16 %v924
      %v3207 = vunpack.c.h.b16 %v924
      %v3208 = vunpack.c.l.b16 %v925
      %v3209 = vunpack.c.h.b16 %v925
      %v3210 = vunpack.c.l.b16 %v926
      %v3211 = vunpack.c.h.b16 %v926
      %v3212 = vunpack.c.l.b16 %v927
      %v3213 = vunpack.c.h.b16 %v927
      %v3214 = vunpack.c.l.b16 %v928
      %v3215 = vunpack.c.h.b16 %v928
      %v3216 = vunpack.c.l.b16 %v929
      %v3217 = vunpack.c.h.b16 %v929
      %v3218 = vunpack.c.l.b16 %v930
      %v3219 = vunpack.c.h.b16 %v930
      %v3220 = vunpack.c.l.b16 %v931
      %v3221 = vunpack.c.h.b16 %v931
      %v3222 = vunpack.c.l.b16 %v932
      %v3223 = vunpack.c.h.b16 %v932
      %v3224 = vunpack.c.l.b16 %v933
      %v3225 = vunpack.c.h.b16 %v933
      %v3226 = vunpack.c.l.b16 %v934
      %v3227 = vunpack.c.h.b16 %v934
      %v3228 = vunpack.c.l.b16 %v935
      %v3229 = vunpack.c.h.b16 %v935
      %v3230 = vunpack.c.l.b16 %v936
      %v3231 = vunpack.c.h.b16 %v936
      %v3232 = vunpack.c.l.b16 %v937
      %v3233 = vunpack.c.h.b16 %v937
      %v3234 = vunpack.c.l.b16 %v938
      %v3235 = vunpack.c.h.b16 %v938
      %v3236 = vunpack.c.l.b16 %v939
      %v3237 = vunpack.c.h.b16 %v939
      %v3238 = vunpack.c.l.b16 %v940
      %v3239 = vunpack.c.h.b16 %v940
      %v3240 = vunpack.c.l.b16 %v941
      %v3241 = vunpack.c.h.b16 %v941
      %v3242 = vunpack.c.l.b16 %v942
      %v3243 = vunpack.c.h.b16 %v942
      %v3244 = vunpack.c.l.b16 %v943
      %v3245 = vunpack.c.h.b16 %v943
      %v3246 = vunpack.c.l.b16 %v944
      %v3247 = vunpack.c.h.b16 %v944
      %v3248 = vunpack.c.l.b16 %v945
      %v3249 = vunpack.c.h.b16 %v945
      %v3250 = vunpack.c.l.b16 %v946
      %v3251 = vunpack.c.h.b16 %v946
      %v3252 = vunpack.c.l.b16 %v947
      %v3253 = vunpack.c.h.b16 %v947
      %v3254 = vunpack.c.l.b16 %v948
      %v3255 = vunpack.c.h.b16 %v948
      %v3256 = vunpack.c.l.b16 %v949
      %v3257 = vunpack.c.h.b16 %v949
      %v3258 = vunpack.c.l.b16 %v950
      %v3259 = vunpack.c.h.b16 %v950
      %v3260 = vunpack.c.l.b16 %v951
      %v3261 = vunpack.c.h.b16 %v951
      %v3262 = vunpack.c.l.b16 %v952
      %v3263 = vunpack.c.h.b16 %v952
      %v3264 = vunpack.c.l.b16 %v953
      %v3265 = vunpack.c.h.b16 %v953
      %v3266 = vunpack.c.l.b16 %v954
      %v3267 = vunpack.c.h.b16 %v954
      %v3268 = vunpack.c.l.b16 %v955
      %v3269 = vunpack.c.h.b16 %v955
      %v3270 = vunpack.c.l.b16 %v956
      %v3271 = vunpack.c.h.b16 %v956
      %v3272 = vunpack.c.l.b16 %v957
      %v3273 = vunpack.c.h.b16 %v957
      %v3274 = vunpack.c.l.b16 %v958
      %v3275 = vunpack.c.h.b16 %v958
      %v3276 = vunpack.c.l.b16 %v959
      %v3277 = vunpack.c.h.b16 %v959
      %v3278 = vunpack.c.l.b16 %v960
      %v3279 = vunpack.c.h.b16 %v960
      %v3280 = vunpack.c.l.b16 %v961
      %v3281 = vunpack.c.h.b16 %v961
      %v3282 = vunpack.c.l.b16 %v962
      %v3283 = vunpack.c.h.b16 %v962
      %v3284 = vunpack.c.l.b16 %v963
      %v3285 = vunpack.c.h.b16 %v963
      %v3286 = vunpack.c.l.b16 %v964
      %v3287 = vunpack.c.h.b16 %v964
      %v3288 = vunpack.c.l.b16 %v965
      %v3289 = vunpack.c.h.b16 %v965
      %v3290 = vunpack.c.l.b16 %v966
      %v3291 = vunpack.c.h.b16 %v966
      %v3292 = vunpack.c.l.b16 %v967
      %v3293 = vunpack.c.h.b16 %v967
      %v3294 = vunpack.c.l.b16 %v968
      %v3295 = vunpack.c.h.b16 %v968
      %v3296 = vunpack.c.l.b16 %v969
      %v3297 = vunpack.c.h.b16 %v969
      %v3298 = vunpack.c.l.b16 %v970
      %v3299 = vunpack.c.h.b16 %v970
      %v3300 = vunpack.c.l.b16 %v971
      %v3301 = vunpack.c.h.b16 %v971
      %v3302 = vunpack.c.l.b16 %v972
      %v3303 = vunpack.c.h.b16 %v972
      %v3304 = vunpack.c.l.b16 %v973
      %v3305 = vunpack.c.h.b16 %v973
      %v3306 = vunpack.c.l.b16 %v974
      %v3307 = vunpack.c.h.b16 %v974
      %v3308 = vunpack.c.l.b16 %v975
      %v3309 = vunpack.c.h.b16 %v975
      %v3310 = vunpack.c.l.b16 %v976
      %v3311 = vunpack.c.h.b16 %v976
      %v3312 = vunpack.c.l.b16 %v977
      %v3313 = vunpack.c.h.b16 %v977
      %v3314 = vunpack.c.l.b16 %v978
      %v3315 = vunpack.c.h.b16 %v978
      %v3316 = vunpack.c.l.b16 %v979
      %v3317 = vunpack.c.h.b16 %v979
      %v3318 = vunpack.c.l.b16 %v980
      %v3319 = vunpack.c.h.b16 %v980
      %v3320 = vunpack.c.l.b16 %v981
      %v3321 = vunpack.c.h.b16 %v981
      %v3322 = vunpack.c.l.b16 %v982
      %v3323 = vunpack.c.h.b16 %v982
      %v3324 = vunpack.c.l.b16 %v983
      %v3325 = vunpack.c.h.b16 %v983
      %v3326 = vunpack.c.l.b16 %v984
      %v3327 = vunpack.c.h.b16 %v984
      %v3328 = vunpack.c.l.b16 %v985
      %v3329 = vunpack.c.h.b16 %v985
      %v3330 = vunpack.c.l.b16 %v986
      %v3331 = vunpack.c.h.b16 %v986
      %v3332 = vunpack.c.l.b16 %v987
      %v3333 = vunpack.c.h.b16 %v987
      %v3334 = vunpack.c.l.b16 %v988
      %v3335 = vunpack.c.h.b16 %v988
      %v3336 = vunpack.c.l.b16 %v989
      %v3337 = vunpack.c.h.b16 %v989
      %v3338 = vunpack.c.l.b16 %v990
      %v3339 = vunpack.c.h.b16 %v990
      %v3340 = vunpack.c.l.b16 %v991
      %v3341 = vunpack.c.h.b16 %v991
      %v3342 = vunpack.c.l.b16 %v992
      %v3343 = vunpack.c.h.b16 %v992
      %v3344 = vunpack.c.l.b16 %v993
      %v3345 = vunpack.c.h.b16 %v993
      %v3346 = vunpack.c.l.b16 %v994
      %v3347 = vunpack.c.h.b16 %v994
      %v3348 = vunpack.c.l.b16 %v995
      %v3349 = vunpack.c.h.b16 %v995
      %v3350 = vunpack.c.l.b16 %v996
      %v3351 = vunpack.c.h.b16 %v996
      %v3352 = vunpack.c.l.b16 %v997
      %v3353 = vunpack.c.h.b16 %v997
      %v3354 = vunpack.c.l.b16 %v998
      %v3355 = vunpack.c.h.b16 %v998
      %v3356 = vunpack.c.l.b16 %v999
      %v3357 = vunpack.c.h.b16 %v999
      %v3358 = vunpack.c.l.b16 %v1000
      %v3359 = vunpack.c.h.b16 %v1000
      %v3360 = vunpack.c.l.b16 %v1001
      %v3361 = vunpack.c.h.b16 %v1001
      %v3362 = vunpack.c.l.b16 %v1002
      %v3363 = vunpack.c.h.b16 %v1002
      %v3364 = vunpack.c.l.b16 %v1003
      %v3365 = vunpack.c.h.b16 %v1003
      %v3366 = vunpack.c.l.b16 %v1004
      %v3367 = vunpack.c.h.b16 %v1004
      %v3368 = vunpack.c.l.b16 %v1005
      %v3369 = vunpack.c.h.b16 %v1005
      %v3370 = vunpack.c.l.b16 %v1006
      %v3371 = vunpack.c.h.b16 %v1006
      %v3372 = vunpack.c.l.b16 %v1007
      %v3373 = vunpack.c.h.b16 %v1007
      %v3374 = vunpack.c.l.b16 %v1008
      %v3375 = vunpack.c.h.b16 %v1008
      %v3376 = vunpack.c.l.b16 %v1009
      %v3377 = vunpack.c.h.b16 %v1009
      %v3378 = vunpack.c.l.b16 %v1010
      %v3379 = vunpack.c.h.b16 %v1010
      %v3380 = vunpack.c.l.b16 %v1011
      %v3381 = vunpack.c.h.b16 %v1011
      %v3382 = vunpack.c.l.b16 %v1012
      %v3383 = vunpack.c.h.b16 %v1012
      %v3384 = vunpack.c.l.b16 %v1013
      %v3385 = vunpack.c.h.b16 %v1013
      %v3386 = vunpack.c.l.b16 %v1014
      %v3387 = vunpack.c.h.b16 %v1014
      %v3388 = vunpack.c.l.b16 %v1015
      %v3389 = vunpack.c.h.b16 %v1015
      %v3390 = vunpack.c.l.b16 %v1016
      %v3391 = vunpack.c.h.b16 %v1016
      %v3392 = vunpack.c.l.b16 %v1017
      %v3393 = vunpack.c.h.b16 %v1017
      %v3394 = vunpack.c.l.b16 %v1018
      %v3395 = vunpack.c.h.b16 %v1018
      %v3396 = vunpack.c.l.b16 %v1019
      %v3397 = vunpack.c.h.b16 %v1019
      %v3398 = vunpack.c.l.b16 %v1020
      %v3399 = vunpack.c.h.b16 %v1020
      %v3400 = vunpack.c.l.b16 %v1021
      %v3401 = vunpack.c.h.b16 %v1021
      %v3402 = vunpack.c.l.b16 %v1022
      %v3403 = vunpack.c.h.b16 %v1022
      %v3404 = vunpack.c.l.b16 %v1023
      %v3405 = vunpack.c.h.b16 %v1023
      %v3406 = vunpack.c.l.b16 %v1024
      %v3407 = vunpack.c.h.b16 %v1024
      %v3408 = vunpack.c.l.b16 %v1025
      %v3409 = vunpack.c.h.b16 %v1025
      %v3410 = vunpack.c.l.b16 %v1026
      %v3411 = vunpack.c.h.b16 %v1026
      %v3412 = vunpack.c.l.b16 %v1027
      %v3413 = vunpack.c.h.b16 %v1027
      %v3414 = vunpack.c.l.b16 %v1028
      %v3415 = vunpack.c.h.b16 %v1028
      %v3416 = vunpack.c.l.b16 %v1029
      %v3417 = vunpack.c.h.b16 %v1029
      %v3418 = vpack.c.b16 %v1886, %v1882
      %v3419 = vpack.c.b16 %v1887, %v1883
      %v3420 = vpack.c.b16 %v1888, %v1884
      %v3421 = vpack.c.b16 %v1889, %v1885
      %v3422 = vpack.c.b16 %v1894, %v1890
      %v3423 = vpack.c.b16 %v1895, %v1891
      %v3424 = vpack.c.b16 %v1896, %v1892
      %v3425 = vpack.c.b16 %v1897, %v1893
      %v3426 = vpack.c.b16 %v1902, %v1898
      %v3427 = vpack.c.b16 %v1903, %v1899
      %v3428 = vpack.c.b16 %v1904, %v1900
      %v3429 = vpack.c.b16 %v1905, %v1901
      %v3430 = vpack.c.b16 %v1910, %v1906
      %v3431 = vpack.c.b16 %v1911, %v1907
      %v3432 = vpack.c.b16 %v1912, %v1908
      %v3433 = vpack.c.b16 %v1913, %v1909
      %v3434 = vpack.c.b16 %v1918, %v1914
      %v3435 = vpack.c.b16 %v1919, %v1915
      %v3436 = vpack.c.b16 %v1920, %v1916
      %v3437 = vpack.c.b16 %v1921, %v1917
      %v3438 = vpack.c.b16 %v1926, %v1922
      %v3439 = vpack.c.b16 %v1927, %v1923
      %v3440 = vpack.c.b16 %v1928, %v1924
      %v3441 = vpack.c.b16 %v1929, %v1925
      %v3442 = vpack.c.b16 %v1934, %v1930
      %v3443 = vpack.c.b16 %v1935, %v1931
      %v3444 = vpack.c.b16 %v1936, %v1932
      %v3445 = vpack.c.b16 %v1937, %v1933
      %v3446 = vpack.c.b16 %v1942, %v1938
      %v3447 = vpack.c.b16 %v1943, %v1939
      %v3448 = vpack.c.b16 %v1944, %v1940
      %v3449 = vpack.c.b16 %v1945, %v1941
      %v3450 = vpack.c.b16 %v1950, %v1946
      %v3451 = vpack.c.b16 %v1951, %v1947
      %v3452 = vpack.c.b16 %v1952, %v1948
      %v3453 = vpack.c.b16 %v1953, %v1949
      %v3454 = vpack.c.b16 %v1958, %v1954
      %v3455 = vpack.c.b16 %v1959, %v1955
      %v3456 = vpack.c.b16 %v1960, %v1956
      %v3457 = vpack.c.b16 %v1961, %v1957
      %v3458 = vpack.c.b16 %v1966, %v1962
      %v3459 = vpack.c.b16 %v1967, %v1963
      %v3460 = vpack.c.b16 %v1968, %v1964
      %v3461 = vpack.c.b16 %v1969, %v1965
      %v3462 = vpack.c.b16 %v1974, %v1970
      %v3463 = vpack.c.b16 %v1975, %v1971
      %v3464 = vpack.c.b16 %v1976, %v1972
      %v3465 = vpack.c.b16 %v1977, %v1973
      %v3466 = vpack.c.b16 %v1982, %v1978
      %v3467 = vpack.c.b16 %v1983, %v1979
      %v3468 = vpack.c.b16 %v1984, %v1980
      %v3469 = vpack.c.b16 %v1985, %v1981
      %v3470 = vpack.c.b16 %v1990, %v1986
      %v3471 = vpack.c.b16 %v1991, %v1987
      %v3472 = vpack.c.b16 %v1992, %v1988
      %v3473 = vpack.c.b16 %v1993, %v1989
      %v3474 = vpack.c.b16 %v1998, %v1994
      %v3475 = vpack.c.b16 %v1999, %v1995
      %v3476 = vpack.c.b16 %v2000, %v1996
      %v3477 = vpack.c.b16 %v2001, %v1997
      %v3478 = vpack.c.b16 %v2006, %v2002
      %v3479 = vpack.c.b16 %v2007, %v2003
      %v3480 = vpack.c.b16 %v2008, %v2004
      %v3481 = vpack.c.b16 %v2009, %v2005
      %v3482 = vpack.c.b16 %v2014, %v2010
      %v3483 = vpack.c.b16 %v2015, %v2011
      %v3484 = vpack.c.b16 %v2016, %v2012
      %v3485 = vpack.c.b16 %v2017, %v2013
      %v3486 = vpack.c.b16 %v2022, %v2018
      %v3487 = vpack.c.b16 %v2023, %v2019
      %v3488 = vpack.c.b16 %v2024, %v2020
      %v3489 = vpack.c.b16 %v2025, %v2021
      %v3490 = vpack.c.b16 %v2030, %v2026
      %v3491 = vpack.c.b16 %v2031, %v2027
      %v3492 = vpack.c.b16 %v2032, %v2028
      %v3493 = vpack.c.b16 %v2033, %v2029
      %v3494 = vpack.c.b16 %v2038, %v2034
      %v3495 = vpack.c.b16 %v2039, %v2035
      %v3496 = vpack.c.b16 %v2040, %v2036
      %v3497 = vpack.c.b16 %v2041, %v2037
      %v3498 = vpack.c.b16 %v2046, %v2042
      %v3499 = vpack.c.b16 %v2047, %v2043
      %v3500 = vpack.c.b16 %v2048, %v2044
      %v3501 = vpack.c.b16 %v2049, %v2045
      %v3502 = vpack.c.b16 %v2054, %v2050
      %v3503 = vpack.c.b16 %v2055, %v2051
      %v3504 = vpack.c.b16 %v2056, %v2052
      %v3505 = vpack.c.b16 %v2057, %v2053
      %v3506 = vpack.c.b16 %v2062, %v2058
      %v3507 = vpack.c.b16 %v2063, %v2059
      %v3508 = vpack.c.b16 %v2064, %v2060
      %v3509 = vpack.c.b16 %v2065, %v2061
      %v3510 = vpack.c.b16 %v2070, %v2066
      %v3511 = vpack.c.b16 %v2071, %v2067
      %v3512 = vpack.c.b16 %v2072, %v2068
      %v3513 = vpack.c.b16 %v2073, %v2069
      %v3514 = vpack.c.b16 %v2078, %v2074
      %v3515 = vpack.c.b16 %v2079, %v2075
      %v3516 = vpack.c.b16 %v2080, %v2076
      %v3517 = vpack.c.b16 %v2081, %v2077
      %v3518 = vpack.c.b16 %v2086, %v2082
      %v3519 = vpack.c.b16 %v2087, %v2083
      %v3520 = vpack.c.b16 %v2088, %v2084
      %v3521 = vpack.c.b16 %v2089, %v2085
      %v3522 = vpack.c.b16 %v2094, %v2090
      %v3523 = vpack.c.b16 %v2095, %v2091
      %v3524 = vpack.c.b16 %v2096, %v2092
      %v3525 = vpack.c.b16 %v2097, %v2093
      %v3526 = vpack.c.b16 %v2102, %v2098
      %v3527 = vpack.c.b16 %v2103, %v2099
      %v3528 = vpack.c.b16 %v2104, %v2100
      %v3529 = vpack.c.b16 %v2105, %v2101
      %v3530 = vpack.c.b16 %v2110, %v2106
      %v3531 = vpack.c.b16 %v2111, %v2107
      %v3532 = vpack.c.b16 %v2112, %v2108
      %v3533 = vpack.c.b16 %v2113, %v2109
      %v3534 = vpack.c.b16 %v2118, %v2114
      %v3535 = vpack.c.b16 %v2119, %v2115
      %v3536 = vpack.c.b16 %v2120, %v2116
      %v3537 = vpack.c.b16 %v2121, %v2117
      %v3538 = vpack.c.b16 %v2126, %v2122
      %v3539 = vpack.c.b16 %v2127, %v2123
      %v3540 = vpack.c.b16 %v2128, %v2124
      %v3541 = vpack.c.b16 %v2129, %v2125
      %v3542 = vpack.c.b16 %v2134, %v2130
      %v3543 = vpack.c.b16 %v2135, %v2131
      %v3544 = vpack.c.b16 %v2136, %v2132
      %v3545 = vpack.c.b16 %v2137, %v2133
      %v3546 = vpack.c.b16 %v2142, %v2138
      %v3547 = vpack.c.b16 %v2143, %v2139
      %v3548 = vpack.c.b16 %v2144, %v2140
      %v3549 = vpack.c.b16 %v2145, %v2141
      %v3550 = vpack.c.b16 %v2150, %v2146
      %v3551 = vpack.c.b16 %v2151, %v2147
      %v3552 = vpack.c.b16 %v2152, %v2148
      %v3553 = vpack.c.b16 %v2153, %v2149
      %v3554 = vpack.c.b16 %v2158, %v2154
      %v3555 = vpack.c.b16 %v2159, %v2155
      %v3556 = vpack.c.b16 %v2160, %v2156
      %v3557 = vpack.c.b16 %v2161, %v2157
      %v3558 = vpack.c.b16 %v2166, %v2162
      %v3559 = vpack.c.b16 %v2167, %v2163
      %v3560 = vpack.c.b16 %v2168, %v2164
      %v3561 = vpack.c.b16 %v2169, %v2165
      %v3562 = vpack.c.b16 %v2174, %v2170
      %v3563 = vpack.c.b16 %v2175, %v2171
      %v3564 = vpack.c.b16 %v2176, %v2172
      %v3565 = vpack.c.b16 %v2177, %v2173
      %v3566 = vpack.c.b16 %v2182, %v2178
      %v3567 = vpack.c.b16 %v2183, %v2179
      %v3568 = vpack.c.b16 %v2184, %v2180
      %v3569 = vpack.c.b16 %v2185, %v2181
      %v3570 = vpack.c.b16 %v2190, %v2186
      %v3571 = vpack.c.b16 %v2191, %v2187
      %v3572 = vpack.c.b16 %v2192, %v2188
      %v3573 = vpack.c.b16 %v2193, %v2189
      %v3574 = vpack.c.b16 %v2198, %v2194
      %v3575 = vpack.c.b16 %v2199, %v2195
      %v3576 = vpack.c.b16 %v2200, %v2196
      %v3577 = vpack.c.b16 %v2201, %v2197
      %v3578 = vpack.c.b16 %v2206, %v2202
      %v3579 = vpack.c.b16 %v2207, %v2203
      %v3580 = vpack.c.b16 %v2208, %v2204
      %v3581 = vpack.c.b16 %v2209, %v2205
      %v3582 = vpack.c.b16 %v2214, %v2210
      %v3583 = vpack.c.b16 %v2215, %v2211
      %v3584 = vpack.c.b16 %v2216, %v2212
      %v3585 = vpack.c.b16 %v2217, %v2213
      %v3586 = vpack.c.b16 %v2222, %v2218
      %v3587 = vpack.c.b16 %v2223, %v2219
      %v3588 = vpack.c.b16 %v2224, %v2220
      %v3589 = vpack.c.b16 %v2225, %v2221
      %v3590 = vpack.c.b16 %v2230, %v2226
      %v3591 = vpack.c.b16 %v2231, %v2227
      %v3592 = vpack.c.b16 %v2232, %v2228
      %v3593 = vpack.c.b16 %v2233, %v2229
      %v3594 = vpack.c.b16 %v2238, %v2234
      %v3595 = vpack.c.b16 %v2239, %v2235
      %v3596 = vpack.c.b16 %v2240, %v2236
      %v3597 = vpack.c.b16 %v2241, %v2237
      %v3598 = vpack.c.b16 %v2246, %v2242
      %v3599 = vpack.c.b16 %v2247, %v2243
      %v3600 = vpack.c.b16 %v2248, %v2244
      %v3601 = vpack.c.b16 %v2249, %v2245
      %v3602 = vpack.c.b16 %v2254, %v2250
      %v3603 = vpack.c.b16 %v2255, %v2251
      %v3604 = vpack.c.b16 %v2256, %v2252
      %v3605 = vpack.c.b16 %v2257, %v2253
      %v3606 = vpack.c.b16 %v2262, %v2258
      %v3607 = vpack.c.b16 %v2263, %v2259
      %v3608 = vpack.c.b16 %v2264, %v2260
      %v3609 = vpack.c.b16 %v2265, %v2261
      %v3610 = vpack.c.b16 %v2270, %v2266
      %v3611 = vpack.c.b16 %v2271, %v2267
      %v3612 = vpack.c.b16 %v2272, %v2268
      %v3613 = vpack.c.b16 %v2273, %v2269
      %v3614 = vpack.c.b16 %v2278, %v2274
      %v3615 = vpack.c.b16 %v2279, %v2275
      %v3616 = vpack.c.b16 %v2280, %v2276
      %v3617 = vpack.c.b16 %v2281, %v2277
      %v3618 = vpack.c.b16 %v2286, %v2282
      %v3619 = vpack.c.b16 %v2287, %v2283
      %v3620 = vpack.c.b16 %v2288, %v2284
      %v3621 = vpack.c.b16 %v2289, %v2285
      %v3622 = vpack.c.b16 %v2294, %v2290
      %v3623 = vpack.c.b16 %v2295, %v2291
      %v3624 = vpack.c.b16 %v2296, %v2292
      %v3625 = vpack.c.b16 %v2297, %v2293
      %v3626 = vpack.c.b16 %v2302, %v2298
      %v3627 = vpack.c.b16 %v2303, %v2299
      %v3628 = vpack.c.b16 %v2304, %v2300
      %v3629 = vpack.c.b16 %v2305, %v2301
      %v3630 = vpack.c.b16 %v2310, %v2306
      %v3631 = vpack.c.b16 %v2311, %v2307
      %v3632 = vpack.c.b16 %v2312, %v2308
      %v3633 = vpack.c.b16 %v2313, %v2309
      %v3634 = vpack.c.b16 %v2318, %v2314
      %v3635 = vpack.c.b16 %v2319, %v2315
      %v3636 = vpack.c.b16 %v2320, %v2316
      %v3637 = vpack.c.b16 %v2321, %v2317
      %v3638 = vpack.c.b16 %v2326, %v2322
      %v3639 = vpack.c.b16 %v2327, %v2323
      %v3640 = vpack.c.b16 %v2328, %v2324
      %v3641 = vpack.c.b16 %v2329, %v2325
      %v3642 = vpack.c.b16 %v2334, %v2330
      %v3643 = vpack.c.b16 %v2335, %v2331
      %v3644 = vpack.c.b16 %v2336, %v2332
      %v3645 = vpack.c.b16 %v2337, %v2333
      %v3646 = vpack.c.b16 %v2342, %v2338
      %v3647 = vpack.c.b16 %v2343, %v2339
      %v3648 = vpack.c.b16 %v2344, %v2340
      %v3649 = vpack.c.b16 %v2345, %v2341
      %v3650 = vpack.c.b16 %v2350, %v2346
      %v3651 = vpack.c.b16 %v2351, %v2347
      %v3652 = vpack.c.b16 %v2352, %v2348
      %v3653 = vpack.c.b16 %v2353, %v2349
      %v3654 = vpack.c.b16 %v2358, %v2354
      %v3655 = vpack.c.b16 %v2359, %v2355
      %v3656 = vpack.c.b16 %v2360, %v2356
      %v3657 = vpack.c.b16 %v2361, %v2357
      %v3658 = vpack.c.b16 %v2366, %v2362
      %v3659 = vpack.c.b16 %v2367, %v2363
      %v3660 = vpack.c.b16 %v2368, %v2364
      %v3661 = vpack.c.b16 %v2369, %v2365
      %v3662 = vpack.c.b16 %v2374, %v2370
      %v3663 = vpack.c.b16 %v2375, %v2371
      %v3664 = vpack.c.b16 %v2376, %v2372
      %v3665 = vpack.c.b16 %v2377, %v2373
      %v3666 = vpack.c.b16 %v2382, %v2378
      %v3667 = vpack.c.b16 %v2383, %v2379
      %v3668 = vpack.c.b16 %v2384, %v2380
      %v3669 = vpack.c.b16 %v2385, %v2381
      %v3670 = vpack.c.b16 %v2390, %v2386
      %v3671 = vpack.c.b16 %v2391, %v2387
      %v3672 = vpack.c.b16 %v2392, %v2388
      %v3673 = vpack.c.b16 %v2393, %v2389
      %v3674 = vpack.c.b16 %v2398, %v2394
      %v3675 = vpack.c.b16 %v2399, %v2395
      %v3676 = vpack.c.b16 %v2400, %v2396
      %v3677 = vpack.c.b16 %v2401, %v2397
      %v3678 = vpack.c.b16 %v2406, %v2402
      %v3679 = vpack.c.b16 %v2407, %v2403
      %v3680 = vpack.c.b16 %v2408, %v2404
      %v3681 = vpack.c.b16 %v2409, %v2405
      %v3682 = vpack.c.b16 %v2414, %v2410
      %v3683 = vpack.c.b16 %v2415, %v2411
      %v3684 = vpack.c.b16 %v2416, %v2412
      %v3685 = vpack.c.b16 %v2417, %v2413
      %v3686 = vpack.c.b16 %v2422, %v2418
      %v3687 = vpack.c.b16 %v2423, %v2419
      %v3688 = vpack.c.b16 %v2424, %v2420
      %v3689 = vpack.c.b16 %v2425, %v2421
      %v3690 = vpack.c.b16 %v2430, %v2426
      %v3691 = vpack.c.b16 %v2431, %v2427
      %v3692 = vpack.c.b16 %v2432, %v2428
      %v3693 = vpack.c.b16 %v2433, %v2429
      %v3694 = vpack.c.b16 %v2438, %v2434
      %v3695 = vpack.c.b16 %v2439, %v2435
      %v3696 = vpack.c.b16 %v2440, %v2436
      %v3697 = vpack.c.b16 %v2441, %v2437
      %v3698 = vpack.c.b16 %v2446, %v2442
      %v3699 = vpack.c.b16 %v2447, %v2443
      %v3700 = vpack.c.b16 %v2448, %v2444
      %v3701 = vpack.c.b16 %v2449, %v2445
      %v3702 = vpack.c.b16 %v2454, %v2450
      %v3703 = vpack.c.b16 %v2455, %v2451
      %v3704 = vpack.c.b16 %v2456, %v2452
      %v3705 = vpack.c.b16 %v2457, %v2453
      %v3706 = vpack.c.b16 %v2462, %v2458
      %v3707 = vpack.c.b16 %v2463, %v2459
      %v3708 = vpack.c.b16 %v2464, %v2460
      %v3709 = vpack.c.b16 %v2465, %v2461
      %v3710 = vpack.c.b16 %v2470, %v2466
      %v3711 = vpack.c.b16 %v2471, %v2467
      %v3712 = vpack.c.b16 %v2472, %v2468
      %v3713 = vpack.c.b16 %v2473, %v2469
      %v3714 = vpack.c.b16 %v2478, %v2474
      %v3715 = vpack.c.b16 %v2479, %v2475
      %v3716 = vpack.c.b16 %v2480, %v2476
      %v3717 = vpack.c.b16 %v2481, %v2477
      %v3718 = vpack.c.b16 %v2486, %v2482
      %v3719 = vpack.c.b16 %v2487, %v2483
      %v3720 = vpack.c.b16 %v2488, %v2484
      %v3721 = vpack.c.b16 %v2489, %v2485
      %v3722 = vpack.c.b16 %v2494, %v2490
      %v3723 = vpack.c.b16 %v2495, %v2491
      %v3724 = vpack.c.b16 %v2496, %v2492
      %v3725 = vpack.c.b16 %v2497, %v2493
      %v3726 = vpack.c.b16 %v2502, %v2498
      %v3727 = vpack.c.b16 %v2503, %v2499
      %v3728 = vpack.c.b16 %v2504, %v2500
      %v3729 = vpack.c.b16 %v2505, %v2501
      %v3730 = vpack.c.b16 %v2510, %v2506
      %v3731 = vpack.c.b16 %v2511, %v2507
      %v3732 = vpack.c.b16 %v2512, %v2508
      %v3733 = vpack.c.b16 %v2513, %v2509
      %v3734 = vpack.c.b16 %v2518, %v2514
      %v3735 = vpack.c.b16 %v2519, %v2515
      %v3736 = vpack.c.b16 %v2520, %v2516
      %v3737 = vpack.c.b16 %v2521, %v2517
      %v3738 = vpack.c.b16 %v2526, %v2522
      %v3739 = vpack.c.b16 %v2527, %v2523
      %v3740 = vpack.c.b16 %v2528, %v2524
      %v3741 = vpack.c.b16 %v2529, %v2525
      %v3742 = vpack.c.b16 %v2534, %v2530
      %v3743 = vpack.c.b16 %v2535, %v2531
      %v3744 = vpack.c.b16 %v2536, %v2532
      %v3745 = vpack.c.b16 %v2537, %v2533
      %v3746 = vpack.c.b16 %v2542, %v2538
      %v3747 = vpack.c.b16 %v2543, %v2539
      %v3748 = vpack.c.b16 %v2544, %v2540
      %v3749 = vpack.c.b16 %v2545, %v2541
      %v3750 = vpack.c.b16 %v2550, %v2546
      %v3751 = vpack.c.b16 %v2551, %v2547
      %v3752 = vpack.c.b16 %v2552, %v2548
      %v3753 = vpack.c.b16 %v2553, %v2549
      %v3754 = vpack.c.b16 %v2558, %v2554
      %v3755 = vpack.c.b16 %v2559, %v2555
      %v3756 = vpack.c.b16 %v2560, %v2556
      %v3757 = vpack.c.b16 %v2561, %v2557
      %v3758 = vpack.c.b16 %v2566, %v2562
      %v3759 = vpack.c.b16 %v2567, %v2563
      %v3760 = vpack.c.b16 %v2568, %v2564
      %v3761 = vpack.c.b16 %v2569, %v2565
      %v3762 = vpack.c.b16 %v2574, %v2570
      %v3763 = vpack.c.b16 %v2575, %v2571
      %v3764 = vpack.c.b16 %v2576, %v2572
      %v3765 = vpack.c.b16 %v2577, %v2573
      %v3766 = vpack.c.b16 %v2582, %v2578
      %v3767 = vpack.c.b16 %v2583, %v2579
      %v3768 = vpack.c.b16 %v2584, %v2580
      %v3769 = vpack.c.b16 %v2585, %v2581
      %v3770 = vpack.c.b16 %v2590, %v2586
      %v3771 = vpack.c.b16 %v2591, %v2587
      %v3772 = vpack.c.b16 %v2592, %v2588
      %v3773 = vpack.c.b16 %v2593, %v2589
      %v3774 = vpack.c.b16 %v2598, %v2594
      %v3775 = vpack.c.b16 %v2599, %v2595
      %v3776 = vpack.c.b16 %v2600, %v2596
      %v3777 = vpack.c.b16 %v2601, %v2597
      %v3778 = vpack.c.b16 %v2606, %v2602
      %v3779 = vpack.c.b16 %v2607, %v2603
      %v3780 = vpack.c.b16 %v2608, %v2604
      %v3781 = vpack.c.b16 %v2609, %v2605
      %v3782 = vpack.c.b16 %v2614, %v2610
      %v3783 = vpack.c.b16 %v2615, %v2611
      %v3784 = vpack.c.b16 %v2616, %v2612
      %v3785 = vpack.c.b16 %v2617, %v2613
      %v3786 = vpack.c.b16 %v2622, %v2618
      %v3787 = vpack.c.b16 %v2623, %v2619
      %v3788 = vpack.c.b16 %v2624, %v2620
      %v3789 = vpack.c.b16 %v2625, %v2621
      %v3790 = vpack.c.b16 %v2630, %v2626
      %v3791 = vpack.c.b16 %v2631, %v2627
      %v3792 = vpack.c.b16 %v2632, %v2628
      %v3793 = vpack.c.b16 %v2633, %v2629
      %v3794 = vpack.c.b16 %v2638, %v2634
      %v3795 = vpack.c.b16 %v2639, %v2635
      %v3796 = vpack.c.b16 %v2640, %v2636
      %v3797 = vpack.c.b16 %v2641, %v2637
      %v3798 = vpack.c.b16 %v2646, %v2642
      %v3799 = vpack.c.b16 %v2647, %v2643
      %v3800 = vpack.c.b16 %v2648, %v2644
      %v3801 = vpack.c.b16 %v2649, %v2645
      %v3802 = vpack.c.b16 %v2654, %v2650
      %v3803 = vpack.c.b16 %v2655, %v2651
      %v3804 = vpack.c.b16 %v2656, %v2652
      %v3805 = vpack.c.b16 %v2657, %v2653
      %v3806 = vpack.c.b16 %v2662, %v2658
      %v3807 = vpack.c.b16 %v2663, %v2659
      %v3808 = vpack.c.b16 %v2664, %v2660
      %v3809 = vpack.c.b16 %v2665, %v2661
      %v3810 = vpack.c.b16 %v2670, %v2666
      %v3811 = vpack.c.b16 %v2671, %v2667
      %v3812 = vpack.c.b16 %v2672, %v2668
      %v3813 = vpack.c.b16 %v2673, %v2669
      %v3814 = vpack.c.b16 %v2678, %v2674
      %v3815 = vpack.c.b16 %v2679, %v2675
      %v3816 = vpack.c.b16 %v2680, %v2676
      %v3817 = vpack.c.b16 %v2681, %v2677
      %v3818 = vpack.c.b16 %v2686, %v2682
      %v3819 = vpack.c.b16 %v2687, %v2683
      %v3820 = vpack.c.b16 %v2688, %v2684
      %v3821 = vpack.c.b16 %v2689, %v2685
      %v3822 = vpack.c.b16 %v2694, %v2690
      %v3823 = vpack.c.b16 %v2695, %v2691
      %v3824 = vpack.c.b16 %v2696, %v2692
      %v3825 = vpack.c.b16 %v2697, %v2693
      %v3826 = vpack.c.b16 %v2702, %v2698
      %v3827 = vpack.c.b16 %v2703, %v2699
      %v3828 = vpack.c.b16 %v2704, %v2700
      %v3829 = vpack.c.b16 %v2705, %v2701
      %v3830 = vpack.c.b16 %v2710, %v2706
      %v3831 = vpack.c.b16 %v2711, %v2707
      %v3832 = vpack.c.b16 %v2712, %v2708
      %v3833 = vpack.c.b16 %v2713, %v2709
      %v3834 = vpack.c.b16 %v2718, %v2714
      %v3835 = vpack.c.b16 %v2719, %v2715
      %v3836 = vpack.c.b16 %v2720, %v2716
      %v3837 = vpack.c.b16 %v2721, %v2717
      %v3838 = vpack.c.b16 %v2726, %v2722
      %v3839 = vpack.c.b16 %v2727, %v2723
      %v3840 = vpack.c.b16 %v2728, %v2724
      %v3841 = vpack.c.b16 %v2729, %v2725
      %v3842 = vpack.c.b16 %v2734, %v2730
      %v3843 = vpack.c.b16 %v2735, %v2731
      %v3844 = vpack.c.b16 %v2736, %v2732
      %v3845 = vpack.c.b16 %v2737, %v2733
      %v3846 = vpack.c.b16 %v2742, %v2738
      %v3847 = vpack.c.b16 %v2743, %v2739
      %v3848 = vpack.c.b16 %v2744, %v2740
      %v3849 = vpack.c.b16 %v2745, %v2741
      %v3850 = vpack.c.b16 %v2750, %v2746
      %v3851 = vpack.c.b16 %v2751, %v2747
      %v3852 = vpack.c.b16 %v2752, %v2748
      %v3853 = vpack.c.b16 %v2753, %v2749
      %v3854 = vpack.c.b16 %v2758, %v2754
      %v3855 = vpack.c.b16 %v2759, %v2755
      %v3856 = vpack.c.b16 %v2760, %v2756
      %v3857 = vpack.c.b16 %v2761, %v2757
      %v3858 = vpack.c.b16 %v2766, %v2762
      %v3859 = vpack.c.b16 %v2767, %v2763
      %v3860 = vpack.c.b16 %v2768, %v2764
      %v3861 = vpack.c.b16 %v2769, %v2765
      %v3862 = vpack.c.b16 %v2774, %v2770
      %v3863 = vpack.c.b16 %v2775, %v2771
      %v3864 = vpack.c.b16 %v2776, %v2772
      %v3865 = vpack.c.b16 %v2777, %v2773
      %v3866 = vpack.c.b16 %v2782, %v2778
      %v3867 = vpack.c.b16 %v2783, %v2779
      %v3868 = vpack.c.b16 %v2784, %v2780
      %v3869 = vpack.c.b16 %v2785, %v2781
      %v3870 = vpack.c.b16 %v2790, %v2786
      %v3871 = vpack.c.b16 %v2791, %v2787
      %v3872 = vpack.c.b16 %v2792, %v2788
      %v3873 = vpack.c.b16 %v2793, %v2789
      %v3874 = vpack.c.b16 %v2798, %v2794
      %v3875 = vpack.c.b16 %v2799, %v2795
      %v3876 = vpack.c.b16 %v2800, %v2796
      %v3877 = vpack.c.b16 %v2801, %v2797
      %v3878 = vpack.c.b16 %v2806, %v2802
      %v3879 = vpack.c.b16 %v2807, %v2803
      %v3880 = vpack.c.b16 %v2808, %v2804
      %v3881 = vpack.c.b16 %v2809, %v2805
      %v3882 = vpack.c.b16 %v2814, %v2810
      %v3883 = vpack.c.b16 %v2815, %v2811
      %v3884 = vpack.c.b16 %v2816, %v2812
      %v3885 = vpack.c.b16 %v2817, %v2813
      %v3886 = vpack.c.b16 %v2822, %v2818
      %v3887 = vpack.c.b16 %v2823, %v2819
      %v3888 = vpack.c.b16 %v2824, %v2820
      %v3889 = vpack.c.b16 %v2825, %v2821
      %v3890 = vpack.c.b16 %v2830, %v2826
      %v3891 = vpack.c.b16 %v2831, %v2827
      %v3892 = vpack.c.b16 %v2832, %v2828
      %v3893 = vpack.c.b16 %v2833, %v2829
      %v3894 = vpack.c.b16 %v2838, %v2834
      %v3895 = vpack.c.b16 %v2839, %v2835
      %v3896 = vpack.c.b16 %v2840, %v2836
      %v3897 = vpack.c.b16 %v2841, %v2837
      %v3898 = vpack.c.b16 %v2846, %v2842
      %v3899 = vpack.c.b16 %v2847, %v2843
      %v3900 = vpack.c.b16 %v2848, %v2844
      %v3901 = vpack.c.b16 %v2849, %v2845
      %v3902 = vpack.c.b16 %v2854, %v2850
      %v3903 = vpack.c.b16 %v2855, %v2851
      %v3904 = vpack.c.b16 %v2856, %v2852
      %v3905 = vpack.c.b16 %v2857, %v2853
      %v3906 = vpack.c.b16 %v2862, %v2858
      %v3907 = vpack.c.b16 %v2863, %v2859
      %v3908 = vpack.c.b16 %v2864, %v2860
      %v3909 = vpack.c.b16 %v2865, %v2861
      %v3910 = vpack.c.b16 %v2870, %v2866
      %v3911 = vpack.c.b16 %v2871, %v2867
      %v3912 = vpack.c.b16 %v2872, %v2868
      %v3913 = vpack.c.b16 %v2873, %v2869
      %v3914 = vpack.c.b16 %v2878, %v2874
      %v3915 = vpack.c.b16 %v2879, %v2875
      %v3916 = vpack.c.b16 %v2880, %v2876
      %v3917 = vpack.c.b16 %v2881, %v2877
      %v3918 = vpack.c.b16 %v2886, %v2882
      %v3919 = vpack.c.b16 %v2887, %v2883
      %v3920 = vpack.c.b16 %v2888, %v2884
      %v3921 = vpack.c.b16 %v2889, %v2885
      %v3922 = vpack.c.b16 %v2894, %v2890
      %v3923 = vpack.c.b16 %v2895, %v2891
      %v3924 = vpack.c.b16 %v2896, %v2892
      %v3925 = vpack.c.b16 %v2897, %v2893
      %v3926 = vpack.c.b16 %v2902, %v2898
      %v3927 = vpack.c.b16 %v2903, %v2899
      %v3928 = vpack.c.b16 %v2904, %v2900
      %v3929 = vpack.c.b16 %v2905, %v2901
      %v3930 = vpack.c.b16 %v2910, %v2906
      %v3931 = vpack.c.b16 %v2911, %v2907
      %v3932 = vpack.c.b16 %v2912, %v2908
      %v3933 = vpack.c.b16 %v2913, %v2909
      %v3934 = vpack.c.b16 %v2918, %v2914
      %v3935 = vpack.c.b16 %v2919, %v2915
      %v3936 = vpack.c.b16 %v2920, %v2916
      %v3937 = vpack.c.b16 %v2921, %v2917
      %v3938 = vpack.c.b16 %v2926, %v2922
      %v3939 = vpack.c.b16 %v2927, %v2923
      %v3940 = vpack.c.b16 %v2928, %v2924
      %v3941 = vpack.c.b16 %v2929, %v2925
      %v3942 = vpack.c.b16 %v2934, %v2930
      %v3943 = vpack.c.b16 %v2935, %v2931
      %v3944 = vpack.c.b16 %v2936, %v2932
      %v3945 = vpack.c.b16 %v2937, %v2933
      %v3946 = vpack.c.b16 %v2942, %v2938
      %v3947 = vpack.c.b16 %v2943, %v2939
      %v3948 = vpack.c.b16 %v2944, %v2940
      %v3949 = vpack.c.b16 %v2945, %v2941
      %v3950 = vpack.c.b16 %v2950, %v2946
      %v3951 = vpack.c.b16 %v2951, %v2947
      %v3952 = vpack.c.b16 %v2952, %v2948
      %v3953 = vpack.c.b16 %v2953, %v2949
      %v3954 = vpack.c.b16 %v2958, %v2954
      %v3955 = vpack.c.b16 %v2959, %v2955
      %v3956 = vpack.c.b16 %v2960, %v2956
      %v3957 = vpack.c.b16 %v2961, %v2957
      %v3958 = vpack.c.b16 %v2966, %v2962
      %v3959 = vpack.c.b16 %v2967, %v2963
      %v3960 = vpack.c.b16 %v2968, %v2964
      %v3961 = vpack.c.b16 %v2969, %v2965
      %v3962 = vpack.c.b16 %v2974, %v2970
      %v3963 = vpack.c.b16 %v2975, %v2971
      %v3964 = vpack.c.b16 %v2976, %v2972
      %v3965 = vpack.c.b16 %v2977, %v2973
      %v3966 = vpack.c.b16 %v2982, %v2978
      %v3967 = vpack.c.b16 %v2983, %v2979
      %v3968 = vpack.c.b16 %v2984, %v2980
      %v3969 = vpack.c.b16 %v2985, %v2981
      %v3970 = vpack.c.b16 %v2990, %v2986
      %v3971 = vpack.c.b16 %v2991, %v2987
      %v3972 = vpack.c.b16 %v2992, %v2988
      %v3973 = vpack.c.b16 %v2993, %v2989
      %v3974 = vpack.c.b16 %v2998, %v2994
      %v3975 = vpack.c.b16 %v2999, %v2995
      %v3976 = vpack.c.b16 %v3000, %v2996
      %v3977 = vpack.c.b16 %v3001, %v2997
      %v3978 = vpack.c.b16 %v3006, %v3002
      %v3979 = vpack.c.b16 %v3007, %v3003
      %v3980 = vpack.c.b16 %v3008, %v3004
      %v3981 = vpack.c.b16 %v3009, %v3005
      %v3982 = vpack.c.b16 %v3014, %v3010
      %v3983 = vpack.c.b16 %v3015, %v3011
      %v3984 = vpack.c.b16 %v3016, %v3012
      %v3985 = vpack.c.b16 %v3017, %v3013
      %v3986 = vpack.c.b16 %v3022, %v3018
      %v3987 = vpack.c.b16 %v3023, %v3019
      %v3988 = vpack.c.b16 %v3024, %v3020
      %v3989 = vpack.c.b16 %v3025, %v3021
      %v3990 = vpack.c.b16 %v3030, %v3026
      %v3991 = vpack.c.b16 %v3031, %v3027
      %v3992 = vpack.c.b16 %v3032, %v3028
      %v3993 = vpack.c.b16 %v3033, %v3029
      %v3994 = vpack.c.b16 %v3038, %v3034
      %v3995 = vpack.c.b16 %v3039, %v3035
      %v3996 = vpack.c.b16 %v3040, %v3036
      %v3997 = vpack.c.b16 %v3041, %v3037
      %v3998 = vpack.c.b16 %v3046, %v3042
      %v3999 = vpack.c.b16 %v3047, %v3043
      %v4000 = vpack.c.b16 %v3048, %v3044
      %v4001 = vpack.c.b16 %v3049, %v3045
      %v4002 = vpack.c.b16 %v3054, %v3050
      %v4003 = vpack.c.b16 %v3055, %v3051
      %v4004 = vpack.c.b16 %v3056, %v3052
      %v4005 = vpack.c.b16 %v3057, %v3053
      %v4006 = vpack.c.b16 %v3062, %v3058
      %v4007 = vpack.c.b16 %v3063, %v3059
      %v4008 = vpack.c.b16 %v3064, %v3060
      %v4009 = vpack.c.b16 %v3065, %v3061
      %v4010 = vpack.c.b16 %v3070, %v3066
      %v4011 = vpack.c.b16 %v3071, %v3067
      %v4012 = vpack.c.b16 %v3072, %v3068
      %v4013 = vpack.c.b16 %v3073, %v3069
      %v4014 = vpack.c.b16 %v3078, %v3074
      %v4015 = vpack.c.b16 %v3079, %v3075
      %v4016 = vpack.c.b16 %v3080, %v3076
      %v4017 = vpack.c.b16 %v3081, %v3077
      %v4018 = vpack.c.b16 %v3086, %v3082
      %v4019 = vpack.c.b16 %v3087, %v3083
      %v4020 = vpack.c.b16 %v3088, %v3084
      %v4021 = vpack.c.b16 %v3089, %v3085
      %v4022 = vpack.c.b16 %v3094, %v3090
      %v4023 = vpack.c.b16 %v3095, %v3091
      %v4024 = vpack.c.b16 %v3096, %v3092
      %v4025 = vpack.c.b16 %v3097, %v3093
      %v4026 = vpack.c.b16 %v3102, %v3098
      %v4027 = vpack.c.b16 %v3103, %v3099
      %v4028 = vpack.c.b16 %v3104, %v3100
      %v4029 = vpack.c.b16 %v3105, %v3101
      %v4030 = vpack.c.b16 %v3110, %v3106
      %v4031 = vpack.c.b16 %v3111, %v3107
      %v4032 = vpack.c.b16 %v3112, %v3108
      %v4033 = vpack.c.b16 %v3113, %v3109
      %v4034 = vpack.c.b16 %v3118, %v3114
      %v4035 = vpack.c.b16 %v3119, %v3115
      %v4036 = vpack.c.b16 %v3120, %v3116
      %v4037 = vpack.c.b16 %v3121, %v3117
      %v4038 = vpack.c.b16 %v3126, %v3122
      %v4039 = vpack.c.b16 %v3127, %v3123
      %v4040 = vpack.c.b16 %v3128, %v3124
      %v4041 = vpack.c.b16 %v3129, %v3125
      %v4042 = vpack.c.b16 %v3134, %v3130
      %v4043 = vpack.c.b16 %v3135, %v3131
      %v4044 = vpack.c.b16 %v3136, %v3132
      %v4045 = vpack.c.b16 %v3137, %v3133
      %v4046 = vpack.c.b16 %v3142, %v3138
      %v4047 = vpack.c.b16 %v3143, %v3139
      %v4048 = vpack.c.b16 %v3144, %v3140
      %v4049 = vpack.c.b16 %v3145, %v3141
      %v4050 = vpack.c.b16 %v3150, %v3146
      %v4051 = vpack.c.b16 %v3151, %v3147
      %v4052 = vpack.c.b16 %v3152, %v3148
      %v4053 = vpack.c.b16 %v3153, %v3149
      %v4054 = vpack.c.b16 %v3158, %v3154
      %v4055 = vpack.c.b16 %v3159, %v3155
      %v4056 = vpack.c.b16 %v3160, %v3156
      %v4057 = vpack.c.b16 %v3161, %v3157
      %v4058 = vpack.c.b16 %v3166, %v3162
      %v4059 = vpack.c.b16 %v3167, %v3163
      %v4060 = vpack.c.b16 %v3168, %v3164
      %v4061 = vpack.c.b16 %v3169, %v3165
      %v4062 = vpack.c.b16 %v3174, %v3170
      %v4063 = vpack.c.b16 %v3175, %v3171
      %v4064 = vpack.c.b16 %v3176, %v3172
      %v4065 = vpack.c.b16 %v3177, %v3173
      %v4066 = vpack.c.b16 %v3182, %v3178
      %v4067 = vpack.c.b16 %v3183, %v3179
      %v4068 = vpack.c.b16 %v3184, %v3180
      %v4069 = vpack.c.b16 %v3185, %v3181
      %v4070 = vpack.c.b16 %v3190, %v3186
      %v4071 = vpack.c.b16 %v3191, %v3187
      %v4072 = vpack.c.b16 %v3192, %v3188
      %v4073 = vpack.c.b16 %v3193, %v3189
      %v4074 = vpack.c.b16 %v3198, %v3194
      %v4075 = vpack.c.b16 %v3199, %v3195
      %v4076 = vpack.c.b16 %v3200, %v3196
      %v4077 = vpack.c.b16 %v3201, %v3197
      %v4078 = vpack.c.b16 %v3206, %v3202
      %v4079 = vpack.c.b16 %v3207, %v3203
      %v4080 = vpack.c.b16 %v3208, %v3204
      %v4081 = vpack.c.b16 %v3209, %v3205
      %v4082 = vpack.c.b16 %v3214, %v3210
      %v4083 = vpack.c.b16 %v3215, %v3211
      %v4084 = vpack.c.b16 %v3216, %v3212
      %v4085 = vpack.c.b16 %v3217, %v3213
      %v4086 = vpack.c.b16 %v3222, %v3218
      %v4087 = vpack.c.b16 %v3223, %v3219
      %v4088 = vpack.c.b16 %v3224, %v3220
      %v4089 = vpack.c.b16 %v3225, %v3221
      %v4090 = vpack.c.b16 %v3230, %v3226
      %v4091 = vpack.c.b16 %v3231, %v3227
      %v4092 = vpack.c.b16 %v3232, %v3228
      %v4093 = vpack.c.b16 %v3233, %v3229
      %v4094 = vpack.c.b16 %v3238, %v3234
      %v4095 = vpack.c.b16 %v3239, %v3235
      %v4096 = vpack.c.b16 %v3240, %v3236
      %v4097 = vpack.c.b16 %v3241, %v3237
      %v4098 = vpack.c.b16 %v3246, %v3242
      %v4099 = vpack.c.b16 %v3247, %v3243
      %v4100 = vpack.c.b16 %v3248, %v3244
      %v4101 = vpack.c.b16 %v3249, %v3245
      %v4102 = vpack.c.b16 %v3254, %v3250
      %v4103 = vpack.c.b16 %v3255, %v3251
      %v4104 = vpack.c.b16 %v3256, %v3252
      %v4105 = vpack.c.b16 %v3257, %v3253
      %v4106 = vpack.c.b16 %v3262, %v3258
      %v4107 = vpack.c.b16 %v3263, %v3259
      %v4108 = vpack.c.b16 %v3264, %v3260
      %v4109 = vpack.c.b16 %v3265, %v3261
      %v4110 = vpack.c.b16 %v3270, %v3266
      %v4111 = vpack.c.b16 %v3271, %v3267
      %v4112 = vpack.c.b16 %v3272, %v3268
      %v4113 = vpack.c.b16 %v3273, %v3269
      %v4114 = vpack.c.b16 %v3278, %v3274
      %v4115 = vpack.c.b16 %v3279, %v3275
      %v4116 = vpack.c.b16 %v3280, %v3276
      %v4117 = vpack.c.b16 %v3281, %v3277
      %v4118 = vpack.c.b16 %v3286, %v3282
      %v4119 = vpack.c.b16 %v3287, %v3283
      %v4120 = vpack.c.b16 %v3288, %v3284
      %v4121 = vpack.c.b16 %v3289, %v3285
      %v4122 = vpack.c.b16 %v3294, %v3290
      %v4123 = vpack.c.b16 %v3295, %v3291
      %v4124 = vpack.c.b16 %v3296, %v3292
      %v4125 = vpack.c.b16 %v3297, %v3293
      %v4126 = vpack.c.b16 %v3302, %v3298
      %v4127 = vpack.c.b16 %v3303, %v3299
      %v4128 = vpack.c.b16 %v3304, %v3300
      %v4129 = vpack.c.b16 %v3305, %v3301
      %v4130 = vpack.c.b16 %v3310, %v3306
      %v4131 = vpack.c.b16 %v3311, %v3307
      %v4132 = vpack.c.b16 %v3312, %v3308
      %v4133 = vpack.c.b16 %v3313, %v3309
      %v4134 = vpack.c.b16 %v3318, %v3314
      %v4135 = vpack.c.b16 %v3319, %v3315
      %v4136 = vpack.c.b16 %v3320, %v3316
      %v4137 = vpack.c.b16 %v3321, %v3317
      %v4138 = vpack.c.b16 %v3326, %v3322
      %v4139 = vpack.c.b16 %v3327, %v3323
      %v4140 = vpack.c.b16 %v3328, %v3324
      %v4141 = vpack.c.b16 %v3329, %v3325
      %v4142 = vpack.c.b16 %v3334, %v3330
      %v4143 = vpack.c.b16 %v3335, %v3331
      %v4144 = vpack.c.b16 %v3336, %v3332
      %v4145 = vpack.c.b16 %v3337, %v3333
      %v4146 = vpack.c.b16 %v3342, %v3338
      %v4147 = vpack.c.b16 %v3343, %v3339
      %v4148 = vpack.c.b16 %v3344, %v3340
      %v4149 = vpack.c.b16 %v3345, %v3341
      %v4150 = vpack.c.b16 %v3350, %v3346
      %v4151 = vpack.c.b16 %v3351, %v3347
      %v4152 = vpack.c.b16 %v3352, %v3348
      %v4153 = vpack.c.b16 %v3353, %v3349
      %v4154 = vpack.c.b16 %v3358, %v3354
      %v4155 = vpack.c.b16 %v3359, %v3355
      %v4156 = vpack.c.b16 %v3360, %v3356
      %v4157 = vpack.c.b16 %v3361, %v3357
      %v4158 = vpack.c.b16 %v3366, %v3362
      %v4159 = vpack.c.b16 %v3367, %v3363
      %v4160 = vpack.c.b16 %v3368, %v3364
      %v4161 = vpack.c.b16 %v3369, %v3365
      %v4162 = vpack.c.b16 %v3374, %v3370
      %v4163 = vpack.c.b16 %v3375, %v3371
      %v4164 = vpack.c.b16 %v3376, %v3372
      %v4165 = vpack.c.b16 %v3377, %v3373
      %v4166 = vpack.c.b16 %v3382, %v3378
      %v4167 = vpack.c.b16 %v3383, %v3379
      %v4168 = vpack.c.b16 %v3384, %v3380
      %v4169 = vpack.c.b16 %v3385, %v3381
      %v4170 = vpack.c.b16 %v3390, %v3386
      %v4171 = vpack.c.b16 %v3391, %v3387
      %v4172 = vpack.c.b16 %v3392, %v3388
      %v4173 = vpack.c.b16 %v3393, %v3389
      %v4174 = vpack.c.b16 %v3398, %v3394
      %v4175 = vpack.c.b16 %v3399, %v3395
      %v4176 = vpack.c.b16 %v3400, %v3396
      %v4177 = vpack.c.b16 %v3401, %v3397
      %v4178 = vpack.c.b16 %v3406, %v3402
      %v4179 = vpack.c.b16 %v3407, %v3403
      %v4180 = vpack.c.b16 %v3408, %v3404
      %v4181 = vpack.c.b16 %v3409, %v3405
      %v4182 = vpack.c.b16 %v3414, %v3410
      %v4183 = vpack.c.b16 %v3415, %v3411
      %v4184 = vpack.c.b16 %v3416, %v3412
      %v4185 = vpack.c.b16 %v3417, %v3413
      %4954 = vmatprep.subr.bf16.mxu0 %v3419
      %4955 = vmatpush1.bf16.msra.mxu0 %v3418
      %4956 = vmatprep.subr.bf16.mxu0 %v3423
      %4957 = vmatpush1.bf16.msra.mxu0 %v3422
      %4958 = vmatprep.subr.bf16.mxu0 %v3427
      %4959 = vmatpush1.bf16.msra.mxu0 %v3426
      %4960 = vmatprep.subr.bf16.mxu0 %v3431
      %4961 = vmatpush1.bf16.msra.mxu0 %v3430
      %4962 = vmatprep.subr.bf16.mxu0 %v3435
      %4963 = vmatpush1.bf16.msra.mxu0 %v3434
      %4964 = vmatprep.subr.bf16.mxu0 %v3439
      %4965 = vmatpush1.bf16.msra.mxu0 %v3438
      %4966 = vmatprep.subr.bf16.mxu0 %v3443
      %4967 = vmatpush1.bf16.msra.mxu0 %v3442
      %4968 = vmatprep.subr.bf16.mxu0 %v3447
      %4969 = vmatpush1.bf16.msra.mxu0 %v3446
      %4970 = vmatprep.subr.bf16.mxu0 %v3451
      %4971 = vmatpush1.bf16.msra.mxu0 %v3450
      %4972 = vmatprep.subr.bf16.mxu0 %v3455
      %4973 = vmatpush1.bf16.msra.mxu0 %v3454
      %4974 = vmatprep.subr.bf16.mxu0 %v3459
      %4975 = vmatpush1.bf16.msra.mxu0 %v3458
      %4976 = vmatprep.subr.bf16.mxu0 %v3463
      %4977 = vmatpush1.bf16.msra.mxu0 %v3462
      %4978 = vmatprep.subr.bf16.mxu0 %v3467
      %4979 = vmatpush1.bf16.msra.mxu0 %v3466
      %4980 = vmatprep.subr.bf16.mxu0 %v3471
      %4981 = vmatpush1.bf16.msra.mxu0 %v3470
      %4982 = vmatprep.subr.bf16.mxu0 %v3475
      %4983 = vmatpush1.bf16.msra.mxu0 %v3474
      %4984 = vmatprep.subr.bf16.mxu0 %v3479
      %4985 = vmatpush1.bf16.msra.mxu0 %v3478
      %4986 = vmatprep.mubr.bf16.mxu0 %v1067
      %4987 = vmatmul.mubr.bf16.gmra.mrb[0].mxu0 %v1066
      %v4988 = vpop.f32.mrb[0].mxu0
      %v4989 = vadd.f32 0.0, %v4988
      %v4990 = vpop.f32.mrb[0].mxu0
      %v4991 = vadd.f32 0.0, %v4990
      %v4992 = vpop.f32.mrb[0].mxu0
      %v4993 = vpop.f32.mrb[0].mxu0
      %4994 = vdwg.mxu0
      %4995 = vmatprep.subr.bf16.mxu0 %v3483
      %4996 = vmatpush1.bf16.msra.mxu0 %v3482
      %4997 = vmatprep.subr.bf16.mxu0 %v3487
      %4998 = vmatpush1.bf16.msra.mxu0 %v3486
      %4999 = vmatprep.subr.bf16.mxu0 %v3491
      %5000 = vmatpush1.bf16.msra.mxu0 %v3490
      %5001 = vmatprep.subr.bf16.mxu0 %v3495
      %5002 = vmatpush1.bf16.msra.mxu0 %v3494
      %5003 = vmatprep.subr.bf16.mxu0 %v3499
      %5004 = vmatpush1.bf16.msra.mxu0 %v3498
      %5005 = vmatprep.subr.bf16.mxu0 %v3503
      %5006 = vmatpush1.bf16.msra.mxu0 %v3502
      %5007 = vmatprep.subr.bf16.mxu0 %v3507
      %5008 = vmatpush1.bf16.msra.mxu0 %v3506
      %5009 = vmatprep.subr.bf16.mxu0 %v3511
      %5010 = vmatpush1.bf16.msra.mxu0 %v3510
      %5011 = vmatprep.subr.bf16.mxu0 %v3515
      %5012 = vmatpush1.bf16.msra.mxu0 %v3514
      %5013 = vmatprep.subr.bf16.mxu0 %v3519
      %5014 = vmatpush1.bf16.msra.mxu0 %v3518
      %5015 = vmatprep.subr.bf16.mxu0 %v3523
      %5016 = vmatpush1.bf16.msra.mxu0 %v3522
      %5017 = vmatprep.subr.bf16.mxu0 %v3527
      %5018 = vmatpush1.bf16.msra.mxu0 %v3526
      %5019 = vmatprep.subr.bf16.mxu0 %v3531
      %5020 = vmatpush1.bf16.msra.mxu0 %v3530
      %5021 = vmatprep.subr.bf16.mxu0 %v3535
      %5022 = vmatpush1.bf16.msra.mxu0 %v3534
      %5023 = vmatprep.subr.bf16.mxu0 %v3539
      %5024 = vmatpush1.bf16.msra.mxu0 %v3538
      %5025 = vmatprep.subr.bf16.mxu0 %v3543
      %5026 = vmatpush1.bf16.msra.mxu0 %v3542
      %5027 = vmatprep.mubr.bf16.mxu0 %v1069
      %5028 = vmatmul.mubr.bf16.gmra.mrb[0].mxu0 %v1068
      %v5029 = vpop.f32.mrb[0].mxu0
      %v5030 = vadd.f32 %v4989, %v5029
      %v5031 = vpop.f32.mrb[0].mxu0
      %v5032 = vadd.f32 %v4991, %v5031
      %v5033 = vpop.f32.mrb[0].mxu0
      %v5034 = vpop.f32.mrb[0].mxu0
      %5035 = vdwg.mxu0
      %5036 = vmatprep.subr.bf16.mxu0 %v3547
      %5037 = vmatpush1.bf16.msra.mxu0 %v3546
      %5038 = vmatprep.subr.bf16.mxu0 %v3551
      %5039 = vmatpush1.bf16.msra.mxu0 %v3550
      %5040 = vmatprep.subr.bf16.mxu0 %v3555
      %5041 = vmatpush1.bf16.msra.mxu0 %v3554
      %5042 = vmatprep.subr.bf16.mxu0 %v3559
      %5043 = vmatpush1.bf16.msra.mxu0 %v3558
      %5044 = vmatprep.subr.bf16.mxu0 %v3563
      %5045 = vmatpush1.bf16.msra.mxu0 %v3562
      %5046 = vmatprep.subr.bf16.mxu0 %v3567
      %5047 = vmatpush1.bf16.msra.mxu0 %v3566
      %5048 = vmatprep.subr.bf16.mxu0 %v3571
      %5049 = vmatpush1.bf16.msra.mxu0 %v3570
      %5050 = vmatprep.subr.bf16.mxu0 %v3575
      %5051 = vmatpush1.bf16.msra.mxu0 %v3574
      %5052 = vmatprep.subr.bf16.mxu0 %v3579
      %5053 = vmatpush1.bf16.msra.mxu0 %v3578
      %5054 = vmatprep.subr.bf16.mxu0 %v3583
      %5055 = vmatpush1.bf16.msra.mxu0 %v3582
      %5056 = vmatprep.subr.bf16.mxu0 %v3587
      %5057 = vmatpush1.bf16.msra.mxu0 %v3586
      %5058 = vmatprep.subr.bf16.mxu0 %v3591
      %5059 = vmatpush1.bf16.msra.mxu0 %v3590
      %5060 = vmatprep.subr.bf16.mxu0 %v3595
      %5061 = vmatpush1.bf16.msra.mxu0 %v3594
      %5062 = vmatprep.subr.bf16.mxu0 %v3599
      %5063 = vmatpush1.bf16.msra.mxu0 %v3598
      %5064 = vmatprep.subr.bf16.mxu0 %v3603
      %5065 = vmatpush1.bf16.msra.mxu0 %v3602
      %5066 = vmatprep.subr.bf16.mxu0 %v3607
      %5067 = vmatpush1.bf16.msra.mxu0 %v3606
      %5068 = vmatprep.mubr.bf16.mxu0 %v1071
      %5069 = vmatmul.mubr.bf16.gmra.mrb[0].mxu0 %v1070
      %v5070 = vpop.f32.mrb[0].mxu0
      %v5071 = vadd.f32 %v5030, %v5070
      %v5072 = vpop.f32.mrb[0].mxu0
      %v5073 = vadd.f32 %v5032, %v5072
      %v5074 = vpop.f32.mrb[0].mxu0
      %v5075 = vpop.f32.mrb[0].mxu0
      %5076 = vdwg.mxu0
      %5077 = vmatprep.subr.bf16.mxu0 %v3611
      %5078 = vmatpush1.bf16.msra.mxu0 %v3610
      %5079 = vmatprep.subr.bf16.mxu0 %v3615
      %5080 = vmatpush1.bf16.msra.mxu0 %v3614
      %5081 = vmatprep.subr.bf16.mxu0 %v3619
      %5082 = vmatpush1.bf16.msra.mxu0 %v3618
      %5083 = vmatprep.subr.bf16.mxu0 %v3623
      %5084 = vmatpush1.bf16.msra.mxu0 %v3622
      %5085 = vmatprep.subr.bf16.mxu0 %v3627
      %5086 = vmatpush1.bf16.msra.mxu0 %v3626
      %5087 = vmatprep.subr.bf16.mxu0 %v3631
      %5088 = vmatpush1.bf16.msra.mxu0 %v3630
      %5089 = vmatprep.subr.bf16.mxu0 %v3635
      %5090 = vmatpush1.bf16.msra.mxu0 %v3634
      %5091 = vmatprep.subr.bf16.mxu0 %v3639
      %5092 = vmatpush1.bf16.msra.mxu0 %v3638
      %5093 = vmatprep.subr.bf16.mxu0 %v3643
      %5094 = vmatpush1.bf16.msra.mxu0 %v3642
      %5095 = vmatprep.subr.bf16.mxu0 %v3647
      %5096 = vmatpush1.bf16.msra.mxu0 %v3646
      %5097 = vmatprep.subr.bf16.mxu0 %v3651
      %5098 = vmatpush1.bf16.msra.mxu0 %v3650
      %5099 = vmatprep.subr.bf16.mxu0 %v3655
      %5100 = vmatpush1.bf16.msra.mxu0 %v3654
      %5101 = vmatprep.subr.bf16.mxu0 %v3659
      %5102 = vmatpush1.bf16.msra.mxu0 %v3658
      %5103 = vmatprep.subr.bf16.mxu0 %v3663
      %5104 = vmatpush1.bf16.msra.mxu0 %v3662
      %5105 = vmatprep.subr.bf16.mxu0 %v3667
      %5106 = vmatpush1.bf16.msra.mxu0 %v3666
      %5107 = vmatprep.subr.bf16.mxu0 %v3671
      %5108 = vmatpush1.bf16.msra.mxu0 %v3670
      %5109 = vmatprep.mubr.bf16.mxu0 %v1073
      %5110 = vmatmul.mubr.bf16.gmra.mrb[0].mxu0 %v1072
      %v5111 = vpop.f32.mrb[0].mxu0
      %v5112 = vadd.f32 %v5071, %v5111
      %v5113 = vpop.f32.mrb[0].mxu0
      %v5114 = vadd.f32 %v5073, %v5113
      %v5115 = vpop.f32.mrb[0].mxu0
      %v5116 = vpop.f32.mrb[0].mxu0
      %5117 = vdwg.mxu0
      %5118 = vmatprep.subr.bf16.mxu0 %v3675
      %5119 = vmatpush1.bf16.msra.mxu0 %v3674
      %5120 = vmatprep.subr.bf16.mxu0 %v3679
      %5121 = vmatpush1.bf16.msra.mxu0 %v3678
      %5122 = vmatprep.subr.bf16.mxu0 %v3683
      %5123 = vmatpush1.bf16.msra.mxu0 %v3682
      %5124 = vmatprep.subr.bf16.mxu0 %v3687
      %5125 = vmatpush1.bf16.msra.mxu0 %v3686
      %5126 = vmatprep.subr.bf16.mxu0 %v3691
      %5127 = vmatpush1.bf16.msra.mxu0 %v3690
      %5128 = vmatprep.subr.bf16.mxu0 %v3695
      %5129 = vmatpush1.bf16.msra.mxu0 %v3694
      %5130 = vmatprep.subr.bf16.mxu0 %v3699
      %5131 = vmatpush1.bf16.msra.mxu0 %v3698
      %5132 = vmatprep.subr.bf16.mxu0 %v3703
      %5133 = vmatpush1.bf16.msra.mxu0 %v3702
      %5134 = vmatprep.subr.bf16.mxu0 %v3707
      %5135 = vmatpush1.bf16.msra.mxu0 %v3706
      %5136 = vmatprep.subr.bf16.mxu0 %v3711
      %5137 = vmatpush1.bf16.msra.mxu0 %v3710
      %5138 = vmatprep.subr.bf16.mxu0 %v3715
      %5139 = vmatpush1.bf16.msra.mxu0 %v3714
      %5140 = vmatprep.subr.bf16.mxu0 %v3719
      %5141 = vmatpush1.bf16.msra.mxu0 %v3718
      %5142 = vmatprep.subr.bf16.mxu0 %v3723
      %5143 = vmatpush1.bf16.msra.mxu0 %v3722
      %5144 = vmatprep.subr.bf16.mxu0 %v3727
      %5145 = vmatpush1.bf16.msra.mxu0 %v3726
      %5146 = vmatprep.subr.bf16.mxu0 %v3731
      %5147 = vmatpush1.bf16.msra.mxu0 %v3730
      %5148 = vmatprep.subr.bf16.mxu0 %v3735
      %5149 = vmatpush1.bf16.msra.mxu0 %v3734
      %5150 = vmatprep.mubr.bf16.mxu0 %v1075
      %5151 = vmatmul.mubr.bf16.gmra.mrb[0].mxu0 %v1074
      %v5152 = vpop.f32.mrb[0].mxu0
      %v5153 = vadd.f32 %v5112, %v5152
      %v5154 = vpop.f32.mrb[0].mxu0
      %v5155 = vadd.f32 %v5114, %v5154
      %v5156 = vpop.f32.mrb[0].mxu0
      %v5157 = vpop.f32.mrb[0].mxu0
      %5158 = vdwg.mxu0
      %5159 = vmatprep.subr.bf16.mxu0 %v3739
      %5160 = vmatpush1.bf16.msra.mxu0 %v3738
      %5161 = vmatprep.subr.bf16.mxu0 %v3743
      %5162 = vmatpush1.bf16.msra.mxu0 %v3742
      %5163 = vmatprep.subr.bf16.mxu0 %v3747
      %5164 = vmatpush1.bf16.msra.mxu0 %v3746
      %5165 = vmatprep.subr.bf16.mxu0 %v3751
      %5166 = vmatpush1.bf16.msra.mxu0 %v3750
      %5167 = vmatprep.subr.bf16.mxu0 %v3755
      %5168 = vmatpush1.bf16.msra.mxu0 %v3754
      %5169 = vmatprep.subr.bf16.mxu0 %v3759
      %5170 = vmatpush1.bf16.msra.mxu0 %v3758
      %5171 = vmatprep.subr.bf16.mxu0 %v3763
      %5172 = vmatpush1.bf16.msra.mxu0 %v3762
      %5173 = vmatprep.subr.bf16.mxu0 %v3767
      %5174 = vmatpush1.bf16.msra.mxu0 %v3766
      %5175 = vmatprep.subr.bf16.mxu0 %v3771
      %5176 = vmatpush1.bf16.msra.mxu0 %v3770
      %5177 = vmatprep.subr.bf16.mxu0 %v3775
      %5178 = vmatpush1.bf16.msra.mxu0 %v3774
      %5179 = vmatprep.subr.bf16.mxu0 %v3779
      %5180 = vmatpush1.bf16.msra.mxu0 %v3778
      %5181 = vmatprep.subr.bf16.mxu0 %v3783
      %5182 = vmatpush1.bf16.msra.mxu0 %v3782
      %5183 = vmatprep.subr.bf16.mxu0 %v3787
      %5184 = vmatpush1.bf16.msra.mxu0 %v3786
      %5185 = vmatprep.subr.bf16.mxu0 %v3791
      %5186 = vmatpush1.bf16.msra.mxu0 %v3790
      %5187 = vmatprep.subr.bf16.mxu0 %v3795
      %5188 = vmatpush1.bf16.msra.mxu0 %v3794
      %5189 = vmatprep.subr.bf16.mxu0 %v3799
      %5190 = vmatpush1.bf16.msra.mxu0 %v3798
      %5191 = vmatprep.mubr.bf16.mxu0 %v1077
      %5192 = vmatmul.mubr.bf16.gmra.mrb[0].mxu0 %v1076
      %v5193 = vpop.f32.mrb[0].mxu0
      %v5194 = vadd.f32 %v5153, %v5193
      %v5195 = vpop.f32.mrb[0].mxu0
      %v5196 = vadd.f32 %v5155, %v5195
      %v5197 = vpop.f32.mrb[0].mxu0
      %v5198 = vpop.f32.mrb[0].mxu0
      %5199 = vdwg.mxu0
      %5200 = vmatprep.subr.bf16.mxu0 %v3803
      %5201 = vmatpush1.bf16.msra.mxu0 %v3802
      %5202 = vmatprep.subr.bf16.mxu0 %v3807
      %5203 = vmatpush1.bf16.msra.mxu0 %v3806
      %5204 = vmatprep.subr.bf16.mxu0 %v3811
      %5205 = vmatpush1.bf16.msra.mxu0 %v3810
      %5206 = vmatprep.subr.bf16.mxu0 %v3815
      %5207 = vmatpush1.bf16.msra.mxu0 %v3814
      %5208 = vmatprep.subr.bf16.mxu0 %v3819
      %5209 = vmatpush1.bf16.msra.mxu0 %v3818
      %5210 = vmatprep.subr.bf16.mxu0 %v3823
      %5211 = vmatpush1.bf16.msra.mxu0 %v3822
      %5212 = vmatprep.subr.bf16.mxu0 %v3827
      %5213 = vmatpush1.bf16.msra.mxu0 %v3826
      %5214 = vmatprep.subr.bf16.mxu0 %v3831
      %5215 = vmatpush1.bf16.msra.mxu0 %v3830
      %5216 = vmatprep.subr.bf16.mxu0 %v3835
      %5217 = vmatpush1.bf16.msra.mxu0 %v3834
      %5218 = vmatprep.subr.bf16.mxu0 %v3839
      %5219 = vmatpush1.bf16.msra.mxu0 %v3838
      %5220 = vmatprep.subr.bf16.mxu0 %v3843
      %5221 = vmatpush1.bf16.msra.mxu0 %v3842
      %5222 = vmatprep.subr.bf16.mxu0 %v3847
      %5223 = vmatpush1.bf16.msra.mxu0 %v3846
      %5224 = vmatprep.subr.bf16.mxu0 %v3851
      %5225 = vmatpush1.bf16.msra.mxu0 %v3850
      %5226 = vmatprep.subr.bf16.mxu0 %v3855
      %5227 = vmatpush1.bf16.msra.mxu0 %v3854
      %5228 = vmatprep.subr.bf16.mxu0 %v3859
      %5229 = vmatpush1.bf16.msra.mxu0 %v3858
      %5230 = vmatprep.subr.bf16.mxu0 %v3863
      %5231 = vmatpush1.bf16.msra.mxu0 %v3862
      %5232 = vmatprep.mubr.bf16.mxu0 %v1079
      %5233 = vmatmul.mubr.bf16.gmra.mrb[0].mxu0 %v1078
      %v5234 = vpop.f32.mrb[0].mxu0
      %v5235 = vadd.f32 %v5194, %v5234
      %v5236 = vpop.f32.mrb[0].mxu0
      %v5237 = vadd.f32 %v5196, %v5236
      %v5238 = vpop.f32.mrb[0].mxu0
      %v5239 = vpop.f32.mrb[0].mxu0
      %5240 = vdwg.mxu0
      %5241 = vmatprep.subr.bf16.mxu0 %v3867
      %5242 = vmatpush1.bf16.msra.mxu0 %v3866
      %5243 = vmatprep.subr.bf16.mxu0 %v3871
      %5244 = vmatpush1.bf16.msra.mxu0 %v3870
      %5245 = vmatprep.subr.bf16.mxu0 %v3875
      %5246 = vmatpush1.bf16.msra.mxu0 %v3874
      %5247 = vmatprep.subr.bf16.mxu0 %v3879
      %5248 = vmatpush1.bf16.msra.mxu0 %v3878
      %5249 = vmatprep.subr.bf16.mxu0 %v3883
      %5250 = vmatpush1.bf16.msra.mxu0 %v3882
      %5251 = vmatprep.subr.bf16.mxu0 %v3887
      %5252 = vmatpush1.bf16.msra.mxu0 %v3886
      %5253 = vmatprep.subr.bf16.mxu0 %v3891
      %5254 = vmatpush1.bf16.msra.mxu0 %v3890
      %5255 = vmatprep.subr.bf16.mxu0 %v3895
      %5256 = vmatpush1.bf16.msra.mxu0 %v3894
      %5257 = vmatprep.subr.bf16.mxu0 %v3899
      %5258 = vmatpush1.bf16.msra.mxu0 %v3898
      %5259 = vmatprep.subr.bf16.mxu0 %v3903
      %5260 = vmatpush1.bf16.msra.mxu0 %v3902
      %5261 = vmatprep.subr.bf16.mxu0 %v3907
      %5262 = vmatpush1.bf16.msra.mxu0 %v3906
      %5263 = vmatprep.subr.bf16.mxu0 %v3911
      %5264 = vmatpush1.bf16.msra.mxu0 %v3910
      %5265 = vmatprep.subr.bf16.mxu0 %v3915
      %5266 = vmatpush1.bf16.msra.mxu0 %v3914
      %5267 = vmatprep.subr.bf16.mxu0 %v3919
      %5268 = vmatpush1.bf16.msra.mxu0 %v3918
      %5269 = vmatprep.subr.bf16.mxu0 %v3923
      %5270 = vmatpush1.bf16.msra.mxu0 %v3922
      %5271 = vmatprep.subr.bf16.mxu0 %v3927
      %5272 = vmatpush1.bf16.msra.mxu0 %v3926
      %5273 = vmatprep.mubr.bf16.mxu0 %v1081
      %5274 = vmatmul.mubr.bf16.gmra.mrb[0].mxu0 %v1080
      %v5275 = vpop.f32.mrb[0].mxu0
      %v5276 = vadd.f32 %v5235, %v5275
      %v5277 = vpop.f32.mrb[0].mxu0
      %v5278 = vadd.f32 %v5237, %v5277
      %v5279 = vpop.f32.mrb[0].mxu0
      %v5280 = vpop.f32.mrb[0].mxu0
      %5281 = vdwg.mxu0
      %5282 = vmatprep.subr.bf16.mxu0 %v3931
      %5283 = vmatpush1.bf16.msra.mxu0 %v3930
      %5284 = vmatprep.subr.bf16.mxu0 %v3935
      %5285 = vmatpush1.bf16.msra.mxu0 %v3934
      %5286 = vmatprep.subr.bf16.mxu0 %v3939
      %5287 = vmatpush1.bf16.msra.mxu0 %v3938
      %5288 = vmatprep.subr.bf16.mxu0 %v3943
      %5289 = vmatpush1.bf16.msra.mxu0 %v3942
      %5290 = vmatprep.subr.bf16.mxu0 %v3947
      %5291 = vmatpush1.bf16.msra.mxu0 %v3946
      %5292 = vmatprep.subr.bf16.mxu0 %v3951
      %5293 = vmatpush1.bf16.msra.mxu0 %v3950
      %5294 = vmatprep.subr.bf16.mxu0 %v3955
      %5295 = vmatpush1.bf16.msra.mxu0 %v3954
      %5296 = vmatprep.subr.bf16.mxu0 %v3959
      %5297 = vmatpush1.bf16.msra.mxu0 %v3958
      %5298 = vmatprep.subr.bf16.mxu0 %v3963
      %5299 = vmatpush1.bf16.msra.mxu0 %v3962
      %5300 = vmatprep.subr.bf16.mxu0 %v3967
      %5301 = vmatpush1.bf16.msra.mxu0 %v3966
      %5302 = vmatprep.subr.bf16.mxu0 %v3971
      %5303 = vmatpush1.bf16.msra.mxu0 %v3970
      %5304 = vmatprep.subr.bf16.mxu0 %v3975
      %5305 = vmatpush1.bf16.msra.mxu0 %v3974
      %5306 = vmatprep.subr.bf16.mxu0 %v3979
      %5307 = vmatpush1.bf16.msra.mxu0 %v3978
      %5308 = vmatprep.subr.bf16.mxu0 %v3983
      %5309 = vmatpush1.bf16.msra.mxu0 %v3982
      %5310 = vmatprep.subr.bf16.mxu0 %v3987
      %5311 = vmatpush1.bf16.msra.mxu0 %v3986
      %5312 = vmatprep.subr.bf16.mxu0 %v3991
      %5313 = vmatpush1.bf16.msra.mxu0 %v3990
      %5314 = vmatprep.mubr.bf16.mxu0 %v1083
      %5315 = vmatmul.mubr.bf16.gmra.mrb[0].mxu0 %v1082
      %v5316 = vpop.f32.mrb[0].mxu0
      %v5317 = vadd.f32 %v5276, %v5316
      %v5318 = vpop.f32.mrb[0].mxu0
      %v5319 = vadd.f32 %v5278, %v5318
      %v5320 = vpop.f32.mrb[0].mxu0
      %v5321 = vpop.f32.mrb[0].mxu0
      %5322 = vdwg.mxu0
      %5323 = vmatprep.subr.bf16.mxu0 %v3995
      %5324 = vmatpush1.bf16.msra.mxu0 %v3994
      %5325 = vmatprep.subr.bf16.mxu0 %v3999
      %5326 = vmatpush1.bf16.msra.mxu0 %v3998
      %5327 = vmatprep.subr.bf16.mxu0 %v4003
      %5328 = vmatpush1.bf16.msra.mxu0 %v4002
      %5329 = vmatprep.subr.bf16.mxu0 %v4007
      %5330 = vmatpush1.bf16.msra.mxu0 %v4006
      %5331 = vmatprep.subr.bf16.mxu0 %v4011
      %5332 = vmatpush1.bf16.msra.mxu0 %v4010
      %5333 = vmatprep.subr.bf16.mxu0 %v4015
      %5334 = vmatpush1.bf16.msra.mxu0 %v4014
      %5335 = vmatprep.subr.bf16.mxu0 %v4019
      %5336 = vmatpush1.bf16.msra.mxu0 %v4018
      %5337 = vmatprep.subr.bf16.mxu0 %v4023
      %5338 = vmatpush1.bf16.msra.mxu0 %v4022
      %5339 = vmatprep.subr.bf16.mxu0 %v4027
      %5340 = vmatpush1.bf16.msra.mxu0 %v4026
      %5341 = vmatprep.subr.bf16.mxu0 %v4031
      %5342 = vmatpush1.bf16.msra.mxu0 %v4030
      %5343 = vmatprep.subr.bf16.mxu0 %v4035
      %5344 = vmatpush1.bf16.msra.mxu0 %v4034
      %5345 = vmatprep.subr.bf16.mxu0 %v4039
      %5346 = vmatpush1.bf16.msra.mxu0 %v4038
      %5347 = vmatprep.subr.bf16.mxu0 %v4043
      %5348 = vmatpush1.bf16.msra.mxu0 %v4042
      %5349 = vmatprep.subr.bf16.mxu0 %v4047
      %5350 = vmatpush1.bf16.msra.mxu0 %v4046
      %5351 = vmatprep.subr.bf16.mxu0 %v4051
      %5352 = vmatpush1.bf16.msra.mxu0 %v4050
      %5353 = vmatprep.subr.bf16.mxu0 %v4055
      %5354 = vmatpush1.bf16.msra.mxu0 %v4054
      %5355 = vmatprep.mubr.bf16.mxu0 %v1085
      %5356 = vmatmul.mubr.bf16.gmra.mrb[0].mxu0 %v1084
      %v5357 = vpop.f32.mrb[0].mxu0
      %v5358 = vadd.f32 %v5317, %v5357
      %v5359 = vpop.f32.mrb[0].mxu0
      %v5360 = vadd.f32 %v5319, %v5359
      %v5361 = vpop.f32.mrb[0].mxu0
      %v5362 = vpop.f32.mrb[0].mxu0
      %5363 = vdwg.mxu0
      %5364 = vmatprep.subr.bf16.mxu0 %v4059
      %5365 = vmatpush1.bf16.msra.mxu0 %v4058
      %5366 = vmatprep.subr.bf16.mxu0 %v4063
      %5367 = vmatpush1.bf16.msra.mxu0 %v4062
      %5368 = vmatprep.subr.bf16.mxu0 %v4067
      %5369 = vmatpush1.bf16.msra.mxu0 %v4066
      %5370 = vmatprep.subr.bf16.mxu0 %v4071
      %5371 = vmatpush1.bf16.msra.mxu0 %v4070
      %5372 = vmatprep.subr.bf16.mxu0 %v4075
      %5373 = vmatpush1.bf16.msra.mxu0 %v4074
      %5374 = vmatprep.subr.bf16.mxu0 %v4079
      %5375 = vmatpush1.bf16.msra.mxu0 %v4078
      %5376 = vmatprep.subr.bf16.mxu0 %v4083
      %5377 = vmatpush1.bf16.msra.mxu0 %v4082
      %5378 = vmatprep.subr.bf16.mxu0 %v4087
      %5379 = vmatpush1.bf16.msra.mxu0 %v4086
      %5380 = vmatprep.subr.bf16.mxu0 %v4091
      %5381 = vmatpush1.bf16.msra.mxu0 %v4090
      %5382 = vmatprep.subr.bf16.mxu0 %v4095
      %5383 = vmatpush1.bf16.msra.mxu0 %v4094
      %5384 = vmatprep.subr.bf16.mxu0 %v4099
      %5385 = vmatpush1.bf16.msra.mxu0 %v4098
      %5386 = vmatprep.subr.bf16.mxu0 %v4103
      %5387 = vmatpush1.bf16.msra.mxu0 %v4102
      %5388 = vmatprep.subr.bf16.mxu0 %v4107
      %5389 = vmatpush1.bf16.msra.mxu0 %v4106
      %5390 = vmatprep.subr.bf16.mxu0 %v4111
      %5391 = vmatpush1.bf16.msra.mxu0 %v4110
      %5392 = vmatprep.subr.bf16.mxu0 %v4115
      %5393 = vmatpush1.bf16.msra.mxu0 %v4114
      %5394 = vmatprep.subr.bf16.mxu0 %v4119
      %5395 = vmatpush1.bf16.msra.mxu0 %v4118
      %5396 = vmatprep.mubr.bf16.mxu0 %v1087
      %5397 = vmatmul.mubr.bf16.gmra.mrb[0].mxu0 %v1086
      %v5398 = vpop.f32.mrb[0].mxu0
      %v5399 = vadd.f32 %v5358, %v5398
      %v5400 = vpop.f32.mrb[0].mxu0
      %v5401 = vadd.f32 %v5360, %v5400
      %v5402 = vpop.f32.mrb[0].mxu0
      %v5403 = vpop.f32.mrb[0].mxu0
      %5404 = vdwg.mxu0
      %5405 = vmatprep.subr.bf16.mxu0 %v4123
      %5406 = vmatpush1.bf16.msra.mxu0 %v4122
      %5407 = vmatprep.subr.bf16.mxu0 %v4127
      %5408 = vmatpush1.bf16.msra.mxu0 %v4126
      %5409 = vmatprep.subr.bf16.mxu0 %v4131
      %5410 = vmatpush1.bf16.msra.mxu0 %v4130
      %5411 = vmatprep.subr.bf16.mxu0 %v4135
      %5412 = vmatpush1.bf16.msra.mxu0 %v4134
      %5413 = vmatprep.subr.bf16.mxu0 %v4139
      %5414 = vmatpush1.bf16.msra.mxu0 %v4138
      %5415 = vmatprep.subr.bf16.mxu0 %v4143
      %5416 = vmatpush1.bf16.msra.mxu0 %v4142
      %5417 = vmatprep.subr.bf16.mxu0 %v4147
      %5418 = vmatpush1.bf16.msra.mxu0 %v4146
      %5419 = vmatprep.subr.bf16.mxu0 %v4151
      %5420 = vmatpush1.bf16.msra.mxu0 %v4150
      %5421 = vmatprep.subr.bf16.mxu0 %v4155
      %5422 = vmatpush1.bf16.msra.mxu0 %v4154
      %5423 = vmatprep.subr.bf16.mxu0 %v4159
      %5424 = vmatpush1.bf16.msra.mxu0 %v4158
      %5425 = vmatprep.subr.bf16.mxu0 %v4163
      %5426 = vmatpush1.bf16.msra.mxu0 %v4162
      %5427 = vmatprep.subr.bf16.mxu0 %v4167
      %5428 = vmatpush1.bf16.msra.mxu0 %v4166
      %5429 = vmatprep.subr.bf16.mxu0 %v4171
      %5430 = vmatpush1.bf16.msra.mxu0 %v4170
      %5431 = vmatprep.subr.bf16.mxu0 %v4175
      %5432 = vmatpush1.bf16.msra.mxu0 %v4174
      %5433 = vmatprep.subr.bf16.mxu0 %v4179
      %5434 = vmatpush1.bf16.msra.mxu0 %v4178
      %5435 = vmatprep.subr.bf16.mxu0 %v4183
      %5436 = vmatpush1.bf16.msra.mxu0 %v4182
      %5437 = vmatprep.mubr.bf16.mxu0 %v1089
      %5438 = vmatmul.mubr.bf16.gmra.mrb[0].mxu0 %v1088
      %v5439 = vpop.f32.mrb[0].mxu0
      %v5440 = vadd.f32 %v5399, %v5439
      %v5441 = vpop.f32.mrb[0].mxu0
      %v5442 = vadd.f32 %v5401, %v5441
      %v5443 = vpop.f32.mrb[0].mxu0
      %v5444 = vpop.f32.mrb[0].mxu0
      %5445 = vdwg.mxu0
      %5446 = vmatprep.subr.bf16.mxu0 %v3421
      %5447 = vmatpush1.bf16.msra.mxu0 %v3420
      %5448 = vmatprep.subr.bf16.mxu0 %v3425
      %5449 = vmatpush1.bf16.msra.mxu0 %v3424
      %5450 = vmatprep.subr.bf16.mxu0 %v3429
      %5451 = vmatpush1.bf16.msra.mxu0 %v3428
      %5452 = vmatprep.subr.bf16.mxu0 %v3433
      %5453 = vmatpush1.bf16.msra.mxu0 %v3432
      %5454 = vmatprep.subr.bf16.mxu0 %v3437
      %5455 = vmatpush1.bf16.msra.mxu0 %v3436
      %5456 = vmatprep.subr.bf16.mxu0 %v3441
      %5457 = vmatpush1.bf16.msra.mxu0 %v3440
      %5458 = vmatprep.subr.bf16.mxu0 %v3445
      %5459 = vmatpush1.bf16.msra.mxu0 %v3444
      %5460 = vmatprep.subr.bf16.mxu0 %v3449
      %5461 = vmatpush1.bf16.msra.mxu0 %v3448
      %5462 = vmatprep.subr.bf16.mxu0 %v3453
      %5463 = vmatpush1.bf16.msra.mxu0 %v3452
      %5464 = vmatprep.subr.bf16.mxu0 %v3457
      %5465 = vmatpush1.bf16.msra.mxu0 %v3456
      %5466 = vmatprep.subr.bf16.mxu0 %v3461
      %5467 = vmatpush1.bf16.msra.mxu0 %v3460
      %5468 = vmatprep.subr.bf16.mxu0 %v3465
      %5469 = vmatpush1.bf16.msra.mxu0 %v3464
      %5470 = vmatprep.subr.bf16.mxu0 %v3469
      %5471 = vmatpush1.bf16.msra.mxu0 %v3468
      %5472 = vmatprep.subr.bf16.mxu0 %v3473
      %5473 = vmatpush1.bf16.msra.mxu0 %v3472
      %5474 = vmatprep.subr.bf16.mxu0 %v3477
      %5475 = vmatpush1.bf16.msra.mxu0 %v3476
      %5476 = vmatprep.subr.bf16.mxu0 %v3481
      %5477 = vmatpush1.bf16.msra.mxu0 %v3480
      %5478 = vmatprep.mubr.bf16.mxu0 %v1067
      %5479 = vmatmul.mubr.bf16.gmra.mrb[0].mxu0 %v1066
      %v5480 = vpop.f32.mrb[0].mxu0
      %v5481 = vadd.f32 0.0, %v5480
      %v5482 = vpop.f32.mrb[0].mxu0
      %v5483 = vadd.f32 0.0, %v5482
      %v5484 = vpop.f32.mrb[0].mxu0
      %v5485 = vpop.f32.mrb[0].mxu0
      %5486 = vdwg.mxu0
      %5487 = vmatprep.subr.bf16.mxu0 %v3485
      %5488 = vmatpush1.bf16.msra.mxu0 %v3484
      %5489 = vmatprep.subr.bf16.mxu0 %v3489
      %5490 = vmatpush1.bf16.msra.mxu0 %v3488
      %5491 = vmatprep.subr.bf16.mxu0 %v3493
      %5492 = vmatpush1.bf16.msra.mxu0 %v3492
      %5493 = vmatprep.subr.bf16.mxu0 %v3497
      %5494 = vmatpush1.bf16.msra.mxu0 %v3496
      %5495 = vmatprep.subr.bf16.mxu0 %v3501
      %5496 = vmatpush1.bf16.msra.mxu0 %v3500
      %5497 = vmatprep.subr.bf16.mxu0 %v3505
      %5498 = vmatpush1.bf16.msra.mxu0 %v3504
      %5499 = vmatprep.subr.bf16.mxu0 %v3509
      %5500 = vmatpush1.bf16.msra.mxu0 %v3508
      %5501 = vmatprep.subr.bf16.mxu0 %v3513
      %5502 = vmatpush1.bf16.msra.mxu0 %v3512
      %5503 = vmatprep.subr.bf16.mxu0 %v3517
      %5504 = vmatpush1.bf16.msra.mxu0 %v3516
      %5505 = vmatprep.subr.bf16.mxu0 %v3521
      %5506 = vmatpush1.bf16.msra.mxu0 %v3520
      %5507 = vmatprep.subr.bf16.mxu0 %v3525
      %5508 = vmatpush1.bf16.msra.mxu0 %v3524
      %5509 = vmatprep.subr.bf16.mxu0 %v3529
      %5510 = vmatpush1.bf16.msra.mxu0 %v3528
      %5511 = vmatprep.subr.bf16.mxu0 %v3533
      %5512 = vmatpush1.bf16.msra.mxu0 %v3532
      %5513 = vmatprep.subr.bf16.mxu0 %v3537
      %5514 = vmatpush1.bf16.msra.mxu0 %v3536
      %5515 = vmatprep.subr.bf16.mxu0 %v3541
      %5516 = vmatpush1.bf16.msra.mxu0 %v3540
      %5517 = vmatprep.subr.bf16.mxu0 %v3545
      %5518 = vmatpush1.bf16.msra.mxu0 %v3544
      %5519 = vmatprep.mubr.bf16.mxu0 %v1069
      %5520 = vmatmul.mubr.bf16.gmra.mrb[0].mxu0 %v1068
      %v5521 = vpop.f32.mrb[0].mxu0
      %v5522 = vadd.f32 %v5481, %v5521
      %v5523 = vpop.f32.mrb[0].mxu0
      %v5524 = vadd.f32 %v5483, %v5523
      %v5525 = vpop.f32.mrb[0].mxu0
      %v5526 = vpop.f32.mrb[0].mxu0
      %5527 = vdwg.mxu0
      %5528 = vmatprep.subr.bf16.mxu0 %v3549
      %5529 = vmatpush1.bf16.msra.mxu0 %v3548
      %5530 = vmatprep.subr.bf16.mxu0 %v3553
      %5531 = vmatpush1.bf16.msra.mxu0 %v3552
      %5532 = vmatprep.subr.bf16.mxu0 %v3557
      %5533 = vmatpush1.bf16.msra.mxu0 %v3556
      %5534 = vmatprep.subr.bf16.mxu0 %v3561
      %5535 = vmatpush1.bf16.msra.mxu0 %v3560
      %5536 = vmatprep.subr.bf16.mxu0 %v3565
      %5537 = vmatpush1.bf16.msra.mxu0 %v3564
      %5538 = vmatprep.subr.bf16.mxu0 %v3569
      %5539 = vmatpush1.bf16.msra.mxu0 %v3568
      %5540 = vmatprep.subr.bf16.mxu0 %v3573
      %5541 = vmatpush1.bf16.msra.mxu0 %v3572
      %5542 = vmatprep.subr.bf16.mxu0 %v3577
      %5543 = vmatpush1.bf16.msra.mxu0 %v3576
      %5544 = vmatprep.subr.bf16.mxu0 %v3581
      %5545 = vmatpush1.bf16.msra.mxu0 %v3580
      %5546 = vmatprep.subr.bf16.mxu0 %v3585
      %5547 = vmatpush1.bf16.msra.mxu0 %v3584
      %5548 = vmatprep.subr.bf16.mxu0 %v3589
      %5549 = vmatpush1.bf16.msra.mxu0 %v3588
      %5550 = vmatprep.subr.bf16.mxu0 %v3593
      %5551 = vmatpush1.bf16.msra.mxu0 %v3592
      %5552 = vmatprep.subr.bf16.mxu0 %v3597
      %5553 = vmatpush1.bf16.msra.mxu0 %v3596
      %5554 = vmatprep.subr.bf16.mxu0 %v3601
      %5555 = vmatpush1.bf16.msra.mxu0 %v3600
      %5556 = vmatprep.subr.bf16.mxu0 %v3605
      %5557 = vmatpush1.bf16.msra.mxu0 %v3604
      %5558 = vmatprep.subr.bf16.mxu0 %v3609
      %5559 = vmatpush1.bf16.msra.mxu0 %v3608
      %5560 = vmatprep.mubr.bf16.mxu0 %v1071
      %5561 = vmatmul.mubr.bf16.gmra.mrb[0].mxu0 %v1070
      %v5562 = vpop.f32.mrb[0].mxu0
      %v5563 = vadd.f32 %v5522, %v5562
      %v5564 = vpop.f32.mrb[0].mxu0
      %v5565 = vadd.f32 %v5524, %v5564
      %v5566 = vpop.f32.mrb[0].mxu0
      %v5567 = vpop.f32.mrb[0].mxu0
      %5568 = vdwg.mxu0
      %5569 = vmatprep.subr.bf16.mxu0 %v3613
      %5570 = vmatpush1.bf16.msra.mxu0 %v3612
      %5571 = vmatprep.subr.bf16.mxu0 %v3617
      %5572 = vmatpush1.bf16.msra.mxu0 %v3616
      %5573 = vmatprep.subr.bf16.mxu0 %v3621
      %5574 = vmatpush1.bf16.msra.mxu0 %v3620
      %5575 = vmatprep.subr.bf16.mxu0 %v3625
      %5576 = vmatpush1.bf16.msra.mxu0 %v3624
      %5577 = vmatprep.subr.bf16.mxu0 %v3629
      %5578 = vmatpush1.bf16.msra.mxu0 %v3628
      %5579 = vmatprep.subr.bf16.mxu0 %v3633
      %5580 = vmatpush1.bf16.msra.mxu0 %v3632
      %5581 = vmatprep.subr.bf16.mxu0 %v3637
      %5582 = vmatpush1.bf16.msra.mxu0 %v3636
      %5583 = vmatprep.subr.bf16.mxu0 %v3641
      %5584 = vmatpush1.bf16.msra.mxu0 %v3640
      %5585 = vmatprep.subr.bf16.mxu0 %v3645
      %5586 = vmatpush1.bf16.msra.mxu0 %v3644
      %5587 = vmatprep.subr.bf16.mxu0 %v3649
      %5588 = vmatpush1.bf16.msra.mxu0 %v3648
      %5589 = vmatprep.subr.bf16.mxu0 %v3653
      %5590 = vmatpush1.bf16.msra.mxu0 %v3652
      %5591 = vmatprep.subr.bf16.mxu0 %v3657
      %5592 = vmatpush1.bf16.msra.mxu0 %v3656
      %5593 = vmatprep.subr.bf16.mxu0 %v3661
      %5594 = vmatpush1.bf16.msra.mxu0 %v3660
      %5595 = vmatprep.subr.bf16.mxu0 %v3665
      %5596 = vmatpush1.bf16.msra.mxu0 %v3664
      %5597 = vmatprep.subr.bf16.mxu0 %v3669
      %5598 = vmatpush1.bf16.msra.mxu0 %v3668
      %5599 = vmatprep.subr.bf16.mxu0 %v3673
      %5600 = vmatpush1.bf16.msra.mxu0 %v3672
      %5601 = vmatprep.mubr.bf16.mxu0 %v1073
      %5602 = vmatmul.mubr.bf16.gmra.mrb[0].mxu0 %v1072
      %v5603 = vpop.f32.mrb[0].mxu0
      %v5604 = vadd.f32 %v5563, %v5603
      %v5605 = vpop.f32.mrb[0].mxu0
      %v5606 = vadd.f32 %v5565, %v5605
      %v5607 = vpop.f32.mrb[0].mxu0
      %v5608 = vpop.f32.mrb[0].mxu0
      %5609 = vdwg.mxu0
      %5610 = vmatprep.subr.bf16.mxu0 %v3677
      %5611 = vmatpush1.bf16.msra.mxu0 %v3676
      %5612 = vmatprep.subr.bf16.mxu0 %v3681
      %5613 = vmatpush1.bf16.msra.mxu0 %v3680
      %5614 = vmatprep.subr.bf16.mxu0 %v3685
      %5615 = vmatpush1.bf16.msra.mxu0 %v3684
      %5616 = vmatprep.subr.bf16.mxu0 %v3689
      %5617 = vmatpush1.bf16.msra.mxu0 %v3688
      %5618 = vmatprep.subr.bf16.mxu0 %v3693
      %5619 = vmatpush1.bf16.msra.mxu0 %v3692
      %5620 = vmatprep.subr.bf16.mxu0 %v3697
      %5621 = vmatpush1.bf16.msra.mxu0 %v3696
      %5622 = vmatprep.subr.bf16.mxu0 %v3701
      %5623 = vmatpush1.bf16.msra.mxu0 %v3700
      %5624 = vmatprep.subr.bf16.mxu0 %v3705
      %5625 = vmatpush1.bf16.msra.mxu0 %v3704
      %5626 = vmatprep.subr.bf16.mxu0 %v3709
      %5627 = vmatpush1.bf16.msra.mxu0 %v3708
      %5628 = vmatprep.subr.bf16.mxu0 %v3713
      %5629 = vmatpush1.bf16.msra.mxu0 %v3712
      %5630 = vmatprep.subr.bf16.mxu0 %v3717
      %5631 = vmatpush1.bf16.msra.mxu0 %v3716
      %5632 = vmatprep.subr.bf16.mxu0 %v3721
      %5633 = vmatpush1.bf16.msra.mxu0 %v3720
      %5634 = vmatprep.subr.bf16.mxu0 %v3725
      %5635 = vmatpush1.bf16.msra.mxu0 %v3724
      %5636 = vmatprep.subr.bf16.mxu0 %v3729
      %5637 = vmatpush1.bf16.msra.mxu0 %v3728
      %5638 = vmatprep.subr.bf16.mxu0 %v3733
      %5639 = vmatpush1.bf16.msra.mxu0 %v3732
      %5640 = vmatprep.subr.bf16.mxu0 %v3737
      %5641 = vmatpush1.bf16.msra.mxu0 %v3736
      %5642 = vmatprep.mubr.bf16.mxu0 %v1075
      %5643 = vmatmul.mubr.bf16.gmra.mrb[0].mxu0 %v1074
      %v5644 = vpop.f32.mrb[0].mxu0
      %v5645 = vadd.f32 %v5604, %v5644
      %v5646 = vpop.f32.mrb[0].mxu0
      %v5647 = vadd.f32 %v5606, %v5646
      %v5648 = vpop.f32.mrb[0].mxu0
      %v5649 = vpop.f32.mrb[0].mxu0
      %5650 = vdwg.mxu0
      %5651 = vmatprep.subr.bf16.mxu0 %v3741
      %5652 = vmatpush1.bf16.msra.mxu0 %v3740
      %5653 = vmatprep.subr.bf16.mxu0 %v3745
      %5654 = vmatpush1.bf16.msra.mxu0 %v3744
      %5655 = vmatprep.subr.bf16.mxu0 %v3749
      %5656 = vmatpush1.bf16.msra.mxu0 %v3748
      %5657 = vmatprep.subr.bf16.mxu0 %v3753
      %5658 = vmatpush1.bf16.msra.mxu0 %v3752
      %5659 = vmatprep.subr.bf16.mxu0 %v3757
      %5660 = vmatpush1.bf16.msra.mxu0 %v3756
      %5661 = vmatprep.subr.bf16.mxu0 %v3761
      %5662 = vmatpush1.bf16.msra.mxu0 %v3760
      %5663 = vmatprep.subr.bf16.mxu0 %v3765
      %5664 = vmatpush1.bf16.msra.mxu0 %v3764
      %5665 = vmatprep.subr.bf16.mxu0 %v3769
      %5666 = vmatpush1.bf16.msra.mxu0 %v3768
      %5667 = vmatprep.subr.bf16.mxu0 %v3773
      %5668 = vmatpush1.bf16.msra.mxu0 %v3772
      %5669 = vmatprep.subr.bf16.mxu0 %v3777
      %5670 = vmatpush1.bf16.msra.mxu0 %v3776
      %5671 = vmatprep.subr.bf16.mxu0 %v3781
      %5672 = vmatpush1.bf16.msra.mxu0 %v3780
      %5673 = vmatprep.subr.bf16.mxu0 %v3785
      %5674 = vmatpush1.bf16.msra.mxu0 %v3784
      %5675 = vmatprep.subr.bf16.mxu0 %v3789
      %5676 = vmatpush1.bf16.msra.mxu0 %v3788
      %5677 = vmatprep.subr.bf16.mxu0 %v3793
      %5678 = vmatpush1.bf16.msra.mxu0 %v3792
      %5679 = vmatprep.subr.bf16.mxu0 %v3797
      %5680 = vmatpush1.bf16.msra.mxu0 %v3796
      %5681 = vmatprep.subr.bf16.mxu0 %v3801
      %5682 = vmatpush1.bf16.msra.mxu0 %v3800
      %5683 = vmatprep.mubr.bf16.mxu0 %v1077
      %5684 = vmatmul.mubr.bf16.gmra.mrb[0].mxu0 %v1076
      %v5685 = vpop.f32.mrb[0].mxu0
      %v5686 = vadd.f32 %v5645, %v5685
      %v5687 = vpop.f32.mrb[0].mxu0
      %v5688 = vadd.f32 %v5647, %v5687
      %v5689 = vpop.f32.mrb[0].mxu0
      %v5690 = vpop.f32.mrb[0].mxu0
      %5691 = vdwg.mxu0
      %5692 = vmatprep.subr.bf16.mxu0 %v3805
      %5693 = vmatpush1.bf16.msra.mxu0 %v3804
      %5694 = vmatprep.subr.bf16.mxu0 %v3809
      %5695 = vmatpush1.bf16.msra.mxu0 %v3808
      %5696 = vmatprep.subr.bf16.mxu0 %v3813
      %5697 = vmatpush1.bf16.msra.mxu0 %v3812
      %5698 = vmatprep.subr.bf16.mxu0 %v3817
      %5699 = vmatpush1.bf16.msra.mxu0 %v3816
      %5700 = vmatprep.subr.bf16.mxu0 %v3821
      %5701 = vmatpush1.bf16.msra.mxu0 %v3820
      %5702 = vmatprep.subr.bf16.mxu0 %v3825
      %5703 = vmatpush1.bf16.msra.mxu0 %v3824
      %5704 = vmatprep.subr.bf16.mxu0 %v3829
      %5705 = vmatpush1.bf16.msra.mxu0 %v3828
      %5706 = vmatprep.subr.bf16.mxu0 %v3833
      %5707 = vmatpush1.bf16.msra.mxu0 %v3832
      %5708 = vmatprep.subr.bf16.mxu0 %v3837
      %5709 = vmatpush1.bf16.msra.mxu0 %v3836
      %5710 = vmatprep.subr.bf16.mxu0 %v3841
      %5711 = vmatpush1.bf16.msra.mxu0 %v3840
      %5712 = vmatprep.subr.bf16.mxu0 %v3845
      %5713 = vmatpush1.bf16.msra.mxu0 %v3844
      %5714 = vmatprep.subr.bf16.mxu0 %v3849
      %5715 = vmatpush1.bf16.msra.mxu0 %v3848
      %5716 = vmatprep.subr.bf16.mxu0 %v3853
      %5717 = vmatpush1.bf16.msra.mxu0 %v3852
      %5718 = vmatprep.subr.bf16.mxu0 %v3857
      %5719 = vmatpush1.bf16.msra.mxu0 %v3856
      %5720 = vmatprep.subr.bf16.mxu0 %v3861
      %5721 = vmatpush1.bf16.msra.mxu0 %v3860
      %5722 = vmatprep.subr.bf16.mxu0 %v3865
      %5723 = vmatpush1.bf16.msra.mxu0 %v3864
      %5724 = vmatprep.mubr.bf16.mxu0 %v1079
      %5725 = vmatmul.mubr.bf16.gmra.mrb[0].mxu0 %v1078
      %v5726 = vpop.f32.mrb[0].mxu0
      %v5727 = vadd.f32 %v5686, %v5726
      %v5728 = vpop.f32.mrb[0].mxu0
      %v5729 = vadd.f32 %v5688, %v5728
      %v5730 = vpop.f32.mrb[0].mxu0
      %v5731 = vpop.f32.mrb[0].mxu0
      %5732 = vdwg.mxu0
      %5733 = vmatprep.subr.bf16.mxu0 %v3869
      %5734 = vmatpush1.bf16.msra.mxu0 %v3868
      %5735 = vmatprep.subr.bf16.mxu0 %v3873
      %5736 = vmatpush1.bf16.msra.mxu0 %v3872
      %5737 = vmatprep.subr.bf16.mxu0 %v3877
      %5738 = vmatpush1.bf16.msra.mxu0 %v3876
      %5739 = vmatprep.subr.bf16.mxu0 %v3881
      %5740 = vmatpush1.bf16.msra.mxu0 %v3880
      %5741 = vmatprep.subr.bf16.mxu0 %v3885
      %5742 = vmatpush1.bf16.msra.mxu0 %v3884
      %5743 = vmatprep.subr.bf16.mxu0 %v3889
      %5744 = vmatpush1.bf16.msra.mxu0 %v3888
      %5745 = vmatprep.subr.bf16.mxu0 %v3893
      %5746 = vmatpush1.bf16.msra.mxu0 %v3892
      %5747 = vmatprep.subr.bf16.mxu0 %v3897
      %5748 = vmatpush1.bf16.msra.mxu0 %v3896
      %5749 = vmatprep.subr.bf16.mxu0 %v3901
      %5750 = vmatpush1.bf16.msra.mxu0 %v3900
      %5751 = vmatprep.subr.bf16.mxu0 %v3905
      %5752 = vmatpush1.bf16.msra.mxu0 %v3904
      %5753 = vmatprep.subr.bf16.mxu0 %v3909
      %5754 = vmatpush1.bf16.msra.mxu0 %v3908
      %5755 = vmatprep.subr.bf16.mxu0 %v3913
      %5756 = vmatpush1.bf16.msra.mxu0 %v3912
      %5757 = vmatprep.subr.bf16.mxu0 %v3917
      %5758 = vmatpush1.bf16.msra.mxu0 %v3916
      %5759 = vmatprep.subr.bf16.mxu0 %v3921
      %5760 = vmatpush1.bf16.msra.mxu0 %v3920
      %5761 = vmatprep.subr.bf16.mxu0 %v3925
      %5762 = vmatpush1.bf16.msra.mxu0 %v3924
      %5763 = vmatprep.subr.bf16.mxu0 %v3929
      %5764 = vmatpush1.bf16.msra.mxu0 %v3928
      %5765 = vmatprep.mubr.bf16.mxu0 %v1081
      %5766 = vmatmul.mubr.bf16.gmra.mrb[0].mxu0 %v1080
      %v5767 = vpop.f32.mrb[0].mxu0
      %v5768 = vadd.f32 %v5727, %v5767
      %v5769 = vpop.f32.mrb[0].mxu0
      %v5770 = vadd.f32 %v5729, %v5769
      %v5771 = vpop.f32.mrb[0].mxu0
      %v5772 = vpop.f32.mrb[0].mxu0
      %5773 = vdwg.mxu0
      %5774 = vmatprep.subr.bf16.mxu0 %v3933
      %5775 = vmatpush1.bf16.msra.mxu0 %v3932
      %5776 = vmatprep.subr.bf16.mxu0 %v3937
      %5777 = vmatpush1.bf16.msra.mxu0 %v3936
      %5778 = vmatprep.subr.bf16.mxu0 %v3941
      %5779 = vmatpush1.bf16.msra.mxu0 %v3940
      %5780 = vmatprep.subr.bf16.mxu0 %v3945
      %5781 = vmatpush1.bf16.msra.mxu0 %v3944
      %5782 = vmatprep.subr.bf16.mxu0 %v3949
      %5783 = vmatpush1.bf16.msra.mxu0 %v3948
      %5784 = vmatprep.subr.bf16.mxu0 %v3953
      %5785 = vmatpush1.bf16.msra.mxu0 %v3952
      %5786 = vmatprep.subr.bf16.mxu0 %v3957
      %5787 = vmatpush1.bf16.msra.mxu0 %v3956
      %5788 = vmatprep.subr.bf16.mxu0 %v3961
      %5789 = vmatpush1.bf16.msra.mxu0 %v3960
      %5790 = vmatprep.subr.bf16.mxu0 %v3965
      %5791 = vmatpush1.bf16.msra.mxu0 %v3964
      %5792 = vmatprep.subr.bf16.mxu0 %v3969
      %5793 = vmatpush1.bf16.msra.mxu0 %v3968
      %5794 = vmatprep.subr.bf16.mxu0 %v3973
      %5795 = vmatpush1.bf16.msra.mxu0 %v3972
      %5796 = vmatprep.subr.bf16.mxu0 %v3977
      %5797 = vmatpush1.bf16.msra.mxu0 %v3976
      %5798 = vmatprep.subr.bf16.mxu0 %v3981
      %5799 = vmatpush1.bf16.msra.mxu0 %v3980
      %5800 = vmatprep.subr.bf16.mxu0 %v3985
      %5801 = vmatpush1.bf16.msra.mxu0 %v3984
      %5802 = vmatprep.subr.bf16.mxu0 %v3989
      %5803 = vmatpush1.bf16.msra.mxu0 %v3988
      %5804 = vmatprep.subr.bf16.mxu0 %v3993
      %5805 = vmatpush1.bf16.msra.mxu0 %v3992
      %5806 = vmatprep.mubr.bf16.mxu0 %v1083
      %5807 = vmatmul.mubr.bf16.gmra.mrb[0].mxu0 %v1082
      %v5808 = vpop.f32.mrb[0].mxu0
      %v5809 = vadd.f32 %v5768, %v5808
      %v5810 = vpop.f32.mrb[0].mxu0
      %v5811 = vadd.f32 %v5770, %v5810
      %v5812 = vpop.f32.mrb[0].mxu0
      %v5813 = vpop.f32.mrb[0].mxu0
      %5814 = vdwg.mxu0
      %5815 = vmatprep.subr.bf16.mxu0 %v3997
      %5816 = vmatpush1.bf16.msra.mxu0 %v3996
      %5817 = vmatprep.subr.bf16.mxu0 %v4001
      %5818 = vmatpush1.bf16.msra.mxu0 %v4000
      %5819 = vmatprep.subr.bf16.mxu0 %v4005
      %5820 = vmatpush1.bf16.msra.mxu0 %v4004
      %5821 = vmatprep.subr.bf16.mxu0 %v4009
      %5822 = vmatpush1.bf16.msra.mxu0 %v4008
      %5823 = vmatprep.subr.bf16.mxu0 %v4013
      %5824 = vmatpush1.bf16.msra.mxu0 %v4012
      %5825 = vmatprep.subr.bf16.mxu0 %v4017
      %5826 = vmatpush1.bf16.msra.mxu0 %v4016
      %5827 = vmatprep.subr.bf16.mxu0 %v4021
      %5828 = vmatpush1.bf16.msra.mxu0 %v4020
      %5829 = vmatprep.subr.bf16.mxu0 %v4025
      %5830 = vmatpush1.bf16.msra.mxu0 %v4024
      %5831 = vmatprep.subr.bf16.mxu0 %v4029
      %5832 = vmatpush1.bf16.msra.mxu0 %v4028
      %5833 = vmatprep.subr.bf16.mxu0 %v4033
      %5834 = vmatpush1.bf16.msra.mxu0 %v4032
      %5835 = vmatprep.subr.bf16.mxu0 %v4037
      %5836 = vmatpush1.bf16.msra.mxu0 %v4036
      %5837 = vmatprep.subr.bf16.mxu0 %v4041
      %5838 = vmatpush1.bf16.msra.mxu0 %v4040
      %5839 = vmatprep.subr.bf16.mxu0 %v4045
      %5840 = vmatpush1.bf16.msra.mxu0 %v4044
      %5841 = vmatprep.subr.bf16.mxu0 %v4049
      %5842 = vmatpush1.bf16.msra.mxu0 %v4048
      %5843 = vmatprep.subr.bf16.mxu0 %v4053
      %5844 = vmatpush1.bf16.msra.mxu0 %v4052
      %5845 = vmatprep.subr.bf16.mxu0 %v4057
      %5846 = vmatpush1.bf16.msra.mxu0 %v4056
      %5847 = vmatprep.mubr.bf16.mxu0 %v1085
      %5848 = vmatmul.mubr.bf16.gmra.mrb[0].mxu0 %v1084
      %v5849 = vpop.f32.mrb[0].mxu0
      %v5850 = vadd.f32 %v5809, %v5849
      %v5851 = vpop.f32.mrb[0].mxu0
      %v5852 = vadd.f32 %v5811, %v5851
      %v5853 = vpop.f32.mrb[0].mxu0
      %v5854 = vpop.f32.mrb[0].mxu0
      %5855 = vdwg.mxu0
      %5856 = vmatprep.subr.bf16.mxu0 %v4061
      %5857 = vmatpush1.bf16.msra.mxu0 %v4060
      %5858 = vmatprep.subr.bf16.mxu0 %v4065
      %5859 = vmatpush1.bf16.msra.mxu0 %v4064
      %5860 = vmatprep.subr.bf16.mxu0 %v4069
      %5861 = vmatpush1.bf16.msra.mxu0 %v4068
      %5862 = vmatprep.subr.bf16.mxu0 %v4073
      %5863 = vmatpush1.bf16.msra.mxu0 %v4072
      %5864 = vmatprep.subr.bf16.mxu0 %v4077
      %5865 = vmatpush1.bf16.msra.mxu0 %v4076
      %5866 = vmatprep.subr.bf16.mxu0 %v4081
      %5867 = vmatpush1.bf16.msra.mxu0 %v4080
      %5868 = vmatprep.subr.bf16.mxu0 %v4085
      %5869 = vmatpush1.bf16.msra.mxu0 %v4084
      %5870 = vmatprep.subr.bf16.mxu0 %v4089
      %5871 = vmatpush1.bf16.msra.mxu0 %v4088
      %5872 = vmatprep.subr.bf16.mxu0 %v4093
      %5873 = vmatpush1.bf16.msra.mxu0 %v4092
      %5874 = vmatprep.subr.bf16.mxu0 %v4097
      %5875 = vmatpush1.bf16.msra.mxu0 %v4096
      %5876 = vmatprep.subr.bf16.mxu0 %v4101
      %5877 = vmatpush1.bf16.msra.mxu0 %v4100
      %5878 = vmatprep.subr.bf16.mxu0 %v4105
      %5879 = vmatpush1.bf16.msra.mxu0 %v4104
      %5880 = vmatprep.subr.bf16.mxu0 %v4109
      %5881 = vmatpush1.bf16.msra.mxu0 %v4108
      %5882 = vmatprep.subr.bf16.mxu0 %v4113
      %5883 = vmatpush1.bf16.msra.mxu0 %v4112
      %5884 = vmatprep.subr.bf16.mxu0 %v4117
      %5885 = vmatpush1.bf16.msra.mxu0 %v4116
      %5886 = vmatprep.subr.bf16.mxu0 %v4121
      %5887 = vmatpush1.bf16.msra.mxu0 %v4120
      %5888 = vmatprep.mubr.bf16.mxu0 %v1087
      %5889 = vmatmul.mubr.bf16.gmra.mrb[0].mxu0 %v1086
      %v5890 = vpop.f32.mrb[0].mxu0
      %v5891 = vadd.f32 %v5850, %v5890
      %v5892 = vpop.f32.mrb[0].mxu0
      %v5893 = vadd.f32 %v5852, %v5892
      %v5894 = vpop.f32.mrb[0].mxu0
      %v5895 = vpop.f32.mrb[0].mxu0
      %5896 = vdwg.mxu0
      %5897 = vmatprep.subr.bf16.mxu0 %v4125
      %5898 = vmatpush1.bf16.msra.mxu0 %v4124
      %5899 = vmatprep.subr.bf16.mxu0 %v4129
      %5900 = vmatpush1.bf16.msra.mxu0 %v4128
      %5901 = vmatprep.subr.bf16.mxu0 %v4133
      %5902 = vmatpush1.bf16.msra.mxu0 %v4132
      %5903 = vmatprep.subr.bf16.mxu0 %v4137
      %5904 = vmatpush1.bf16.msra.mxu0 %v4136
      %5905 = vmatprep.subr.bf16.mxu0 %v4141
      %5906 = vmatpush1.bf16.msra.mxu0 %v4140
      %5907 = vmatprep.subr.bf16.mxu0 %v4145
      %5908 = vmatpush1.bf16.msra.mxu0 %v4144
      %5909 = vmatprep.subr.bf16.mxu0 %v4149
      %5910 = vmatpush1.bf16.msra.mxu0 %v4148
      %5911 = vmatprep.subr.bf16.mxu0 %v4153
      %5912 = vmatpush1.bf16.msra.mxu0 %v4152
      %5913 = vmatprep.subr.bf16.mxu0 %v4157
      %5914 = vmatpush1.bf16.msra.mxu0 %v4156
      %5915 = vmatprep.subr.bf16.mxu0 %v4161
      %5916 = vmatpush1.bf16.msra.mxu0 %v4160
      %5917 = vmatprep.subr.bf16.mxu0 %v4165
      %5918 = vmatpush1.bf16.msra.mxu0 %v4164
      %5919 = vmatprep.subr.bf16.mxu0 %v4169
      %5920 = vmatpush1.bf16.msra.mxu0 %v4168
      %5921 = vmatprep.subr.bf16.mxu0 %v4173
      %5922 = vmatpush1.bf16.msra.mxu0 %v4172
      %5923 = vmatprep.subr.bf16.mxu0 %v4177
      %5924 = vmatpush1.bf16.msra.mxu0 %v4176
      %5925 = vmatprep.subr.bf16.mxu0 %v4181
      %5926 = vmatpush1.bf16.msra.mxu0 %v4180
      %5927 = vmatprep.subr.bf16.mxu0 %v4185
      %5928 = vmatpush1.bf16.msra.mxu0 %v4184
      %5929 = vmatprep.mubr.bf16.mxu0 %v1089
      %5930 = vmatmul.mubr.bf16.gmra.mrb[0].mxu0 %v1088
      %v5931 = vpop.f32.mrb[0].mxu0
      %v5932 = vadd.f32 %v5891, %v5931
      %v5933 = vpop.f32.mrb[0].mxu0
      %v5934 = vadd.f32 %v5893, %v5933
      %v5935 = vpop.f32.mrb[0].mxu0
      %v5936 = vpop.f32.mrb[0].mxu0
      %5937 = vdwg.mxu0
      %v5938 = vadd.f32 %v246, %v5440
      %v5939 = vadd.f32 %v247, %v5442
      %v5940 = vadd.f32 %v248, %v5932
      %v5941 = vadd.f32 %v249, %v5934
      %5942 = vst [vmem:[#allocation2] sm:$0xff] %v5938
      %5943 = vst [vmem:[#allocation2 + $0x8] sm:$0xff] %v5939
      %5944 = vst [vmem:[#allocation2 + $0x10] sm:$0xff] %v5940
      %vm5945 = vcmask 130048
      %5946 = vst.msk [vmem:[#allocation2 + $0x18] sm:$0xff] %vm5945, %v5941
      %p5947 = scmp.eq.s32.totalorder %s16, 3
      // Predicated region
      $region45: #{snn_forward.1} parent=39 // pred_check
        %p5948 = pneg %p5947
      $region46: #{snn_forward.1} parent=39 // pred_check_branch
        %5950 = sbr.rel (%p5948) target = $region48
      $region47: #{snn_forward.1} parent=39 // pred_region
        %v5951 = vld [vmem:[#allocation2] sm:$0xff]
        %v5952 = vld [vmem:[#allocation2 + $0x8] sm:$0xff]
        %v5953 = vld [vmem:[#allocation2 + $0x10] sm:$0xff]
        %v5954 = vld [vmem:[#allocation2 + $0x18] sm:$0xff]
        %v5955 = vmul.f32 %v5951, 0.5
        %v5956 = vmul.f32 %v5952, 0.5
        %v5957 = vmul.f32 %v5953, 0.5
        %v5958 = vmul.f32 %v5954, 0.5
        %vm5959 = vcmp.ge.f32.partialorder %v5955, 1.0
        %vm5960 = vcmp.ge.f32.partialorder %v5956, 1.0
        %vm5961 = vcmp.ge.f32.partialorder %v5957, 1.0
        %vm5962 = vcmp.ge.f32.partialorder %v5958, 1.0
        %v5963 = vsel %vm5959, 1, 0
        %v5964 = vsel %vm5960, 1, 0
        %v5965 = vsel %vm5961, 1, 0
        %v5966 = vsel %vm5962, 1, 0
        %v5967 = vcvt.s32.f32 %v5963
        %v5968 = vcvt.s32.f32 %v5964
        %v5969 = vcvt.s32.f32 %v5965
        %v5970 = vcvt.s32.f32 %v5966
        %v5971 = vld [vmem:[%s2] sm:$0xff]
        %v5972 = vld [vmem:[%s2 + $0x8] sm:$0xff]
        %v5973 = vld [vmem:[%s2 + $0x10] sm:$0xff]
        %v5974 = vld [vmem:[%s2 + $0x18] sm:$0xff]
        %v5975 = vld [vmem:[%s2 + $0x20] sm:$0xff]
        %v5976 = vld [vmem:[%s2 + $0x28] sm:$0xff]
        %v5977 = vld [vmem:[%s2 + $0x30] sm:$0xff]
        %v5978 = vld [vmem:[%s2 + $0x38] sm:$0xff]
        %v5979 = vld [vmem:[%s2 + $0x40] sm:$0xff]
        %v5980 = vld [vmem:[%s2 + $0x48] sm:$0xff]
        %v5981 = vld [vmem:[%s2 + $0x50] sm:$0xff]
        %v5982 = vld [vmem:[%s2 + $0x58] sm:$0xff]
        %v5983 = vld [vmem:[%s2 + $0x60] sm:$0xff]
        %v5984 = vld [vmem:[%s2 + $0x68] sm:$0xff]
        %v5985 = vld [vmem:[%s2 + $0x70] sm:$0xff]
        %v5986 = vld [vmem:[%s2 + $0x78] sm:$0xff]
        %v5987 = vld [vmem:[%s2 + $0x80] sm:$0xff]
        %v5988 = vld [vmem:[%s2 + $0x88] sm:$0xff]
        %v5989 = vld [vmem:[%s2 + $0x90] sm:$0xff]
        %v5990 = vld [vmem:[%s2 + $0x98] sm:$0xff]
        %v5991 = vld [vmem:[%s2 + $0xa0] sm:$0xff]
        %v5992 = vld [vmem:[%s2 + $0xa8] sm:$0xff]
        %v5993 = vld [vmem:[%s2 + $0xb0] sm:$0xff]
        %v5994 = vld [vmem:[%s2 + $0xb8] sm:$0xff]
        %v5995 = vld [vmem:[%s2 + $0xc0] sm:$0xff]
        %v5996 = vld [vmem:[%s2 + $0xc8] sm:$0xff]
        %v5997 = vld [vmem:[%s2 + $0xd0] sm:$0xff]
        %v5998 = vld [vmem:[%s2 + $0xd8] sm:$0xff]
        %v5999 = vld [vmem:[%s2 + $0xe0] sm:$0xff]
        %v6000 = vld [vmem:[%s2 + $0xe8] sm:$0xff]
        %v6001 = vld [vmem:[%s2 + $0xf0] sm:$0xff]
        %v6002 = vld [vmem:[%s2 + $0xf8] sm:$0xff]
        %v6003 = vld [vmem:[%s2 + $0x100] sm:$0xff]
        %v6004 = vld [vmem:[%s2 + $0x108] sm:$0xff]
        %v6005 = vld [vmem:[%s2 + $0x110] sm:$0xff]
        %v6006 = vld [vmem:[%s2 + $0x118] sm:$0xff]
        %v6007 = vld [vmem:[%s2 + $0x120] sm:$0xff]
        %v6008 = vld [vmem:[%s2 + $0x128] sm:$0xff]
        %v6009 = vld [vmem:[%s2 + $0x130] sm:$0xff]
        %v6010 = vld [vmem:[%s2 + $0x138] sm:$0xff]
        %v6011 = vld [vmem:[%s2 + $0x140] sm:$0xff]
        %v6012 = vld [vmem:[%s2 + $0x148] sm:$0xff]
        %v6013 = vld [vmem:[%s2 + $0x150] sm:$0xff]
        %v6014 = vld [vmem:[%s2 + $0x158] sm:$0xff]
        %v6015 = vld [vmem:[%s2 + $0x160] sm:$0xff]
        %v6016 = vld [vmem:[%s2 + $0x168] sm:$0xff]
        %v6017 = vld [vmem:[%s2 + $0x170] sm:$0xff]
        %v6018 = vld [vmem:[%s2 + $0x178] sm:$0xff]
        %v6019 = vld [vmem:[%s2 + $0x180] sm:$0xff]
        %v6020 = vld [vmem:[%s2 + $0x188] sm:$0xff]
        %v6022 = vsel %vm5945, %v5970, 0
        %6024 = vmatprep.subr.mxu0 0.0
        %6025 = vmatpush1.msra.mxu0 %v5971
        %6026 = vmatprep.subr.mxu0 0.0
        %6027 = vmatpush1.msra.mxu0 %v5972
        %6028 = vmatprep.subr.mxu0 0.0
        %6029 = vmatpush1.msra.mxu0 %v5973
        %6030 = vmatprep.subr.mxu0 0.0
        %6031 = vmatpush1.msra.mxu0 %v5974
        %6032 = vmatprep.subr.mxu0 0.0
        %6033 = vmatpush1.msra.mxu0 %v5975
        %6034 = vmatprep.subr.mxu0 0.0
        %6035 = vmatpush1.msra.mxu0 %v5976
        %6036 = vmatprep.subr.mxu0 0.0
        %6037 = vmatpush1.msra.mxu0 %v5977
        %6038 = vmatprep.subr.mxu0 0.0
        %6039 = vmatpush1.msra.mxu0 %v5978
        %6040 = vmatprep.subr.mxu0 0.0
        %6041 = vmatpush1.msra.mxu0 %v5979
        %6042 = vmatprep.subr.mxu0 0.0
        %6043 = vmatpush1.msra.mxu0 %v5980
        %6044 = vmatprep.subr.mxu0 0.0
        %6045 = vmatpush1.msra.mxu0 %v5981
        %6046 = vmatprep.subr.mxu0 0.0
        %6047 = vmatpush1.msra.mxu0 %v5982
        %6048 = vmatprep.subr.mxu0 0.0
        %6049 = vmatpush1.msra.mxu0 %v5983
        %6050 = vmatprep.subr.mxu0 0.0
        %6051 = vmatpush1.msra.mxu0 %v5984
        %6052 = vmatprep.subr.mxu0 0.0
        %6053 = vmatpush1.msra.mxu0 %v5985
        %6054 = vmatprep.subr.mxu0 0.0
        %6055 = vmatpush1.msra.mxu0 %v5986
        %6056 = vmatprep.subr.mxu0 0.0
        %6057 = vmatpush1.msra.mxu0 %v5987
        %6058 = vmatprep.subr.mxu0 0.0
        %6059 = vmatpush1.msra.mxu0 %v5988
        %6060 = vmatprep.subr.mxu0 0.0
        %6061 = vmatpush1.msra.mxu0 %v5989
        %6062 = vmatprep.subr.mxu0 0.0
        %6063 = vmatpush1.msra.mxu0 %v5990
        %6064 = vmatprep.subr.mxu0 0.0
        %6065 = vmatpush1.msra.mxu0 %v5991
        %6066 = vmatprep.subr.mxu0 0.0
        %6067 = vmatpush1.msra.mxu0 %v5992
        %6068 = vmatprep.subr.mxu0 0.0
        %6069 = vmatpush1.msra.mxu0 %v5993
        %6070 = vmatprep.subr.mxu0 0.0
        %6071 = vmatpush1.msra.mxu0 %v5994
        %6072 = vmatprep.subr.mxu0 0.0
        %6073 = vmatpush1.msra.mxu0 %v5995
        %6074 = vmatprep.subr.mxu0 0.0
        %6075 = vmatpush1.msra.mxu0 %v5996
        %6076 = vmatprep.subr.mxu0 0.0
        %6077 = vmatpush1.msra.mxu0 %v5997
        %6078 = vmatprep.subr.mxu0 0.0
        %6079 = vmatpush1.msra.mxu0 %v5998
        %6080 = vmatprep.subr.mxu0 0.0
        %6081 = vmatpush1.msra.mxu0 %v5999
        %6082 = vmatprep.subr.mxu0 0.0
        %6083 = vmatpush1.msra.mxu0 %v6000
        %6084 = vmatprep.subr.mxu0 0.0
        %6085 = vmatpush1.msra.mxu0 %v6001
        %6086 = vmatprep.subr.mxu0 0.0
        %6087 = vmatpush1.msra.mxu0 %v6002
        %6088 = vmatprep.mubr.f32.mxu0 %v5968
        %6089 = vmatmul.mubr.f32.gmra.mrb[0].mxu0 %v5967
        %v6090 = vpop.f32.mrb[0].mxu0
        %v6091 = vadd.f32 0.0, %v6090
        %v6092 = vpop.f32.mrb[0].mxu0
        %6093 = vdwg.mxu0
        %6094 = vmatprep.subr.mxu0 0.0
        %6095 = vmatpush1.msra.mxu0 %v6003
        %6096 = vmatprep.subr.mxu0 0.0
        %6097 = vmatpush1.msra.mxu0 %v6004
        %6098 = vmatprep.subr.mxu0 0.0
        %6099 = vmatpush1.msra.mxu0 %v6005
        %6100 = vmatprep.subr.mxu0 0.0
        %6101 = vmatpush1.msra.mxu0 %v6006
        %6102 = vmatprep.subr.mxu0 0.0
        %6103 = vmatpush1.msra.mxu0 %v6007
        %6104 = vmatprep.subr.mxu0 0.0
        %6105 = vmatpush1.msra.mxu0 %v6008
        %6106 = vmatprep.subr.mxu0 0.0
        %6107 = vmatpush1.msra.mxu0 %v6009
        %6108 = vmatprep.subr.mxu0 0.0
        %6109 = vmatpush1.msra.mxu0 %v6010
        %6110 = vmatprep.subr.mxu0 0.0
        %6111 = vmatpush1.msra.mxu0 %v6011
        %6112 = vmatprep.subr.mxu0 0.0
        %6113 = vmatpush1.msra.mxu0 %v6012
        %6114 = vmatprep.subr.mxu0 0.0
        %6115 = vmatpush1.msra.mxu0 %v6013
        %6116 = vmatprep.subr.mxu0 0.0
        %6117 = vmatpush1.msra.mxu0 %v6014
        %6118 = vmatprep.subr.mxu0 0.0
        %6119 = vmatpush1.msra.mxu0 %v6015
        %6120 = vmatprep.subr.mxu0 0.0
        %6121 = vmatpush1.msra.mxu0 %v6016
        %6122 = vmatprep.subr.mxu0 0.0
        %6123 = vmatpush1.msra.mxu0 %v6017
        %6124 = vmatprep.subr.mxu0 0.0
        %6125 = vmatpush1.msra.mxu0 %v6018
        %6126 = vmatprep.subr.mxu0 0.0
        %6127 = vmatpush1.msra.mxu0 %v6019
        %6128 = vmatprep.subr.mxu0 0.0
        %6129 = vmatpush1.msra.mxu0 %v6020
        %6130 = vmatprep.subr.mxu0 0.0
        %6131 = vmatpush1.msra.mxu0 0.0
        %6132 = vmatprep.subr.mxu0 0.0
        %6133 = vmatpush1.msra.mxu0 0.0
        %6134 = vmatprep.subr.mxu0 0.0
        %6135 = vmatpush1.msra.mxu0 0.0
        %6136 = vmatprep.subr.mxu0 0.0
        %6137 = vmatpush1.msra.mxu0 0.0
        %6138 = vmatprep.subr.mxu0 0.0
        %6139 = vmatpush1.msra.mxu0 0.0
        %6140 = vmatprep.subr.mxu0 0.0
        %6141 = vmatpush1.msra.mxu0 0.0
        %6142 = vmatprep.subr.mxu0 0.0
        %6143 = vmatpush1.msra.mxu0 0.0
        %6144 = vmatprep.subr.mxu0 0.0
        %6145 = vmatpush1.msra.mxu0 0.0
        %6146 = vmatprep.subr.mxu0 0.0
        %6147 = vmatpush1.msra.mxu0 0.0
        %6148 = vmatprep.subr.mxu0 0.0
        %6149 = vmatpush1.msra.mxu0 0.0
        %6150 = vmatprep.subr.mxu0 0.0
        %6151 = vmatpush1.msra.mxu0 0.0
        %6152 = vmatprep.subr.mxu0 0.0
        %6153 = vmatpush1.msra.mxu0 0.0
        %6154 = vmatprep.subr.mxu0 0.0
        %6155 = vmatpush1.msra.mxu0 0.0
        %6156 = vmatprep.subr.mxu0 0.0
        %6157 = vmatpush1.msra.mxu0 0.0
        %6158 = vmatprep.mubr.f32.mxu0 %v6022
        %6159 = vmatmul.mubr.f32.gmra.mrb[0].mxu0 %v5969
        %v6160 = vpop.f32.mrb[0].mxu0
        %v6161 = vadd.f32 %v6091, %v6160
        %v6162 = vpop.f32.mrb[0].mxu0
        %6163 = vdwg.mxu0
        %v6164 = vmul.f32 %v6161, 0.5
        %vm6165 = vcmp.ge.f32.partialorder %v6164, 1.0
        %v6166 = vsel %vm6165, 1, 0
        %v6167 = vcvt.s32.f32 %v6166
        %v6168 = vld [vmem:[%s3] sm:$0xff]
        %v6169 = vld [vmem:[%s3 + $0x8] sm:$0xff]
        %v6170 = vld [vmem:[%s3 + $0x10] sm:$0xff]
        %v6171 = vld [vmem:[%s3 + $0x18] sm:$0xff]
        %v6172 = vld [vmem:[%s3 + $0x20] sm:$0xff]
        %v6173 = vld [vmem:[%s3 + $0x28] sm:$0xff]
        %v6174 = vld [vmem:[%s3 + $0x30] sm:$0xff]
        %v6175 = vld [vmem:[%s3 + $0x38] sm:$0xff]
        %v6176 = vld [vmem:[%s3 + $0x40] sm:$0xff]
        %v6177 = vld [vmem:[%s3 + $0x48] sm:$0xff]
        %v6178 = vld [vmem:[%s3 + $0x50] sm:$0xff]
        %v6179 = vld [vmem:[%s3 + $0x58] sm:$0xff]
        %v6180 = vld [vmem:[%s3 + $0x60] sm:$0xf]
        %vm6181 = vcmask 818176
        %v6183 = vsel %vm6181, %v6167, 0
        %vm6185 = vcmask 1043456
        %v6187 = vsel %vm6185, %v6180, 0
        %6189 = vmatprep.subr.mxu0 0.0
        %6190 = vmatpush1.msra.mxu0 %v6168
        %6191 = vmatprep.subr.mxu0 0.0
        %6192 = vmatpush1.msra.mxu0 %v6169
        %6193 = vmatprep.subr.mxu0 0.0
        %6194 = vmatpush1.msra.mxu0 %v6170
        %6195 = vmatprep.subr.mxu0 0.0
        %6196 = vmatpush1.msra.mxu0 %v6171
        %6197 = vmatprep.subr.mxu0 0.0
        %6198 = vmatpush1.msra.mxu0 %v6172
        %6199 = vmatprep.subr.mxu0 0.0
        %6200 = vmatpush1.msra.mxu0 %v6173
        %6201 = vmatprep.subr.mxu0 0.0
        %6202 = vmatpush1.msra.mxu0 %v6174
        %6203 = vmatprep.subr.mxu0 0.0
        %6204 = vmatpush1.msra.mxu0 %v6175
        %6205 = vmatprep.subr.mxu0 0.0
        %6206 = vmatpush1.msra.mxu0 %v6176
        %6207 = vmatprep.subr.mxu0 0.0
        %6208 = vmatpush1.msra.mxu0 %v6177
        %6209 = vmatprep.subr.mxu0 0.0
        %6210 = vmatpush1.msra.mxu0 %v6178
        %6211 = vmatprep.subr.mxu0 0.0
        %6212 = vmatpush1.msra.mxu0 %v6179
        %6213 = vmatprep.subr.mxu0 0.0
        %6214 = vmatpush1.msra.mxu0 %v6187
        %6215 = vmatprep.subr.mxu0 0.0
        %6216 = vmatpush1.msra.mxu0 0.0
        %6217 = vmatprep.subr.mxu0 0.0
        %6218 = vmatpush1.msra.mxu0 0.0
        %6219 = vmatprep.subr.mxu0 0.0
        %6220 = vmatpush1.msra.mxu0 0.0
        %6221 = vmatprep.subr.mxu0 0.0
        %6222 = vmatpush1.msra.mxu0 0.0
        %6223 = vmatprep.subr.mxu0 0.0
        %6224 = vmatpush1.msra.mxu0 0.0
        %6225 = vmatprep.subr.mxu0 0.0
        %6226 = vmatpush1.msra.mxu0 0.0
        %6227 = vmatprep.subr.mxu0 0.0
        %6228 = vmatpush1.msra.mxu0 0.0
        %6229 = vmatprep.subr.mxu0 0.0
        %6230 = vmatpush1.msra.mxu0 0.0
        %6231 = vmatprep.subr.mxu0 0.0
        %6232 = vmatpush1.msra.mxu0 0.0
        %6233 = vmatprep.subr.mxu0 0.0
        %6234 = vmatpush1.msra.mxu0 0.0
        %6235 = vmatprep.subr.mxu0 0.0
        %6236 = vmatpush1.msra.mxu0 0.0
        %6237 = vmatprep.subr.mxu0 0.0
        %6238 = vmatpush1.msra.mxu0 0.0
        %6239 = vmatprep.subr.mxu0 0.0
        %6240 = vmatpush1.msra.mxu0 0.0
        %6241 = vmatprep.subr.mxu0 0.0
        %6242 = vmatpush1.msra.mxu0 0.0
        %6243 = vmatprep.subr.mxu0 0.0
        %6244 = vmatpush1.msra.mxu0 0.0
        %6245 = vmatprep.subr.mxu0 0.0
        %6246 = vmatpush1.msra.mxu0 0.0
        %6247 = vmatprep.subr.mxu0 0.0
        %6248 = vmatpush1.msra.mxu0 0.0
        %6249 = vmatprep.subr.mxu0 0.0
        %6250 = vmatpush1.msra.mxu0 0.0
        %6251 = vmatprep.subr.mxu0 0.0
        %6252 = vmatpush1.msra.mxu0 0.0
        %6253 = vmatprep.mubr.f32.mxu0 0.0
        %6254 = vmatmul.mubr.f32.gmra.mrb[0].mxu0 %v6183
        %v6255 = vpop.f32.mrb[0].mxu0
        %v6256 = vadd.f32 0.0, %v6255
        %v6257 = vpop.f32.mrb[0].mxu0
        %6258 = vdwg.mxu0
        %v6259 = vmul.f32 %v6256, 0.5
        %vm6260 = vcmp.ge.f32.partialorder %v6259, 1.0
        %v6261 = vsel %vm6260, 1, 0
        %v6262 = vcvt.s32.f32 %v6261
        %v6263 = vld [vmem:[%s4] sm:$0xff]
        %v6264 = vld [vmem:[%s4 + $0x8] sm:$0xff]
        %v6265 = vld [vmem:[%s4 + $0x10] sm:$0xff]
        %v6266 = vld [vmem:[%s4 + $0x18] sm:$0x1]
        %vm6267 = vcmask 203776
        %v6269 = vsel %vm6267, %v6262, 0
        %vm6271 = vcmask 1040384
        %v6273 = vsel %vm6271, %v6266, 0
        %6275 = vmatprep.subr.mxu0 0.0
        %6276 = vmatpush1.msra.mxu0 %v6263
        %6277 = vmatprep.subr.mxu0 0.0
        %6278 = vmatpush1.msra.mxu0 %v6264
        %6279 = vmatprep.subr.mxu0 0.0
        %6280 = vmatpush1.msra.mxu0 %v6265
        %6281 = vmatprep.subr.mxu0 0.0
        %6282 = vmatpush1.msra.mxu0 %v6273
        %6283 = vmatprep.subr.mxu0 0.0
        %6284 = vmatpush1.msra.mxu0 0.0
        %6285 = vmatprep.subr.mxu0 0.0
        %6286 = vmatpush1.msra.mxu0 0.0
        %6287 = vmatprep.subr.mxu0 0.0
        %6288 = vmatpush1.msra.mxu0 0.0
        %6289 = vmatprep.subr.mxu0 0.0
        %6290 = vmatpush1.msra.mxu0 0.0
        %6291 = vmatprep.subr.mxu0 0.0
        %6292 = vmatpush1.msra.mxu0 0.0
        %6293 = vmatprep.subr.mxu0 0.0
        %6294 = vmatpush1.msra.mxu0 0.0
        %6295 = vmatprep.subr.mxu0 0.0
        %6296 = vmatpush1.msra.mxu0 0.0
        %6297 = vmatprep.subr.mxu0 0.0
        %6298 = vmatpush1.msra.mxu0 0.0
        %6299 = vmatprep.subr.mxu0 0.0
        %6300 = vmatpush1.msra.mxu0 0.0
        %6301 = vmatprep.subr.mxu0 0.0
        %6302 = vmatpush1.msra.mxu0 0.0
        %6303 = vmatprep.subr.mxu0 0.0
        %6304 = vmatpush1.msra.mxu0 0.0
        %6305 = vmatprep.subr.mxu0 0.0
        %6306 = vmatpush1.msra.mxu0 0.0
        %6307 = vmatprep.subr.mxu0 0.0
        %6308 = vmatpush1.msra.mxu0 0.0
        %6309 = vmatprep.subr.mxu0 0.0
        %6310 = vmatpush1.msra.mxu0 0.0
        %6311 = vmatprep.subr.mxu0 0.0
        %6312 = vmatpush1.msra.mxu0 0.0
        %6313 = vmatprep.subr.mxu0 0.0
        %6314 = vmatpush1.msra.mxu0 0.0
        %6315 = vmatprep.subr.mxu0 0.0
        %6316 = vmatpush1.msra.mxu0 0.0
        %6317 = vmatprep.subr.mxu0 0.0
        %6318 = vmatpush1.msra.mxu0 0.0
        %6319 = vmatprep.subr.mxu0 0.0
        %6320 = vmatpush1.msra.mxu0 0.0
        %6321 = vmatprep.subr.mxu0 0.0
        %6322 = vmatpush1.msra.mxu0 0.0
        %6323 = vmatprep.subr.mxu0 0.0
        %6324 = vmatpush1.msra.mxu0 0.0
        %6325 = vmatprep.subr.mxu0 0.0
        %6326 = vmatpush1.msra.mxu0 0.0
        %6327 = vmatprep.subr.mxu0 0.0
        %6328 = vmatpush1.msra.mxu0 0.0
        %6329 = vmatprep.subr.mxu0 0.0
        %6330 = vmatpush1.msra.mxu0 0.0
        %6331 = vmatprep.subr.mxu0 0.0
        %6332 = vmatpush1.msra.mxu0 0.0
        %6333 = vmatprep.subr.mxu0 0.0
        %6334 = vmatpush1.msra.mxu0 0.0
        %6335 = vmatprep.subr.mxu0 0.0
        %6336 = vmatpush1.msra.mxu0 0.0
        %6337 = vmatprep.subr.mxu0 0.0
        %6338 = vmatpush1.msra.mxu0 0.0
        %6339 = vmatprep.mubr.f32.mxu0 0.0
        %6340 = vmatmul.mubr.f32.gmra.mrb[0].mxu0 %v6269
        %v6341 = vpop.f32.mrb[0].mxu0
        %v6342 = vadd.f32 0.0, %v6341
        %v6343 = vpop.f32.mrb[0].mxu0
        %6344 = vdwg.mxu0
        %v6345 = vmul.f32 %v6342, 0.5
        %vm6346 = vcmp.ge.f32.partialorder %v6345, 1.0
        %v6347 = vsel %vm6346, 1, 0
        %v6348 = vcvt.s32.f32 %v6347
        %vm6349 = vcmask 15360
        %6350 = vst.msk [vmem:[%s5] sm:$0xff] %vm6349, %v6348
      $region48: #{snn_forward.1} parent=39 // pred_fallthru
        _
      // Predicated region
      $region49: #{snn_forward.1} parent=39 // pred_check
        %p6351 = pneg %p144
      $region50: #{snn_forward.1} parent=39 // pred_check_branch
        %6353 = sbr.rel (%p6351) target = $region52
      $region51: #{snn_forward.1} parent=39 // pred_region
        _
      $region52: #{snn_forward.1} parent=39 // pred_fallthru
        _
      // Predicated region
      $region53: #{snn_forward.1} parent=39 // pred_check
        %p6354 = pneg %p144
      $region54: #{snn_forward.1} parent=39 // pred_check_branch
        %6356 = sbr.rel (%p6354) target = $region56
      $region55: #{snn_forward.1} parent=39 // pred_region
        _
      $region56: #{snn_forward.1} parent=39 // pred_fallthru
        _
    $region40: #{snn_forward.1} parent=5 // pred_fallthru
      _
    %p6357 = scmp.le.s32.totalorder 2, %s11
    // Predicated region
    $region57: #{snn_forward.1} parent=5 // pred_check
      %p6358 = pneg %p6357
    $region58: #{snn_forward.1} parent=5 // pred_check_branch
      %6360 = sbr.rel (%p6358) target = $region60
    $region59: #{snn_forward.1} parent=5 // pred_region
      %s6361 = ssub.s32 %s11, 2
    $region60: #{snn_forward.1} parent=5 // pred_fallthru
      _
  $region6: #{snn_forward.1} parent=0 // loop_footer
    %s15 = sadd.s32 1, %s11
  $region7: #{snn_forward.1} parent=0 // loop_footer_branch
    %10 = sbr.rel target = $region3
  $region8: #{snn_forward.1} parent=0 // loop_exit
    _

</llo_original>
